<compile_context>
chip_gen: v6e
topology: v6e:2x2x1
jax: 0.10.0
libtpu: 0.0.40
codegen_flags: <defaults>
</compile_context>

<pallas_src>
import numpy as np

import jax
import jax.numpy as jnp
from jax.experimental import pallas as pl
from jax.experimental.pallas import tpu as pltpu

LANE = 128


def _conv_out(hw, k, s):
    return (hw - k) // s + 1


def _round_up(x, m):
    return ((x + m - 1) // m) * m


# --------------------------- host-side im2col (keeps dtype) ----------------- #

def _im2col(x, k, stride):
    """NCHW -> (B*OH*OW, C*k*k); column order (C, kh, kw); row order (b, oh, ow)."""
    B, C, H, W = x.shape
    OH = (H - k) // stride + 1
    OW = (W - k) // stride + 1
    cols = []
    for kh in range(k):
        for kw in range(k):
            cols.append(x[:, :,
                          kh:kh + stride * (OH - 1) + 1:stride,
                          kw:kw + stride * (OW - 1) + 1:stride])
    cols = jnp.stack(cols, axis=0).reshape(k, k, B, C, OH, OW)
    cols = cols.transpose(2, 4, 5, 3, 0, 1)                 # (B, OH, OW, C, kh, kw)
    return cols.reshape(B * OH * OW, C * k * k), OH, OW


# ----------------------------- parameters ----------------------------------- #

def init_params(key, in_ch, spatial, n_actions):
    h1 = _conv_out(spatial, 8, 4)
    h2 = _conv_out(h1, 4, 2)
    h3 = _conv_out(h2, 3, 1)
    conv_out_size = 64 * h3 * h3
    ks = jax.random.split(key, 14)

    def u(k, shape, fan_in):
        bound = 1.0 / float(fan_in) ** 0.5
        return jax.random.uniform(k, shape, jnp.float32, -bound, bound)

    return {
        "c1_w": u(ks[0], (32, in_ch, 8, 8), in_ch * 64),
        "c1_b": u(ks[1], (32,), in_ch * 64),
        "c2_w": u(ks[2], (64, 32, 4, 4), 32 * 16),
        "c2_b": u(ks[3], (64,), 32 * 16),
        "c3_w": u(ks[4], (64, 64, 3, 3), 64 * 9),
        "c3_b": u(ks[5], (64,), 64 * 9),
        "p1_w": u(ks[6], (conv_out_size, 512), conv_out_size),
        "p1_b": u(ks[7], (512,), conv_out_size),
        "p2_w": u(ks[8], (512, n_actions), 512),
        "p2_b": u(ks[9], (n_actions,), 512),
        "v1_w": u(ks[10], (conv_out_size, 512), conv_out_size),
        "v1_b": u(ks[11], (512,), conv_out_size),
        "v2_w": u(ks[12], (512, 1), 512),
        "v2_b": u(ks[13], (1,), 512),
    }


def pack_params(params, in_ch, spatial, n_actions):
    """One-time host-side re-layout: taps folded into K, heads merged, biases packed."""
    f32, bf16 = np.float32, jnp.bfloat16

    H1 = _conv_out(spatial, 8, 4)
    H2 = _conv_out(H1, 4, 2)
    H3 = _conv_out(H2, 3, 1)
    M1, M2, M3 = H1 * H1, H2 * H2, H3 * H3
    M2p, M3p = _round_up(M2, 8), _round_up(M3, 8)
    T2, T3 = 16, 9
    OC1, OC2, OC3 = 32, 64, 64
    K1 = in_ch * 64
    hidden = 512
    assert n_actions + 1 <= LANE
    assert M3 == 1, "see TODO(synk) above: larger inputs need the padded flatten path"
    conv_out_size = OC3 * M3

    g = lambda name: np.asarray(params[name], f32)

    # ---- wB slab (128 lanes): conv1 weight (x/256 folded) | identity embed | policy head-2
    w1 = np.zeros((K1, LANE), f32)
    w1[:, :OC1] = g("c1_w").reshape(OC1, K1).T / 256.0      # power of two -> exact
    emb = np.zeros((OC2, LANE), f32)
    emb[np.arange(OC2), np.arange(OC2)] = 1.0
    wp2 = np.zeros((hidden, LANE), f32)
    wp2[:, :n_actions] = g("p2_w")
    wB = np.concatenate([w1, emb, wp2], axis=0)             # (K1+64+512, 128)

    # ---- sel slab: one-hot row gathers for conv2/conv3 (per batch element, B-independent)
    sel_cols = max(M1, M2p)
    sel2 = np.zeros((T2 * M2p, sel_cols), f32)
    for kh in range(4):
        for kw in range(4):
            t = kh * 4 + kw
            for i in range(H2):
                for j in range(H2):
                    sel2[t * M2p + i * H2 + j, (2 * i + kh) * H1 + (2 * j + kw)] = 1.0
    sel3 = np.zeros((T3 * M3p, sel_cols), f32)
    for kh in range(3):
        for kw in range(3):
            t = kh * 3 + kw
            sel3[t * M3p + 0, kh * H2 + kw] = 1.0           # single 1x1 output position
    sel = np.concatenate([sel2, sel3], axis=0)              # (256+72, 64)

    # ---- wA slab: conv2/conv3 weights with taps folded into K (row = t*128 + ic)
    w2m = np.zeros((T2 * LANE, OC2), f32)
    c2 = g("c2_w")
    for kh in range(4):
        for kw in range(4):
            w2m[(kh * 4 + kw) * LANE:(kh * 4 + kw) * LANE + 32, :] = c2[:, :, kh, kw].T
    w3m = np.zeros((T3 * LANE, OC3), f32)
    c3 = g("c3_w")
    for kh in range(3):
        for kw in range(3):
            w3m[(kh * 3 + kw) * LANE:(kh * 3 + kw) * LANE + 64, :] = c3[:, :, kh, kw].T
    wA = np.concatenate([w2m, w3m], axis=0)                 # (3200, 64)

    # ---- merged head layer 1: [policy | value]
    wh1 = np.concatenate([g("p1_w"), g("v1_w")], axis=1)    # (conv_out, 1024)

    # ---- misc slab (f32): all biases + value-head vector + output bias row
    misc = np.zeros((6, 2 * hidden), f32)
    misc[0, :] = np.concatenate([g("p1_b"), g("v1_b")])     # bh1
    misc[1, :hidden] = g("v2_w")[:, 0]                      # value head-2 vector
    misc[2, :n_actions] = g("p2_b")                         # output bias row
    misc[2, n_actions] = g("v2_b")[0]                       # value bias folded in
    misc[3, :OC1] = g("c1_b")
    misc[4, :OC2] = g("c2_b")
    misc[5, :OC3] = g("c3_b")

    packed = {
        "wB": jnp.asarray(wB, bf16),
        "sel": jnp.asarray(sel, bf16),
        "wA": jnp.asarray(wA, bf16),
        "wh1": jnp.asarray(wh1, bf16),
        "misc": jnp.asarray(misc, jnp.float32),
    }
    cfg = dict(H1=H1, H2=H2, M1=M1, M2p=M2p, M3p=M3p, T2=T2, T3=T3,
               OC1=OC1, OC2=OC2, OC3=OC3, K1=K1, hidden=hidden,
               conv_out=conv_out_size, n_actions=n_actions)
    return packed, cfg


# ------------------------------- fused kernel ------------------------------- #

def _make_kernel(cfg):
    T2, T3 = cfg["T2"], cfg["T3"]
    M1, M2p, M3p = cfg["M1"], cfg["M2p"], cfg["M3p"]
    OC2, OC3 = cfg["OC2"], cfg["OC3"]
    K1, hidden = cfg["K1"], cfg["hidden"]
    n_actions = cfg["n_actions"]

    # static slab row offsets (all multiples of 8 -> aligned sublane slices)
    w1_lo, emb_lo, wp2_lo = 0, K1, K1 + OC2
    wp2_hi = K1 + OC2 + hidden
    s2_hi = T2 * M2p
    s3_hi = s2_hi + T3 * M3p
    w2_hi = T2 * LANE
    w3_hi = (T2 + T3) * LANE

    def kernel(p1_ref, wB_ref, sel_ref, wA_ref, wh1_ref, misc_ref, out_ref):
        f32, bf16 = jnp.float32, jnp.bfloat16

        w1 = wB_ref[w1_lo:emb_lo, :]                 # (K1, 128)   conv1 (x/256 folded)
        emb = wB_ref[emb_lo:wp2_lo, :]               # (64, 128)   [I | 0]
        wp2 = wB_ref[wp2_lo:wp2_hi, :]               # (512, 128)  policy head-2
        sel2 = sel_ref[0:s2_hi, 0:M1]                # (T2*M2p, M1)
        sel3 = sel_ref[s2_hi:s3_hi, 0:M2p]           # (T3*M3p, M2p)
        w2m = wA_ref[0:w2_hi, :]                     # (T2*128, 64)
        w3m = wA_ref[w2_hi:w3_hi, :]                 # (T3*128, 64)

        bh1 = misc_ref[0:1, :]                       # (1, 1024)
        v2w = misc_ref[1:2, 0:hidden]                # (1, 512)
        bout = misc_ref[2:3, 0:LANE]                 # (1, 128)  p2_b (+ v2_b @ col n_actions)
        b1 = misc_ref[3:4, 0:LANE]                   # (1, 128)  zero-padded past 32
        b2 = misc_ref[4:5, 0:OC2]                    # (1, 64)
        b3 = misc_ref[5:6, 0:OC3]                    # (1, 64)

        # ---- conv1: uint8 patches (values 0..255 are exact in bf16), scale folded in w1
        x1 = p1_ref[...].astype(jnp.int32).astype(f32).astype(bf16)       # (M1, K1)
        h1 = jnp.maximum(jnp.dot(x1, w1, preferred_element_type=f32) + b1, 0.0)
        h1 = h1.astype(bf16)                                              # (M1, 128)

        # ---- conv2: one gather matmul + 128-aligned lane concat + one weight matmul
        g2 = jnp.dot(sel2, h1, preferred_element_type=f32).astype(bf16)   # (T2*M2p, 128)
        patches2 = jnp.concatenate(
            [g2[t * M2p:(t + 1) * M2p, :] for t in range(T2)], axis=1)    # (M2p, T2*128)
        h2 = jnp.maximum(jnp.dot(patches2, w2m, preferred_element_type=f32) + b2, 0.0)
        h2 = h2.astype(bf16)                                              # (M2p, 64)

        # ---- conv3: same scheme (re-embed h2 into 128 lanes first)
        h2p = jnp.dot(h2, emb, preferred_element_type=f32).astype(bf16)   # (M2p, 128)
        g3 = jnp.dot(sel3, h2p, preferred_element_type=f32).astype(bf16)  # (T3*M3p, 128)
        patches3 = jnp.concatenate(
            [g3[t * M3p:(t + 1) * M3p, :] for t in range(T3)], axis=1)    # (M3p, T3*128)
        h3 = jnp.maximum(jnp.dot(patches3, w3m, preferred_element_type=f32) + b3, 0.0)

        conv_out = h3[0:1, :].astype(bf16)           # (1, 64); conv3 output is 1x1 spatial

        # ---- merged head layer 1: [policy | value]
        hh = jnp.maximum(
            jnp.dot(conv_out, wh1_ref[...], preferred_element_type=f32) + bh1, 0.0)
        hh_bf = hh.astype(bf16)                                            # (1, 1024)

        # ---- head layer 2: dense policy matmul + VPU/XLU value reduction (no zero wh2 DMA)
        pol = jnp.dot(hh_bf[:, 0:hidden], wp2, preferred_element_type=f32)  # (1, 128)
        val = jnp.sum(hh[:, hidden:2 * hidden] * v2w, axis=1, keepdims=True)  # (1, 1)
        colid = jax.lax.broadcasted_iota(jnp.int32, (1, LANE), 1)
        out_row = pol + bout + jnp.where(colid == n_actions, val, 0.0)

        out_ref[...] = jnp.broadcast_to(out_row, (8, LANE))   # lane-dense, unmasked store

    return kernel


# ---------------------------------- forward --------------------------------- #

def make_forward(cfg):
    kernel = _make_kernel(cfg)
    M1, K1 = cfg["M1"], cfg["K1"]
    n_actions = cfg["n_actions"]

    def _const_spec(a):
        return pl.BlockSpec(a.shape, lambda b: (0, 0))

    @jax.jit
    def forward(packed, x):
        B = x.shape[0]
        # conv1 im2col on the raw uint8 observation (1 byte/elem); cast + scale fused in kernel.
        patches1, _, _ = _im2col(x, 8, 4)                       # (B*M1, K1) uint8
        args = (patches1, packed["wB"], packed["sel"], packed["wA"],
                packed["wh1"], packed["misc"])

        flops_per_b = 2 * (
            M1 * K1 * LANE                                       # conv1
            + cfg["T2"] * cfg["M2p"] * M1 * LANE                 # conv2 gather
            + cfg["M2p"] * cfg["T2"] * LANE * cfg["OC2"]         # conv2 weight
            + cfg["M2p"] * cfg["OC2"] * LANE                     # embed
            + cfg["T3"] * cfg["M3p"] * cfg["M2p"] * LANE         # conv3 gather
            + cfg["M3p"] * cfg["T3"] * LANE * cfg["OC3"]         # conv3 weight
            + cfg["conv_out"] * 2 * cfg["hidden"]                # head 1
            + cfg["hidden"] * LANE)                              # head 2
        bytes_accessed = (sum(int(a.size) * a.dtype.itemsize for a in args)
                          + B * 8 * LANE * 4)

        out = pl.pallas_call(
            kernel,
            grid=(B,),
            out_shape=jax.ShapeDtypeStruct((B * 8, LANE), jnp.float32),
            in_specs=[pl.BlockSpec((M1, K1), lambda b: (b, 0))]
                     + [_const_spec(a) for a in args[1:]],
            out_specs=pl.BlockSpec((8, LANE), lambda b: (b, 0)),
            compiler_params=pltpu.CompilerParams(
                dimension_semantics=("parallel",),               # megacore on v7x
                vmem_limit_bytes=32 * 1024 * 1024),
            cost_estimate=pl.CostEstimate(flops=B * flops_per_b,
                                          transcendentals=0,
                                          bytes_accessed=bytes_accessed),
        )(*args)

        out = out.reshape(B, 8, LANE)[:, 0, :]
        return out[:, :n_actions], out[:, n_actions:n_actions + 1]

    return forward


# ------------------------------ f32 reference -------------------------------- #

def reference_forward(params, x):
    B = x.shape[0]
    h = x.astype(jnp.float32) / 256.0

    def conv(h, w, b, k, s):
        p, oh, ow = _im2col(h, k, s)
        oc = w.shape[0]
        y = jax.nn.relu(p @ w.reshape(oc, -1).T + b)
        return y.reshape(B, oh, ow, oc).transpose(0, 3, 1, 2)

    h = conv(h, params["c1_w"], params["c1_b"], 8, 4)
    h = conv(h, params["c2_w"], params["c2_b"], 4, 2)
    h = conv(h, params["c3_w"], params["c3_b"], 3, 1)
    conv_out = h.reshape(B, -1)
    ph = jax.nn.relu(conv_out @ params["p1_w"] + params["p1_b"])
    policy = ph @ params["p2_w"] + params["p2_b"]
    vh = jax.nn.relu(conv_out @ params["v1_w"] + params["v1_b"])
    value = vh @ params["v2_w"] + params["v2_b"]
    return policy, value


# ------------------------------------ main ----------------------------------- #

if __name__ == "__main__":
    B, C, SPATIAL, N_ACTIONS = 2, 4, 36, 6        # conv spatial chain: 36 -> 8 -> 3 -> 1

    key = jax.random.PRNGKey(0)
    k_param, k_x = jax.random.split(key)

    params = init_params(k_param, C, SPATIAL, N_ACTIONS)
    packed, cfg = pack_params(params, C, SPATIAL, N_ACTIONS)
    fwd = make_forward(cfg)

    # Atari-style uint8 observations in [0, 256)
    x = jax.random.randint(k_x, (B, C, SPATIAL, SPATIAL), 0, 256,
                           dtype=jnp.int32).astype(jnp.uint8)

    policy, value = fwd(packed, x)
    jax.block_until_ready((policy, value))

    assert policy.shape == (B, N_ACTIONS), policy.shape
    assert value.shape == (B, 1), value.shape

    # numerical sanity check against a float32 JAX reference of the torch module
    ref_policy, ref_value = reference_forward(params, x)
    err = max(float(jnp.max(jnp.abs(policy - ref_policy))),
              float(jnp.max(jnp.abs(value - ref_value))))
    assert err < 1e-1, f"max abs error vs f32 reference too large: {err}"

    print("KERNEL_OK")
</pallas_src>

<mosaic_0001>
module attributes {stable_mosaic.version = 11 : i64} {
  func.func @kernel(%arg0: i32, %arg1: memref<64x256xi8, #tpu.memory_space<vmem>>, %arg2: memref<832x128xbf16, #tpu.memory_space<vmem>>, %arg3: memref<328x64xbf16, #tpu.memory_space<vmem>>, %arg4: memref<3200x64xbf16, #tpu.memory_space<vmem>>, %arg5: memref<64x1024xbf16, #tpu.memory_space<vmem>>, %arg6: memref<6x1024xf32, #tpu.memory_space<vmem>>, %arg7: memref<8x128xf32, #tpu.memory_space<vmem>>) attributes {dimension_semantics = [#tpu.dimension_semantics<parallel>], iteration_bounds = array<i64: 2>, scalar_prefetch = 0 : i64, scratch_operands = 0 : i64, tpu.core_type = #tpu.core_type<tc>, window_params = [{transform_indices = @transform_0, window_bounds = array<i64: 64, 256>}, {pipeline_mode = #tpu.pipeline_mode<synchronous>, transform_indices = @transform_1, window_bounds = array<i64: 832, 128>}, {pipeline_mode = #tpu.pipeline_mode<synchronous>, transform_indices = @transform_2, window_bounds = array<i64: 328, 64>}, {pipeline_mode = #tpu.pipeline_mode<synchronous>, transform_indices = @transform_3, window_bounds = array<i64: 3200, 64>}, {pipeline_mode = #tpu.pipeline_mode<synchronous>, transform_indices = @transform_4, window_bounds = array<i64: 64, 1024>}, {pipeline_mode = #tpu.pipeline_mode<synchronous>, transform_indices = @transform_5, window_bounds = array<i64: 6, 1024>}, {transform_indices = @transform_6, window_bounds = array<i64: 8, 128>}]} {
    %c0 = arith.constant 0 : index
    %c0_0 = arith.constant 0 : index
    %0 = vector.load %arg2[%c0, %c0_0] : memref<832x128xbf16, #tpu.memory_space<vmem>>, vector<256x128xbf16>
    %c256 = arith.constant 256 : index
    %c0_1 = arith.constant 0 : index
    %1 = vector.load %arg2[%c256, %c0_1] : memref<832x128xbf16, #tpu.memory_space<vmem>>, vector<64x128xbf16>
    %c320 = arith.constant 320 : index
    %c0_2 = arith.constant 0 : index
    %2 = vector.load %arg2[%c320, %c0_2] : memref<832x128xbf16, #tpu.memory_space<vmem>>, vector<512x128xbf16>
    %c0_3 = arith.constant 0 : index
    %c0_4 = arith.constant 0 : index
    %3 = vector.load %arg3[%c0_3, %c0_4] : memref<328x64xbf16, #tpu.memory_space<vmem>>, vector<256x64xbf16>
    %c256_5 = arith.constant 256 : index
    %c0_6 = arith.constant 0 : index
    %4 = vector.load %arg3[%c256_5, %c0_6] : memref<328x64xbf16, #tpu.memory_space<vmem>>, vector<72x16xbf16>
    %c0_7 = arith.constant 0 : index
    %c0_8 = arith.constant 0 : index
    %5 = vector.load %arg4[%c0_7, %c0_8] : memref<3200x64xbf16, #tpu.memory_space<vmem>>, vector<2048x64xbf16>
    %c2048 = arith.constant 2048 : index
    %c0_9 = arith.constant 0 : index
    %6 = vector.load %arg4[%c2048, %c0_9] : memref<3200x64xbf16, #tpu.memory_space<vmem>>, vector<1152x64xbf16>
    %c0_10 = arith.constant 0 : index
    %c0_11 = arith.constant 0 : index
    %7 = vector.load %arg6[%c0_10, %c0_11] : memref<6x1024xf32, #tpu.memory_space<vmem>>, vector<1x1024xf32>
    %c1 = arith.constant 1 : index
    %c0_12 = arith.constant 0 : index
    %8 = vector.load %arg6[%c1, %c0_12] : memref<6x1024xf32, #tpu.memory_space<vmem>>, vector<1x512xf32>
    %c2 = arith.constant 2 : index
    %c0_13 = arith.constant 0 : index
    %9 = vector.load %arg6[%c2, %c0_13] : memref<6x1024xf32, #tpu.memory_space<vmem>>, vector<1x128xf32>
    %c3 = arith.constant 3 : index
    %c0_14 = arith.constant 0 : index
    %10 = vector.load %arg6[%c3, %c0_14] : memref<6x1024xf32, #tpu.memory_space<vmem>>, vector<1x128xf32>
    %c4 = arith.constant 4 : index
    %c0_15 = arith.constant 0 : index
    %11 = vector.load %arg6[%c4, %c0_15] : memref<6x1024xf32, #tpu.memory_space<vmem>>, vector<1x64xf32>
    %c5 = arith.constant 5 : index
    %c0_16 = arith.constant 0 : index
    %12 = vector.load %arg6[%c5, %c0_16] : memref<6x1024xf32, #tpu.memory_space<vmem>>, vector<1x64xf32>
    %c0_17 = arith.constant 0 : index
    %c0_18 = arith.constant 0 : index
    %13 = vector.load %arg1[%c0_17, %c0_18] : memref<64x256xi8, #tpu.memory_space<vmem>>, vector<64x256xi8>
    %14 = arith.extui %13 : vector<64x256xi8> to vector<64x256xi32>
    %15 = arith.sitofp %14 : vector<64x256xi32> to vector<64x256xf32>
    %16 = arith.truncf %15 : vector<64x256xf32> to vector<64x256xbf16>
    %cst = arith.constant dense<0.000000e+00> : vector<64x128xf32>
    %17 = tpu.matmul %16, %0, %cst {dimension_numbers = #tpu.dot_dimension_numbers<[1], [0], [0], [1], [0, 0, 1, 1], [], []>} : vector<64x256xbf16>, vector<256x128xbf16>, vector<64x128xf32> -> vector<64x128xf32>
    %18 = vector.broadcast %10 : vector<1x128xf32> to vector<64x128xf32>
    %19 = arith.addf %17, %18 : vector<64x128xf32>
    %cst_19 = arith.constant 0.000000e+00 : f32
    %20 = vector.broadcast %cst_19 : f32 to vector<64x128xf32>
    %21 = arith.maximumf %19, %20 : vector<64x128xf32>
    %22 = arith.truncf %21 : vector<64x128xf32> to vector<64x128xbf16>
    %cst_20 = arith.constant dense<0.000000e+00> : vector<256x128xf32>
    %23 = tpu.matmul %3, %22, %cst_20 {dimension_numbers = #tpu.dot_dimension_numbers<[1], [0], [0], [1], [0, 0, 1, 1], [], []>} : vector<256x64xbf16>, vector<64x128xbf16>, vector<256x128xf32> -> vector<256x128xf32>
    %24 = arith.truncf %23 : vector<256x128xf32> to vector<256x128xbf16>
    %25 = vector.extract_strided_slice %24 {offsets = [0, 0], sizes = [16, 128], strides = [1, 1]} : vector<256x128xbf16> to vector<16x128xbf16>
    %26 = vector.extract_strided_slice %24 {offsets = [16, 0], sizes = [16, 128], strides = [1, 1]} : vector<256x128xbf16> to vector<16x128xbf16>
    %27 = vector.extract_strided_slice %24 {offsets = [32, 0], sizes = [16, 128], strides = [1, 1]} : vector<256x128xbf16> to vector<16x128xbf16>
    %28 = vector.extract_strided_slice %24 {offsets = [48, 0], sizes = [16, 128], strides = [1, 1]} : vector<256x128xbf16> to vector<16x128xbf16>
    %29 = vector.extract_strided_slice %24 {offsets = [64, 0], sizes = [16, 128], strides = [1, 1]} : vector<256x128xbf16> to vector<16x128xbf16>
    %30 = vector.extract_strided_slice %24 {offsets = [80, 0], sizes = [16, 128], strides = [1, 1]} : vector<256x128xbf16> to vector<16x128xbf16>
    %31 = vector.extract_strided_slice %24 {offsets = [96, 0], sizes = [16, 128], strides = [1, 1]} : vector<256x128xbf16> to vector<16x128xbf16>
    %32 = vector.extract_strided_slice %24 {offsets = [112, 0], sizes = [16, 128], strides = [1, 1]} : vector<256x128xbf16> to vector<16x128xbf16>
    %33 = vector.extract_strided_slice %24 {offsets = [128, 0], sizes = [16, 128], strides = [1, 1]} : vector<256x128xbf16> to vector<16x128xbf16>
    %34 = vector.extract_strided_slice %24 {offsets = [144, 0], sizes = [16, 128], strides = [1, 1]} : vector<256x128xbf16> to vector<16x128xbf16>
    %35 = vector.extract_strided_slice %24 {offsets = [160, 0], sizes = [16, 128], strides = [1, 1]} : vector<256x128xbf16> to vector<16x128xbf16>
    %36 = vector.extract_strided_slice %24 {offsets = [176, 0], sizes = [16, 128], strides = [1, 1]} : vector<256x128xbf16> to vector<16x128xbf16>
    %37 = vector.extract_strided_slice %24 {offsets = [192, 0], sizes = [16, 128], strides = [1, 1]} : vector<256x128xbf16> to vector<16x128xbf16>
    %38 = vector.extract_strided_slice %24 {offsets = [208, 0], sizes = [16, 128], strides = [1, 1]} : vector<256x128xbf16> to vector<16x128xbf16>
    %39 = vector.extract_strided_slice %24 {offsets = [224, 0], sizes = [16, 128], strides = [1, 1]} : vector<256x128xbf16> to vector<16x128xbf16>
    %40 = vector.extract_strided_slice %24 {offsets = [240, 0], sizes = [16, 128], strides = [1, 1]} : vector<256x128xbf16> to vector<16x128xbf16>
    %41 = tpu.concatenate %25, %26, %27, %28, %29, %30, %31, %32, %33, %34, %35, %36, %37, %38, %39, %40 in 1 : vector<16x128xbf16>, vector<16x128xbf16>, vector<16x128xbf16>, vector<16x128xbf16>, vector<16x128xbf16>, vector<16x128xbf16>, vector<16x128xbf16>, vector<16x128xbf16>, vector<16x128xbf16>, vector<16x128xbf16>, vector<16x128xbf16>, vector<16x128xbf16>, vector<16x128xbf16>, vector<16x128xbf16>, vector<16x128xbf16>, vector<16x128xbf16> -> vector<16x2048xbf16>
    %cst_21 = arith.constant dense<0.000000e+00> : vector<16x64xf32>
    %42 = tpu.matmul %41, %5, %cst_21 {dimension_numbers = #tpu.dot_dimension_numbers<[1], [0], [0], [1], [0, 0, 1, 1], [], []>} : vector<16x2048xbf16>, vector<2048x64xbf16>, vector<16x64xf32> -> vector<16x64xf32>
    %43 = vector.broadcast %11 : vector<1x64xf32> to vector<16x64xf32>
    %44 = arith.addf %42, %43 : vector<16x64xf32>
    %cst_22 = arith.constant 0.000000e+00 : f32
    %45 = vector.broadcast %cst_22 : f32 to vector<16x64xf32>
    %46 = arith.maximumf %44, %45 : vector<16x64xf32>
    %47 = arith.truncf %46 : vector<16x64xf32> to vector<16x64xbf16>
    %cst_23 = arith.constant dense<0.000000e+00> : vector<16x128xf32>
    %48 = tpu.matmul %47, %1, %cst_23 {dimension_numbers = #tpu.dot_dimension_numbers<[1], [0], [0], [1], [0, 0, 1, 1], [], []>} : vector<16x64xbf16>, vector<64x128xbf16>, vector<16x128xf32> -> vector<16x128xf32>
    %49 = arith.truncf %48 : vector<16x128xf32> to vector<16x128xbf16>
    %cst_24 = arith.constant dense<0.000000e+00> : vector<72x128xf32>
    %50 = tpu.matmul %4, %49, %cst_24 {dimension_numbers = #tpu.dot_dimension_numbers<[1], [0], [0], [1], [0, 0, 1, 1], [], []>} : vector<72x16xbf16>, vector<16x128xbf16>, vector<72x128xf32> -> vector<72x128xf32>
    %51 = arith.truncf %50 : vector<72x128xf32> to vector<72x128xbf16>
    %52 = vector.extract_strided_slice %51 {offsets = [0, 0], sizes = [8, 128], strides = [1, 1]} : vector<72x128xbf16> to vector<8x128xbf16>
    %53 = vector.extract_strided_slice %51 {offsets = [8, 0], sizes = [8, 128], strides = [1, 1]} : vector<72x128xbf16> to vector<8x128xbf16>
    %54 = vector.extract_strided_slice %51 {offsets = [16, 0], sizes = [8, 128], strides = [1, 1]} : vector<72x128xbf16> to vector<8x128xbf16>
    %55 = vector.extract_strided_slice %51 {offsets = [24, 0], sizes = [8, 128], strides = [1, 1]} : vector<72x128xbf16> to vector<8x128xbf16>
    %56 = vector.extract_strided_slice %51 {offsets = [32, 0], sizes = [8, 128], strides = [1, 1]} : vector<72x128xbf16> to vector<8x128xbf16>
    %57 = vector.extract_strided_slice %51 {offsets = [40, 0], sizes = [8, 128], strides = [1, 1]} : vector<72x128xbf16> to vector<8x128xbf16>
    %58 = vector.extract_strided_slice %51 {offsets = [48, 0], sizes = [8, 128], strides = [1, 1]} : vector<72x128xbf16> to vector<8x128xbf16>
    %59 = vector.extract_strided_slice %51 {offsets = [56, 0], sizes = [8, 128], strides = [1, 1]} : vector<72x128xbf16> to vector<8x128xbf16>
    %60 = vector.extract_strided_slice %51 {offsets = [64, 0], sizes = [8, 128], strides = [1, 1]} : vector<72x128xbf16> to vector<8x128xbf16>
    %61 = tpu.concatenate %52, %53, %54, %55, %56, %57, %58, %59, %60 in 1 : vector<8x128xbf16>, vector<8x128xbf16>, vector<8x128xbf16>, vector<8x128xbf16>, vector<8x128xbf16>, vector<8x128xbf16>, vector<8x128xbf16>, vector<8x128xbf16>, vector<8x128xbf16> -> vector<8x1152xbf16>
    %cst_25 = arith.constant dense<0.000000e+00> : vector<8x64xf32>
    %62 = tpu.matmul %61, %6, %cst_25 {dimension_numbers = #tpu.dot_dimension_numbers<[1], [0], [0], [1], [0, 0, 1, 1], [], []>} : vector<8x1152xbf16>, vector<1152x64xbf16>, vector<8x64xf32> -> vector<8x64xf32>
    %63 = vector.broadcast %12 : vector<1x64xf32> to vector<8x64xf32>
    %64 = arith.addf %62, %63 : vector<8x64xf32>
    %cst_26 = arith.constant 0.000000e+00 : f32
    %65 = vector.broadcast %cst_26 : f32 to vector<8x64xf32>
    %66 = arith.maximumf %64, %65 : vector<8x64xf32>
    %67 = vector.extract_strided_slice %66 {offsets = [0, 0], sizes = [1, 64], strides = [1, 1]} : vector<8x64xf32> to vector<1x64xf32>
    %68 = arith.truncf %67 : vector<1x64xf32> to vector<1x64xbf16>
    %c0_27 = arith.constant 0 : index
    %c0_28 = arith.constant 0 : index
    %69 = vector.load %arg5[%c0_27, %c0_28] : memref<64x1024xbf16, #tpu.memory_space<vmem>>, vector<64x1024xbf16>
    %cst_29 = arith.constant dense<0.000000e+00> : vector<1x1024xf32>
    %70 = tpu.matmul %68, %69, %cst_29 {dimension_numbers = #tpu.dot_dimension_numbers<[1], [0], [0], [1], [0, 0, 1, 1], [], []>} : vector<1x64xbf16>, vector<64x1024xbf16>, vector<1x1024xf32> -> vector<1x1024xf32>
    %71 = arith.addf %70, %7 : vector<1x1024xf32>
    %cst_30 = arith.constant 0.000000e+00 : f32
    %72 = vector.broadcast %cst_30 : f32 to vector<1x1024xf32>
    %73 = arith.maximumf %71, %72 : vector<1x1024xf32>
    %74 = arith.truncf %73 : vector<1x1024xf32> to vector<1x1024xbf16>
    %75 = vector.extract_strided_slice %74 {offsets = [0, 0], sizes = [1, 512], strides = [1, 1]} : vector<1x1024xbf16> to vector<1x512xbf16>
    %cst_31 = arith.constant dense<0.000000e+00> : vector<1x128xf32>
    %76 = tpu.matmul %75, %2, %cst_31 {dimension_numbers = #tpu.dot_dimension_numbers<[1], [0], [0], [1], [0, 0, 1, 1], [], []>} : vector<1x512xbf16>, vector<512x128xbf16>, vector<1x128xf32> -> vector<1x128xf32>
    %77 = vector.extract_strided_slice %73 {offsets = [0, 512], sizes = [1, 512], strides = [1, 1]} : vector<1x1024xf32> to vector<1x512xf32>
    %78 = arith.mulf %77, %8 : vector<1x512xf32>
    %cst_32 = arith.constant dense<0.000000e+00> : vector<1xf32>
    %79 = vector.multi_reduction <add>, %78, %cst_32 [1] : vector<1x512xf32> to vector<1xf32>
    %80 = vector.shape_cast %79 : vector<1xf32> to vector<1x1xf32>
    %81 = tpu.iota {dimensions = array<i32: 1>} : vector<1x128xi32>
    %82 = arith.addf %76, %9 : vector<1x128xf32>
    %c6_i32 = arith.constant 6 : i32
    %83 = vector.broadcast %c6_i32 : i32 to vector<1x128xi32>
    %84 = arith.cmpi eq, %81, %83 : vector<1x128xi32>
    %cst_33 = arith.constant 0.000000e+00 : f32
    %85 = vector.shape_cast %80 : vector<1x1xf32> to vector<1x1xf32>
    %86 = vector.broadcast %85 : vector<1x1xf32> to vector<1x128xf32>
    %87 = vector.broadcast %cst_33 : f32 to vector<1x128xf32>
    %88 = arith.select %84, %86, %87 : vector<1x128xi1>, vector<1x128xf32>
    %89 = arith.addf %82, %88 : vector<1x128xf32>
    %90 = vector.shape_cast %89 : vector<1x128xf32> to vector<1x128xf32>
    %91 = vector.broadcast %90 : vector<1x128xf32> to vector<8x128xf32>
    %c0_34 = arith.constant 0 : index
    %c0_35 = arith.constant 0 : index
    %92 = vector.load %arg7[%c0_34, %c0_35] : memref<8x128xf32, #tpu.memory_space<vmem>>, vector<8x128xf32>
    tpu.vector_store %arg7[%c0_34, %c0_35], %91 {strides = array<i32>} : memref<8x128xf32, #tpu.memory_space<vmem>>, vector<8x128xf32>,
    return
  }
  func.func @transform_0(%arg0: i32) -> (i32, i32) {
    %c0_i32 = arith.constant 0 : i32
    %c0_i32_0 = arith.constant 0 : i32
    return %arg0, %c0_i32 : i32, i32
  }
  func.func @transform_1(%arg0: i32) -> (i32, i32) {
    %c0_i32 = arith.constant 0 : i32
    %c0_i32_0 = arith.constant 0 : i32
    %c0_i32_1 = arith.constant 0 : i32
    return %c0_i32, %c0_i32_0 : i32, i32
  }
  func.func @transform_2(%arg0: i32) -> (i32, i32) {
    %c0_i32 = arith.constant 0 : i32
    %c0_i32_0 = arith.constant 0 : i32
    %c0_i32_1 = arith.constant 0 : i32
    return %c0_i32, %c0_i32_0 : i32, i32
  }
  func.func @transform_3(%arg0: i32) -> (i32, i32) {
    %c0_i32 = arith.constant 0 : i32
    %c0_i32_0 = arith.constant 0 : i32
    %c0_i32_1 = arith.constant 0 : i32
    return %c0_i32, %c0_i32_0 : i32, i32
  }
  func.func @transform_4(%arg0: i32) -> (i32, i32) {
    %c0_i32 = arith.constant 0 : i32
    %c0_i32_0 = arith.constant 0 : i32
    %c0_i32_1 = arith.constant 0 : i32
    return %c0_i32, %c0_i32_0 : i32, i32
  }
  func.func @transform_5(%arg0: i32) -> (i32, i32) {
    %c0_i32 = arith.constant 0 : i32
    %c0_i32_0 = arith.constant 0 : i32
    %c0_i32_1 = arith.constant 0 : i32
    return %c0_i32, %c0_i32_0 : i32, i32
  }
  func.func @transform_6(%arg0: i32) -> (i32, i32) {
    %c0_i32 = arith.constant 0 : i32
    %c0_i32_0 = arith.constant 0 : i32
    return %arg0, %c0_i32 : i32, i32
  }
}

</mosaic_0001>

<llo_original>
// kernel: forward.1
$region0: #{forward.1}
  #allocation0 [shape = 'u32[]', space=smem, size = 0x4, offset = 0x4, fixed_abs, tag = 'smem constant byte address 0x4 - core index']
  #allocation1 [shape = 'u32[144,128]{1,0:T(1,128)}', space=vmem, size = 0x12000, scoped, tag = 'internal scratch']
  %s0 = inlined_call_operand.vmem [shape: u8[128,256], index: 0, kind: input, shape index: {}]
  %s1 = inlined_call_operand.vmem [shape: bf16[832,128], index: 1, kind: input, shape index: {}]
  %s2 = inlined_call_operand.vmem [shape: bf16[328,64], index: 2, kind: input, shape index: {}]
  %s3 = inlined_call_operand.vmem [shape: bf16[3200,64], index: 3, kind: input, shape index: {}]
  %s4 = inlined_call_operand.vmem [shape: bf16[64,1024], index: 4, kind: input, shape index: {}]
  %s5 = inlined_call_operand.vmem [shape: f32[6,1024], index: 5, kind: input, shape index: {}]
  %s6 = inlined_call_operand.vmem [shape: f32[16,128], index: 6, kind: output, shape index: {}]
  %s7 = sld [smem:[#allocation0]]
  $region57: #{forward.1} parent=0
    _
  %s9 = ssub.s32 1, %s7
  %s10 = scalar_select 0, %s9, %s7
  loop: start=0, step=1, limit=4
  $region2: #{forward.1} parent=0 // loop_pre_header
    _
  $region3: #{forward.1} parent=0 // loop_header
    %s12 = sphi 0, %s16
    %p13 = scmp.ge.s32.totalorder %s12, 4
    %s22 = sphi 0, %s24
    %s25 = sphi 0, %s22
    %s26 = sphi 0, %s25
    %s42 = sphi 0, %s26
    %s46 = sphi 0, %s46
    %s48 = sphi 0, %s46
    %s49 = sphi 0, %s48
    %s63 = sphi 0, %s49
    %s67 = sphi 0, %s67
    %s69 = sphi 0, %s67
    %s70 = sphi 0, %s69
    %s84 = sphi 0, %s70
    %s88 = sphi 0, %s88
    %s90 = sphi 0, %s88
    %s91 = sphi 0, %s90
    %s105 = sphi 0, %s91
    %s109 = sphi 0, %s109
    %s111 = sphi 0, %s109
    %s112 = sphi 0, %s111
    %s126 = sphi 0, %s112
    %s130 = sphi 0, %s130
    %s132 = sphi 0, %s130
    %s133 = sphi 0, %s132
    %s147 = sphi 0, %s133
    %s153 = sphi 0, %s155
    %s156 = sphi 0, %s153
    %s157 = sphi 0, %s156
    %s173 = sphi 0, %s157
  $region4: #{forward.1} parent=0 // loop_header_branch
    %15 = sbr.rel (%p13) target = $region8
  $region5: #{forward.1} parent=0 // loop_body
    %s17 = ssub.s32 %s12, 1
    %s18 = ssub.s32 %s12, 2
    %s19 = sadd.s32 %s12, 1
    %s20 = ssub.s32 %s12, %s19
    %p21 = scmp.eq.s32.totalorder %s20, 0
    %s23 = sadd.s32 %s22, 1
    %s24 = scalar_select %p21, %s22, %s23
    %p27 = pneg %p21
    %p28 = scmp.eq.s32.totalorder %s12, 1
    %p29 = por %p27, %p28
    %p30 = scmp.ne.s32.totalorder %s22, %s25
    %p31 = scmp.eq.s32.totalorder %s12, 0
    %p32 = por %p30, %p31
    %p33 = scmp.ne.s32.totalorder %s22, %s25
    %p34 = scmp.eq.s32.totalorder %s17, 1
    %p35 = por %p33, %p34
    %p36 = scmp.ne.s32.totalorder %s25, %s26
    %p37 = scmp.eq.s32.totalorder %s17, 0
    %p38 = por %p36, %p37
    %p39 = scmp.ne.s32.totalorder %s25, %s26
    %p40 = scmp.eq.s32.totalorder %s18, 1
    %p41 = por %p39, %p40
    %p43 = scmp.ne.s32.totalorder %s26, %s42
    %p44 = scmp.eq.s32.totalorder %s18, 0
    %p45 = por %p43, %p44
    %s47 = sadd.s32 %s46, 1
    %p50 = scmp.eq.s32.totalorder %s12, 1
    %p51 = scmp.ne.s32.totalorder %s46, %s48
    %p52 = scmp.eq.s32.totalorder %s12, 0
    %p53 = por %p51, %p52
    %p54 = scmp.ne.s32.totalorder %s46, %s48
    %p55 = scmp.eq.s32.totalorder %s17, 1
    %p56 = por %p54, %p55
    %p57 = scmp.ne.s32.totalorder %s48, %s49
    %p58 = scmp.eq.s32.totalorder %s17, 0
    %p59 = por %p57, %p58
    %p60 = scmp.ne.s32.totalorder %s48, %s49
    %p61 = scmp.eq.s32.totalorder %s18, 1
    %p62 = por %p60, %p61
    %p64 = scmp.ne.s32.totalorder %s49, %s63
    %p65 = scmp.eq.s32.totalorder %s18, 0
    %p66 = por %p64, %p65
    %s68 = sadd.s32 %s67, 1
    %p71 = scmp.eq.s32.totalorder %s12, 1
    %p72 = scmp.ne.s32.totalorder %s67, %s69
    %p73 = scmp.eq.s32.totalorder %s12, 0
    %p74 = por %p72, %p73
    %p75 = scmp.ne.s32.totalorder %s67, %s69
    %p76 = scmp.eq.s32.totalorder %s17, 1
    %p77 = por %p75, %p76
    %p78 = scmp.ne.s32.totalorder %s69, %s70
    %p79 = scmp.eq.s32.totalorder %s17, 0
    %p80 = por %p78, %p79
    %p81 = scmp.ne.s32.totalorder %s69, %s70
    %p82 = scmp.eq.s32.totalorder %s18, 1
    %p83 = por %p81, %p82
    %p85 = scmp.ne.s32.totalorder %s70, %s84
    %p86 = scmp.eq.s32.totalorder %s18, 0
    %p87 = por %p85, %p86
    %s89 = sadd.s32 %s88, 1
    %p92 = scmp.eq.s32.totalorder %s12, 1
    %p93 = scmp.ne.s32.totalorder %s88, %s90
    %p94 = scmp.eq.s32.totalorder %s12, 0
    %p95 = por %p93, %p94
    %p96 = scmp.ne.s32.totalorder %s88, %s90
    %p97 = scmp.eq.s32.totalorder %s17, 1
    %p98 = por %p96, %p97
    %p99 = scmp.ne.s32.totalorder %s90, %s91
    %p100 = scmp.eq.s32.totalorder %s17, 0
    %p101 = por %p99, %p100
    %p102 = scmp.ne.s32.totalorder %s90, %s91
    %p103 = scmp.eq.s32.totalorder %s18, 1
    %p104 = por %p102, %p103
    %p106 = scmp.ne.s32.totalorder %s91, %s105
    %p107 = scmp.eq.s32.totalorder %s18, 0
    %p108 = por %p106, %p107
    %s110 = sadd.s32 %s109, 1
    %p113 = scmp.eq.s32.totalorder %s12, 1
    %p114 = scmp.ne.s32.totalorder %s109, %s111
    %p115 = scmp.eq.s32.totalorder %s12, 0
    %p116 = por %p114, %p115
    %p117 = scmp.ne.s32.totalorder %s109, %s111
    %p118 = scmp.eq.s32.totalorder %s17, 1
    %p119 = por %p117, %p118
    %p120 = scmp.ne.s32.totalorder %s111, %s112
    %p121 = scmp.eq.s32.totalorder %s17, 0
    %p122 = por %p120, %p121
    %p123 = scmp.ne.s32.totalorder %s111, %s112
    %p124 = scmp.eq.s32.totalorder %s18, 1
    %p125 = por %p123, %p124
    %p127 = scmp.ne.s32.totalorder %s112, %s126
    %p128 = scmp.eq.s32.totalorder %s18, 0
    %p129 = por %p127, %p128
    %s131 = sadd.s32 %s130, 1
    %p134 = scmp.eq.s32.totalorder %s12, 1
    %p135 = scmp.ne.s32.totalorder %s130, %s132
    %p136 = scmp.eq.s32.totalorder %s12, 0
    %p137 = por %p135, %p136
    %p138 = scmp.ne.s32.totalorder %s130, %s132
    %p139 = scmp.eq.s32.totalorder %s17, 1
    %p140 = por %p138, %p139
    %p141 = scmp.ne.s32.totalorder %s132, %s133
    %p142 = scmp.eq.s32.totalorder %s17, 0
    %p143 = por %p141, %p142
    %p144 = scmp.ne.s32.totalorder %s132, %s133
    %p145 = scmp.eq.s32.totalorder %s18, 1
    %p146 = por %p144, %p145
    %p148 = scmp.ne.s32.totalorder %s133, %s147
    %p149 = scmp.eq.s32.totalorder %s18, 0
    %p150 = por %p148, %p149
    %s151 = ssub.s32 %s12, %s19
    %p152 = scmp.eq.s32.totalorder %s151, 0
    %s154 = sadd.s32 %s153, 1
    %s155 = scalar_select %p152, %s153, %s154
    %p158 = pneg %p152
    %p159 = scmp.eq.s32.totalorder %s12, 1
    %p160 = por %p158, %p159
    %p161 = scmp.ne.s32.totalorder %s153, %s156
    %p162 = scmp.eq.s32.totalorder %s12, 0
    %p163 = por %p161, %p162
    %p164 = scmp.ne.s32.totalorder %s153, %s156
    %p165 = scmp.eq.s32.totalorder %s17, 1
    %p166 = por %p164, %p165
    %p167 = scmp.ne.s32.totalorder %s156, %s157
    %p168 = scmp.eq.s32.totalorder %s17, 0
    %p169 = por %p167, %p168
    %p170 = scmp.ne.s32.totalorder %s156, %s157
    %p171 = scmp.eq.s32.totalorder %s18, 1
    %p172 = por %p170, %p171
    %p174 = scmp.ne.s32.totalorder %s157, %s173
    %p175 = scmp.eq.s32.totalorder %s18, 0
    %p176 = por %p174, %p175
    %p177 = scmp.le.s32.totalorder 1, %s12
    %p178 = scmp.lt.s32.totalorder %s12, 3
    %p179 = pnand %p177, %p178
    %p180 = pneg %p179
    // Predicated region
    $region9: #{forward.1} parent=5 // pred_check
      _
    $region10: #{forward.1} parent=5 // pred_check_branch
      %182 = sbr.rel (%p179) target = $region12
    $region11: #{forward.1} parent=5 // pred_region
      %s183 = ssub.s32 %s12, 1
      // Predicated region
      $region13: #{forward.1} parent=11 // pred_check
        %p184 = pneg %p59
      $region14: #{forward.1} parent=11 // pred_check_branch
        %186 = sbr.rel (%p184) target = $region16
      $region15: #{forward.1} parent=11 // pred_region
        _
      $region16: #{forward.1} parent=11 // pred_fallthru
        _
      // Predicated region
      $region17: #{forward.1} parent=11 // pred_check
        %p187 = pneg %p80
      $region18: #{forward.1} parent=11 // pred_check_branch
        %189 = sbr.rel (%p187) target = $region20
      $region19: #{forward.1} parent=11 // pred_region
        _
      $region20: #{forward.1} parent=11 // pred_fallthru
        _
      // Predicated region
      $region21: #{forward.1} parent=11 // pred_check
        %p190 = pneg %p101
      $region22: #{forward.1} parent=11 // pred_check_branch
        %192 = sbr.rel (%p190) target = $region24
      $region23: #{forward.1} parent=11 // pred_region
        _
      $region24: #{forward.1} parent=11 // pred_fallthru
        _
      // Predicated region
      $region25: #{forward.1} parent=11 // pred_check
        %p193 = pneg %p122
      $region26: #{forward.1} parent=11 // pred_check_branch
        %195 = sbr.rel (%p193) target = $region28
      $region27: #{forward.1} parent=11 // pred_region
        _
      $region28: #{forward.1} parent=11 // pred_fallthru
        _
      // Predicated region
      $region29: #{forward.1} parent=11 // pred_check
        %p196 = pneg %p143
      $region30: #{forward.1} parent=11 // pred_check_branch
        %198 = sbr.rel (%p196) target = $region32
      $region31: #{forward.1} parent=11 // pred_region
        _
      $region32: #{forward.1} parent=11 // pred_fallthru
        _
    $region12: #{forward.1} parent=5 // pred_fallthru
      _
    %p199 = scmp.lt.s32.totalorder %s12, 2
    // Predicated region
    $region33: #{forward.1} parent=5 // pred_check
      %p200 = pneg %p199
    $region34: #{forward.1} parent=5 // pred_check_branch
      %202 = sbr.rel (%p200) target = $region36
    $region35: #{forward.1} parent=5 // pred_region
      // Predicated region
      $region37: #{forward.1} parent=35 // pred_check
        %p203 = pneg %p32
      $region38: #{forward.1} parent=35 // pred_check_branch
        %205 = sbr.rel (%p203) target = $region40
      $region39: #{forward.1} parent=35 // pred_region
        %s206 = smul.u32 2, %s12
        %p207 = scmp.lt.s32.totalorder %s206, 3
        %s208 = scalar_select %p207, %s206, 3
        %s209 = smul.addr %s208, 2
        %s210 = smul.addr %s209, 8
        %s211 = scalar_lea.vmem %s0, %s210
        %s212 = smul.u32 2, %s12
      $region40: #{forward.1} parent=35 // pred_fallthru
        _
    $region36: #{forward.1} parent=5 // pred_fallthru
      _
    %p213 = scmp.le.s32.totalorder 1, %s12
    %p214 = scmp.lt.s32.totalorder %s12, 3
    %p215 = pnand %p213, %p214
    %p216 = pneg %p215
    // Predicated region
    $region41: #{forward.1} parent=5 // pred_check
      _
    $region42: #{forward.1} parent=5 // pred_check_branch
      %218 = sbr.rel (%p215) target = $region44
    $region43: #{forward.1} parent=5 // pred_region
      %s219 = ssub.s32 %s12, 1
      %s220 = smul.u32 2, %s17
      %p221 = scmp.lt.s32.totalorder %s220, 3
      %s222 = scalar_select %p221, %s220, 3
      %s223 = smul.addr %s222, 2
      %s224 = smul.addr %s223, 8
      %s225 = scalar_lea.vmem %s0, %s224
      %p226 = pneg %p38
      %p227 = pneg %p35
      %p228 = pneg %p59
      %p229 = pneg %p56
      %p230 = pneg %p80
      %p231 = pneg %p77
      %p232 = pneg %p101
      %p233 = pneg %p98
      %p234 = pneg %p122
      %p235 = pneg %p119
      %p236 = pneg %p143
      %p237 = pneg %p140
      %p238 = pneg %p169
      %p239 = pneg %p166
      %p240 = scmp.lt.s32.totalorder %s17, 1
      %s241 = scalar_select %p240, %s17, 1
      %s242 = smul.addr %s241, 8
      %s243 = scalar_lea.vmem %s6, %s242
      %s244 = smul.u32 2, %s17
      %p245 = scmp.lt.s32.totalorder %s244, 3
      %s246 = scalar_select %p245, %s244, 3
      %s247 = smul.addr %s246, 2
      %s248 = smul.addr %s247, 8
      %s249 = scalar_lea.vmem %s0, %s248
      %s250 = smul.u32 2, %s17
      %p251 = scmp.lt.s32.totalorder %s17, 1
      %s252 = scalar_select %p251, %s17, 1
      %s253 = smul.addr %s252, 8
      %s254 = scalar_lea.vmem %s6, %s253
      %v256 = vld [vmem:[%s1] sm:$0xf]
      %v257 = vld [vmem:[%s1 + $0x4] sm:$0xf]
      %v258 = vld [vmem:[%s1 + $0x8] sm:$0xf]
      %v259 = vld [vmem:[%s1 + $0xc] sm:$0xf]
      %v260 = vld [vmem:[%s1 + $0x10] sm:$0xf]
      %v261 = vld [vmem:[%s1 + $0x14] sm:$0xf]
      %v262 = vld [vmem:[%s1 + $0x18] sm:$0xf]
      %v263 = vld [vmem:[%s1 + $0x1c] sm:$0xf]
      %v264 = vld [vmem:[%s1 + $0x20] sm:$0xf]
      %v265 = vld [vmem:[%s1 + $0x24] sm:$0xf]
      %v266 = vld [vmem:[%s1 + $0x28] sm:$0xf]
      %v267 = vld [vmem:[%s1 + $0x2c] sm:$0xf]
      %v268 = vld [vmem:[%s1 + $0x30] sm:$0xf]
      %v269 = vld [vmem:[%s1 + $0x34] sm:$0xf]
      %v270 = vld [vmem:[%s1 + $0x38] sm:$0xf]
      %v271 = vld [vmem:[%s1 + $0x3c] sm:$0xf]
      %v272 = vld [vmem:[%s1 + $0x40] sm:$0xf]
      %v273 = vld [vmem:[%s1 + $0x44] sm:$0xf]
      %v274 = vld [vmem:[%s1 + $0x48] sm:$0xf]
      %v275 = vld [vmem:[%s1 + $0x4c] sm:$0xf]
      %v276 = vld [vmem:[%s1 + $0x50] sm:$0xf]
      %v277 = vld [vmem:[%s1 + $0x54] sm:$0xf]
      %v278 = vld [vmem:[%s1 + $0x58] sm:$0xf]
      %v279 = vld [vmem:[%s1 + $0x5c] sm:$0xf]
      %v280 = vld [vmem:[%s1 + $0x60] sm:$0xf]
      %v281 = vld [vmem:[%s1 + $0x64] sm:$0xf]
      %v282 = vld [vmem:[%s1 + $0x68] sm:$0xf]
      %v283 = vld [vmem:[%s1 + $0x6c] sm:$0xf]
      %v284 = vld [vmem:[%s1 + $0x70] sm:$0xf]
      %v285 = vld [vmem:[%s1 + $0x74] sm:$0xf]
      %v286 = vld [vmem:[%s1 + $0x78] sm:$0xf]
      %v287 = vld [vmem:[%s1 + $0x7c] sm:$0xf]
      %v288 = vld [vmem:[%s1 + $0x80] sm:$0xf]
      %v289 = vld [vmem:[%s1 + $0x84] sm:$0xf]
      %v290 = vld [vmem:[%s1 + $0x88] sm:$0xf]
      %v291 = vld [vmem:[%s1 + $0x8c] sm:$0xf]
      %v292 = vld [vmem:[%s1 + $0x90] sm:$0xf]
      %v293 = vld [vmem:[%s1 + $0x94] sm:$0xf]
      %v294 = vld [vmem:[%s1 + $0x98] sm:$0xf]
      %v295 = vld [vmem:[%s1 + $0x9c] sm:$0xf]
      %v296 = vld [vmem:[%s1 + $0xa0] sm:$0xf]
      %v297 = vld [vmem:[%s1 + $0xa4] sm:$0xf]
      %v298 = vld [vmem:[%s1 + $0xa8] sm:$0xf]
      %v299 = vld [vmem:[%s1 + $0xac] sm:$0xf]
      %v300 = vld [vmem:[%s1 + $0xb0] sm:$0xf]
      %v301 = vld [vmem:[%s1 + $0xb4] sm:$0xf]
      %v302 = vld [vmem:[%s1 + $0xb8] sm:$0xf]
      %v303 = vld [vmem:[%s1 + $0xbc] sm:$0xf]
      %v304 = vld [vmem:[%s1 + $0xc0] sm:$0xf]
      %v305 = vld [vmem:[%s1 + $0xc4] sm:$0xf]
      %v306 = vld [vmem:[%s1 + $0xc8] sm:$0xf]
      %v307 = vld [vmem:[%s1 + $0xcc] sm:$0xf]
      %v308 = vld [vmem:[%s1 + $0xd0] sm:$0xf]
      %v309 = vld [vmem:[%s1 + $0xd4] sm:$0xf]
      %v310 = vld [vmem:[%s1 + $0xd8] sm:$0xf]
      %v311 = vld [vmem:[%s1 + $0xdc] sm:$0xf]
      %v312 = vld [vmem:[%s1 + $0xe0] sm:$0xf]
      %v313 = vld [vmem:[%s1 + $0xe4] sm:$0xf]
      %v314 = vld [vmem:[%s1 + $0xe8] sm:$0xf]
      %v315 = vld [vmem:[%s1 + $0xec] sm:$0xf]
      %v316 = vld [vmem:[%s1 + $0xf0] sm:$0xf]
      %v317 = vld [vmem:[%s1 + $0xf4] sm:$0xf]
      %v318 = vld [vmem:[%s1 + $0xf8] sm:$0xf]
      %v319 = vld [vmem:[%s1 + $0xfc] sm:$0xf]
      %v320 = vld [vmem:[%s1 + $0x100] sm:$0xf]
      %v321 = vld [vmem:[%s1 + $0x104] sm:$0xf]
      %v322 = vld [vmem:[%s1 + $0x108] sm:$0xf]
      %v323 = vld [vmem:[%s1 + $0x10c] sm:$0xf]
      %v324 = vld [vmem:[%s1 + $0x110] sm:$0xf]
      %v325 = vld [vmem:[%s1 + $0x114] sm:$0xf]
      %v326 = vld [vmem:[%s1 + $0x118] sm:$0xf]
      %v327 = vld [vmem:[%s1 + $0x11c] sm:$0xf]
      %v328 = vld [vmem:[%s1 + $0x120] sm:$0xf]
      %v329 = vld [vmem:[%s1 + $0x124] sm:$0xf]
      %v330 = vld [vmem:[%s1 + $0x128] sm:$0xf]
      %v331 = vld [vmem:[%s1 + $0x12c] sm:$0xf]
      %v332 = vld [vmem:[%s1 + $0x130] sm:$0xf]
      %v333 = vld [vmem:[%s1 + $0x134] sm:$0xf]
      %v334 = vld [vmem:[%s1 + $0x138] sm:$0xf]
      %v335 = vld [vmem:[%s1 + $0x13c] sm:$0xf]
      %v336 = vld [vmem:[%s1 + $0x140] sm:$0xf]
      %v337 = vld [vmem:[%s1 + $0x144] sm:$0xf]
      %v338 = vld [vmem:[%s1 + $0x148] sm:$0xf]
      %v339 = vld [vmem:[%s1 + $0x14c] sm:$0xf]
      %v340 = vld [vmem:[%s1 + $0x150] sm:$0xf]
      %v341 = vld [vmem:[%s1 + $0x154] sm:$0xf]
      %v342 = vld [vmem:[%s1 + $0x158] sm:$0xf]
      %v343 = vld [vmem:[%s1 + $0x15c] sm:$0xf]
      %v344 = vld [vmem:[%s1 + $0x160] sm:$0xf]
      %v345 = vld [vmem:[%s1 + $0x164] sm:$0xf]
      %v346 = vld [vmem:[%s1 + $0x168] sm:$0xf]
      %v347 = vld [vmem:[%s1 + $0x16c] sm:$0xf]
      %v348 = vld [vmem:[%s1 + $0x170] sm:$0xf]
      %v349 = vld [vmem:[%s1 + $0x174] sm:$0xf]
      %v350 = vld [vmem:[%s1 + $0x178] sm:$0xf]
      %v351 = vld [vmem:[%s1 + $0x17c] sm:$0xf]
      %v352 = vld [vmem:[%s1 + $0x180] sm:$0xf]
      %v353 = vld [vmem:[%s1 + $0x184] sm:$0xf]
      %v354 = vld [vmem:[%s1 + $0x188] sm:$0xf]
      %v355 = vld [vmem:[%s1 + $0x18c] sm:$0xf]
      %v356 = vld [vmem:[%s1 + $0x190] sm:$0xf]
      %v357 = vld [vmem:[%s1 + $0x194] sm:$0xf]
      %v358 = vld [vmem:[%s1 + $0x198] sm:$0xf]
      %v359 = vld [vmem:[%s1 + $0x19c] sm:$0xf]
      %v360 = vld [vmem:[%s2] sm:$0xf]
      %v361 = vld [vmem:[%s2 + $0x4] sm:$0xf]
      %v362 = vld [vmem:[%s2 + $0x8] sm:$0xf]
      %v363 = vld [vmem:[%s2 + $0xc] sm:$0xf]
      %v364 = vld [vmem:[%s2 + $0x10] sm:$0xf]
      %v365 = vld [vmem:[%s2 + $0x14] sm:$0xf]
      %v366 = vld [vmem:[%s2 + $0x18] sm:$0xf]
      %v367 = vld [vmem:[%s2 + $0x1c] sm:$0xf]
      %v368 = vld [vmem:[%s2 + $0x20] sm:$0xf]
      %v369 = vld [vmem:[%s2 + $0x24] sm:$0xf]
      %v370 = vld [vmem:[%s2 + $0x28] sm:$0xf]
      %v371 = vld [vmem:[%s2 + $0x2c] sm:$0xf]
      %v372 = vld [vmem:[%s2 + $0x30] sm:$0xf]
      %v373 = vld [vmem:[%s2 + $0x34] sm:$0xf]
      %v374 = vld [vmem:[%s2 + $0x38] sm:$0xf]
      %v375 = vld [vmem:[%s2 + $0x3c] sm:$0xf]
      %v376 = vld [vmem:[%s2 + $0x40] sm:$0xf]
      %v377 = vld [vmem:[%s2 + $0x44] sm:$0xf]
      %v378 = vld [vmem:[%s2 + $0x48] sm:$0xf]
      %v379 = vld [vmem:[%s2 + $0x4c] sm:$0xf]
      %v380 = vld [vmem:[%s2 + $0x50] sm:$0xf]
      %v381 = vld [vmem:[%s2 + $0x54] sm:$0xf]
      %v382 = vld [vmem:[%s2 + $0x58] sm:$0xf]
      %v383 = vld [vmem:[%s2 + $0x5c] sm:$0xf]
      %v384 = vld [vmem:[%s2 + $0x60] sm:$0xf]
      %v385 = vld [vmem:[%s2 + $0x64] sm:$0xf]
      %v386 = vld [vmem:[%s2 + $0x68] sm:$0xf]
      %v387 = vld [vmem:[%s2 + $0x6c] sm:$0xf]
      %v388 = vld [vmem:[%s2 + $0x70] sm:$0xf]
      %v389 = vld [vmem:[%s2 + $0x74] sm:$0xf]
      %v390 = vld [vmem:[%s2 + $0x78] sm:$0xf]
      %v391 = vld [vmem:[%s2 + $0x7c] sm:$0xf]
      %v392 = vld [vmem:[%s2 + $0x80] sm:$0xf]
      %v393 = vld [vmem:[%s2 + $0x84] sm:$0xf]
      %v394 = vld [vmem:[%s2 + $0x88] sm:$0xf]
      %v395 = vld [vmem:[%s2 + $0x8c] sm:$0xf]
      %v396 = vld [vmem:[%s2 + $0x90] sm:$0xf]
      %v397 = vld [vmem:[%s2 + $0x94] sm:$0xf]
      %v398 = vld [vmem:[%s2 + $0x98] sm:$0xf]
      %v399 = vld [vmem:[%s2 + $0x9c] sm:$0xf]
      %v400 = vld [vmem:[%s2 + $0xa0] sm:$0xf]
      %v401 = vld [vmem:[%s3] sm:$0xf]
      %v402 = vld [vmem:[%s3 + $0x4] sm:$0xf]
      %v403 = vld [vmem:[%s3 + $0x8] sm:$0xf]
      %v404 = vld [vmem:[%s3 + $0xc] sm:$0xf]
      %v405 = vld [vmem:[%s3 + $0x10] sm:$0xf]
      %v406 = vld [vmem:[%s3 + $0x14] sm:$0xf]
      %v407 = vld [vmem:[%s3 + $0x18] sm:$0xf]
      %v408 = vld [vmem:[%s3 + $0x1c] sm:$0xf]
      %v409 = vld [vmem:[%s3 + $0x20] sm:$0xf]
      %v410 = vld [vmem:[%s3 + $0x24] sm:$0xf]
      %v411 = vld [vmem:[%s3 + $0x28] sm:$0xf]
      %v412 = vld [vmem:[%s3 + $0x2c] sm:$0xf]
      %v413 = vld [vmem:[%s3 + $0x30] sm:$0xf]
      %v414 = vld [vmem:[%s3 + $0x34] sm:$0xf]
      %v415 = vld [vmem:[%s3 + $0x38] sm:$0xf]
      %v416 = vld [vmem:[%s3 + $0x3c] sm:$0xf]
      %v417 = vld [vmem:[%s3 + $0x40] sm:$0xf]
      %v418 = vld [vmem:[%s3 + $0x44] sm:$0xf]
      %v419 = vld [vmem:[%s3 + $0x48] sm:$0xf]
      %v420 = vld [vmem:[%s3 + $0x4c] sm:$0xf]
      %v421 = vld [vmem:[%s3 + $0x50] sm:$0xf]
      %v422 = vld [vmem:[%s3 + $0x54] sm:$0xf]
      %v423 = vld [vmem:[%s3 + $0x58] sm:$0xf]
      %v424 = vld [vmem:[%s3 + $0x5c] sm:$0xf]
      %v425 = vld [vmem:[%s3 + $0x60] sm:$0xf]
      %v426 = vld [vmem:[%s3 + $0x64] sm:$0xf]
      %v427 = vld [vmem:[%s3 + $0x68] sm:$0xf]
      %v428 = vld [vmem:[%s3 + $0x6c] sm:$0xf]
      %v429 = vld [vmem:[%s3 + $0x70] sm:$0xf]
      %v430 = vld [vmem:[%s3 + $0x74] sm:$0xf]
      %v431 = vld [vmem:[%s3 + $0x78] sm:$0xf]
      %v432 = vld [vmem:[%s3 + $0x7c] sm:$0xf]
      %v433 = vld [vmem:[%s3 + $0x80] sm:$0xf]
      %v434 = vld [vmem:[%s3 + $0x84] sm:$0xf]
      %v435 = vld [vmem:[%s3 + $0x88] sm:$0xf]
      %v436 = vld [vmem:[%s3 + $0x8c] sm:$0xf]
      %v437 = vld [vmem:[%s3 + $0x90] sm:$0xf]
      %v438 = vld [vmem:[%s3 + $0x94] sm:$0xf]
      %v439 = vld [vmem:[%s3 + $0x98] sm:$0xf]
      %v440 = vld [vmem:[%s3 + $0x9c] sm:$0xf]
      %v441 = vld [vmem:[%s3 + $0xa0] sm:$0xf]
      %v442 = vld [vmem:[%s3 + $0xa4] sm:$0xf]
      %v443 = vld [vmem:[%s3 + $0xa8] sm:$0xf]
      %v444 = vld [vmem:[%s3 + $0xac] sm:$0xf]
      %v445 = vld [vmem:[%s3 + $0xb0] sm:$0xf]
      %v446 = vld [vmem:[%s3 + $0xb4] sm:$0xf]
      %v447 = vld [vmem:[%s3 + $0xb8] sm:$0xf]
      %v448 = vld [vmem:[%s3 + $0xbc] sm:$0xf]
      %v449 = vld [vmem:[%s3 + $0xc0] sm:$0xf]
      %v450 = vld [vmem:[%s3 + $0xc4] sm:$0xf]
      %v451 = vld [vmem:[%s3 + $0xc8] sm:$0xf]
      %v452 = vld [vmem:[%s3 + $0xcc] sm:$0xf]
      %v453 = vld [vmem:[%s3 + $0xd0] sm:$0xf]
      %v454 = vld [vmem:[%s3 + $0xd4] sm:$0xf]
      %v455 = vld [vmem:[%s3 + $0xd8] sm:$0xf]
      %v456 = vld [vmem:[%s3 + $0xdc] sm:$0xf]
      %v457 = vld [vmem:[%s3 + $0xe0] sm:$0xf]
      %v458 = vld [vmem:[%s3 + $0xe4] sm:$0xf]
      %v459 = vld [vmem:[%s3 + $0xe8] sm:$0xf]
      %v460 = vld [vmem:[%s3 + $0xec] sm:$0xf]
      %v461 = vld [vmem:[%s3 + $0xf0] sm:$0xf]
      %v462 = vld [vmem:[%s3 + $0xf4] sm:$0xf]
      %v463 = vld [vmem:[%s3 + $0xf8] sm:$0xf]
      %v464 = vld [vmem:[%s3 + $0xfc] sm:$0xf]
      %v465 = vld [vmem:[%s3 + $0x100] sm:$0xf]
      %v466 = vld [vmem:[%s3 + $0x104] sm:$0xf]
      %v467 = vld [vmem:[%s3 + $0x108] sm:$0xf]
      %v468 = vld [vmem:[%s3 + $0x10c] sm:$0xf]
      %v469 = vld [vmem:[%s3 + $0x110] sm:$0xf]
      %v470 = vld [vmem:[%s3 + $0x114] sm:$0xf]
      %v471 = vld [vmem:[%s3 + $0x118] sm:$0xf]
      %v472 = vld [vmem:[%s3 + $0x11c] sm:$0xf]
      %v473 = vld [vmem:[%s3 + $0x120] sm:$0xf]
      %v474 = vld [vmem:[%s3 + $0x124] sm:$0xf]
      %v475 = vld [vmem:[%s3 + $0x128] sm:$0xf]
      %v476 = vld [vmem:[%s3 + $0x12c] sm:$0xf]
      %v477 = vld [vmem:[%s3 + $0x130] sm:$0xf]
      %v478 = vld [vmem:[%s3 + $0x134] sm:$0xf]
      %v479 = vld [vmem:[%s3 + $0x138] sm:$0xf]
      %v480 = vld [vmem:[%s3 + $0x13c] sm:$0xf]
      %v481 = vld [vmem:[%s3 + $0x140] sm:$0xf]
      %v482 = vld [vmem:[%s3 + $0x144] sm:$0xf]
      %v483 = vld [vmem:[%s3 + $0x148] sm:$0xf]
      %v484 = vld [vmem:[%s3 + $0x14c] sm:$0xf]
      %v485 = vld [vmem:[%s3 + $0x150] sm:$0xf]
      %v486 = vld [vmem:[%s3 + $0x154] sm:$0xf]
      %v487 = vld [vmem:[%s3 + $0x158] sm:$0xf]
      %v488 = vld [vmem:[%s3 + $0x15c] sm:$0xf]
      %v489 = vld [vmem:[%s3 + $0x160] sm:$0xf]
      %v490 = vld [vmem:[%s3 + $0x164] sm:$0xf]
      %v491 = vld [vmem:[%s3 + $0x168] sm:$0xf]
      %v492 = vld [vmem:[%s3 + $0x16c] sm:$0xf]
      %v493 = vld [vmem:[%s3 + $0x170] sm:$0xf]
      %v494 = vld [vmem:[%s3 + $0x174] sm:$0xf]
      %v495 = vld [vmem:[%s3 + $0x178] sm:$0xf]
      %v496 = vld [vmem:[%s3 + $0x17c] sm:$0xf]
      %v497 = vld [vmem:[%s3 + $0x180] sm:$0xf]
      %v498 = vld [vmem:[%s3 + $0x184] sm:$0xf]
      %v499 = vld [vmem:[%s3 + $0x188] sm:$0xf]
      %v500 = vld [vmem:[%s3 + $0x18c] sm:$0xf]
      %v501 = vld [vmem:[%s3 + $0x190] sm:$0xf]
      %v502 = vld [vmem:[%s3 + $0x194] sm:$0xf]
      %v503 = vld [vmem:[%s3 + $0x198] sm:$0xf]
      %v504 = vld [vmem:[%s3 + $0x19c] sm:$0xf]
      %v505 = vld [vmem:[%s3 + $0x1a0] sm:$0xf]
      %v506 = vld [vmem:[%s3 + $0x1a4] sm:$0xf]
      %v507 = vld [vmem:[%s3 + $0x1a8] sm:$0xf]
      %v508 = vld [vmem:[%s3 + $0x1ac] sm:$0xf]
      %v509 = vld [vmem:[%s3 + $0x1b0] sm:$0xf]
      %v510 = vld [vmem:[%s3 + $0x1b4] sm:$0xf]
      %v511 = vld [vmem:[%s3 + $0x1b8] sm:$0xf]
      %v512 = vld [vmem:[%s3 + $0x1bc] sm:$0xf]
      %v513 = vld [vmem:[%s3 + $0x1c0] sm:$0xf]
      %v514 = vld [vmem:[%s3 + $0x1c4] sm:$0xf]
      %v515 = vld [vmem:[%s3 + $0x1c8] sm:$0xf]
      %v516 = vld [vmem:[%s3 + $0x1cc] sm:$0xf]
      %v517 = vld [vmem:[%s3 + $0x1d0] sm:$0xf]
      %v518 = vld [vmem:[%s3 + $0x1d4] sm:$0xf]
      %v519 = vld [vmem:[%s3 + $0x1d8] sm:$0xf]
      %v520 = vld [vmem:[%s3 + $0x1dc] sm:$0xf]
      %v521 = vld [vmem:[%s3 + $0x1e0] sm:$0xf]
      %v522 = vld [vmem:[%s3 + $0x1e4] sm:$0xf]
      %v523 = vld [vmem:[%s3 + $0x1e8] sm:$0xf]
      %v524 = vld [vmem:[%s3 + $0x1ec] sm:$0xf]
      %v525 = vld [vmem:[%s3 + $0x1f0] sm:$0xf]
      %v526 = vld [vmem:[%s3 + $0x1f4] sm:$0xf]
      %v527 = vld [vmem:[%s3 + $0x1f8] sm:$0xf]
      %v528 = vld [vmem:[%s3 + $0x1fc] sm:$0xf]
      %v529 = vld [vmem:[%s3 + $0x200] sm:$0xf]
      %v530 = vld [vmem:[%s3 + $0x204] sm:$0xf]
      %v531 = vld [vmem:[%s3 + $0x208] sm:$0xf]
      %v532 = vld [vmem:[%s3 + $0x20c] sm:$0xf]
      %v533 = vld [vmem:[%s3 + $0x210] sm:$0xf]
      %v534 = vld [vmem:[%s3 + $0x214] sm:$0xf]
      %v535 = vld [vmem:[%s3 + $0x218] sm:$0xf]
      %v536 = vld [vmem:[%s3 + $0x21c] sm:$0xf]
      %v537 = vld [vmem:[%s3 + $0x220] sm:$0xf]
      %v538 = vld [vmem:[%s3 + $0x224] sm:$0xf]
      %v539 = vld [vmem:[%s3 + $0x228] sm:$0xf]
      %v540 = vld [vmem:[%s3 + $0x22c] sm:$0xf]
      %v541 = vld [vmem:[%s3 + $0x230] sm:$0xf]
      %v542 = vld [vmem:[%s3 + $0x234] sm:$0xf]
      %v543 = vld [vmem:[%s3 + $0x238] sm:$0xf]
      %v544 = vld [vmem:[%s3 + $0x23c] sm:$0xf]
      %v545 = vld [vmem:[%s3 + $0x240] sm:$0xf]
      %v546 = vld [vmem:[%s3 + $0x244] sm:$0xf]
      %v547 = vld [vmem:[%s3 + $0x248] sm:$0xf]
      %v548 = vld [vmem:[%s3 + $0x24c] sm:$0xf]
      %v549 = vld [vmem:[%s3 + $0x250] sm:$0xf]
      %v550 = vld [vmem:[%s3 + $0x254] sm:$0xf]
      %v551 = vld [vmem:[%s3 + $0x258] sm:$0xf]
      %v552 = vld [vmem:[%s3 + $0x25c] sm:$0xf]
      %v553 = vld [vmem:[%s3 + $0x260] sm:$0xf]
      %v554 = vld [vmem:[%s3 + $0x264] sm:$0xf]
      %v555 = vld [vmem:[%s3 + $0x268] sm:$0xf]
      %v556 = vld [vmem:[%s3 + $0x26c] sm:$0xf]
      %v557 = vld [vmem:[%s3 + $0x270] sm:$0xf]
      %v558 = vld [vmem:[%s3 + $0x274] sm:$0xf]
      %v559 = vld [vmem:[%s3 + $0x278] sm:$0xf]
      %v560 = vld [vmem:[%s3 + $0x27c] sm:$0xf]
      %v561 = vld [vmem:[%s3 + $0x280] sm:$0xf]
      %v562 = vld [vmem:[%s3 + $0x284] sm:$0xf]
      %v563 = vld [vmem:[%s3 + $0x288] sm:$0xf]
      %v564 = vld [vmem:[%s3 + $0x28c] sm:$0xf]
      %v565 = vld [vmem:[%s3 + $0x290] sm:$0xf]
      %v566 = vld [vmem:[%s3 + $0x294] sm:$0xf]
      %v567 = vld [vmem:[%s3 + $0x298] sm:$0xf]
      %v568 = vld [vmem:[%s3 + $0x29c] sm:$0xf]
      %v569 = vld [vmem:[%s3 + $0x2a0] sm:$0xf]
      %v570 = vld [vmem:[%s3 + $0x2a4] sm:$0xf]
      %v571 = vld [vmem:[%s3 + $0x2a8] sm:$0xf]
      %v572 = vld [vmem:[%s3 + $0x2ac] sm:$0xf]
      %v573 = vld [vmem:[%s3 + $0x2b0] sm:$0xf]
      %v574 = vld [vmem:[%s3 + $0x2b4] sm:$0xf]
      %v575 = vld [vmem:[%s3 + $0x2b8] sm:$0xf]
      %v576 = vld [vmem:[%s3 + $0x2bc] sm:$0xf]
      %v577 = vld [vmem:[%s3 + $0x2c0] sm:$0xf]
      %v578 = vld [vmem:[%s3 + $0x2c4] sm:$0xf]
      %v579 = vld [vmem:[%s3 + $0x2c8] sm:$0xf]
      %v580 = vld [vmem:[%s3 + $0x2cc] sm:$0xf]
      %v581 = vld [vmem:[%s3 + $0x2d0] sm:$0xf]
      %v582 = vld [vmem:[%s3 + $0x2d4] sm:$0xf]
      %v583 = vld [vmem:[%s3 + $0x2d8] sm:$0xf]
      %v584 = vld [vmem:[%s3 + $0x2dc] sm:$0xf]
      %v585 = vld [vmem:[%s3 + $0x2e0] sm:$0xf]
      %v586 = vld [vmem:[%s3 + $0x2e4] sm:$0xf]
      %v587 = vld [vmem:[%s3 + $0x2e8] sm:$0xf]
      %v588 = vld [vmem:[%s3 + $0x2ec] sm:$0xf]
      %v589 = vld [vmem:[%s3 + $0x2f0] sm:$0xf]
      %v590 = vld [vmem:[%s3 + $0x2f4] sm:$0xf]
      %v591 = vld [vmem:[%s3 + $0x2f8] sm:$0xf]
      %v592 = vld [vmem:[%s3 + $0x2fc] sm:$0xf]
      %v593 = vld [vmem:[%s3 + $0x300] sm:$0xf]
      %v594 = vld [vmem:[%s3 + $0x304] sm:$0xf]
      %v595 = vld [vmem:[%s3 + $0x308] sm:$0xf]
      %v596 = vld [vmem:[%s3 + $0x30c] sm:$0xf]
      %v597 = vld [vmem:[%s3 + $0x310] sm:$0xf]
      %v598 = vld [vmem:[%s3 + $0x314] sm:$0xf]
      %v599 = vld [vmem:[%s3 + $0x318] sm:$0xf]
      %v600 = vld [vmem:[%s3 + $0x31c] sm:$0xf]
      %v601 = vld [vmem:[%s3 + $0x320] sm:$0xf]
      %v602 = vld [vmem:[%s3 + $0x324] sm:$0xf]
      %v603 = vld [vmem:[%s3 + $0x328] sm:$0xf]
      %v604 = vld [vmem:[%s3 + $0x32c] sm:$0xf]
      %v605 = vld [vmem:[%s3 + $0x330] sm:$0xf]
      %v606 = vld [vmem:[%s3 + $0x334] sm:$0xf]
      %v607 = vld [vmem:[%s3 + $0x338] sm:$0xf]
      %v608 = vld [vmem:[%s3 + $0x33c] sm:$0xf]
      %v609 = vld [vmem:[%s3 + $0x340] sm:$0xf]
      %v610 = vld [vmem:[%s3 + $0x344] sm:$0xf]
      %v611 = vld [vmem:[%s3 + $0x348] sm:$0xf]
      %v612 = vld [vmem:[%s3 + $0x34c] sm:$0xf]
      %v613 = vld [vmem:[%s3 + $0x350] sm:$0xf]
      %v614 = vld [vmem:[%s3 + $0x354] sm:$0xf]
      %v615 = vld [vmem:[%s3 + $0x358] sm:$0xf]
      %v616 = vld [vmem:[%s3 + $0x35c] sm:$0xf]
      %v617 = vld [vmem:[%s3 + $0x360] sm:$0xf]
      %v618 = vld [vmem:[%s3 + $0x364] sm:$0xf]
      %v619 = vld [vmem:[%s3 + $0x368] sm:$0xf]
      %v620 = vld [vmem:[%s3 + $0x36c] sm:$0xf]
      %v621 = vld [vmem:[%s3 + $0x370] sm:$0xf]
      %v622 = vld [vmem:[%s3 + $0x374] sm:$0xf]
      %v623 = vld [vmem:[%s3 + $0x378] sm:$0xf]
      %v624 = vld [vmem:[%s3 + $0x37c] sm:$0xf]
      %v625 = vld [vmem:[%s3 + $0x380] sm:$0xf]
      %v626 = vld [vmem:[%s3 + $0x384] sm:$0xf]
      %v627 = vld [vmem:[%s3 + $0x388] sm:$0xf]
      %v628 = vld [vmem:[%s3 + $0x38c] sm:$0xf]
      %v629 = vld [vmem:[%s3 + $0x390] sm:$0xf]
      %v630 = vld [vmem:[%s3 + $0x394] sm:$0xf]
      %v631 = vld [vmem:[%s3 + $0x398] sm:$0xf]
      %v632 = vld [vmem:[%s3 + $0x39c] sm:$0xf]
      %v633 = vld [vmem:[%s3 + $0x3a0] sm:$0xf]
      %v634 = vld [vmem:[%s3 + $0x3a4] sm:$0xf]
      %v635 = vld [vmem:[%s3 + $0x3a8] sm:$0xf]
      %v636 = vld [vmem:[%s3 + $0x3ac] sm:$0xf]
      %v637 = vld [vmem:[%s3 + $0x3b0] sm:$0xf]
      %v638 = vld [vmem:[%s3 + $0x3b4] sm:$0xf]
      %v639 = vld [vmem:[%s3 + $0x3b8] sm:$0xf]
      %v640 = vld [vmem:[%s3 + $0x3bc] sm:$0xf]
      %v641 = vld [vmem:[%s3 + $0x3c0] sm:$0xf]
      %v642 = vld [vmem:[%s3 + $0x3c4] sm:$0xf]
      %v643 = vld [vmem:[%s3 + $0x3c8] sm:$0xf]
      %v644 = vld [vmem:[%s3 + $0x3cc] sm:$0xf]
      %v645 = vld [vmem:[%s3 + $0x3d0] sm:$0xf]
      %v646 = vld [vmem:[%s3 + $0x3d4] sm:$0xf]
      %v647 = vld [vmem:[%s3 + $0x3d8] sm:$0xf]
      %v648 = vld [vmem:[%s3 + $0x3dc] sm:$0xf]
      %v649 = vld [vmem:[%s3 + $0x3e0] sm:$0xf]
      %v650 = vld [vmem:[%s3 + $0x3e4] sm:$0xf]
      %v651 = vld [vmem:[%s3 + $0x3e8] sm:$0xf]
      %v652 = vld [vmem:[%s3 + $0x3ec] sm:$0xf]
      %v653 = vld [vmem:[%s3 + $0x3f0] sm:$0xf]
      %v654 = vld [vmem:[%s3 + $0x3f4] sm:$0xf]
      %v655 = vld [vmem:[%s3 + $0x3f8] sm:$0xf]
      %v656 = vld [vmem:[%s3 + $0x3fc] sm:$0xf]
      %v657 = vld [vmem:[%s3 + $0x400] sm:$0xf]
      %v658 = vld [vmem:[%s3 + $0x404] sm:$0xf]
      %v659 = vld [vmem:[%s3 + $0x408] sm:$0xf]
      %v660 = vld [vmem:[%s3 + $0x40c] sm:$0xf]
      %v661 = vld [vmem:[%s3 + $0x410] sm:$0xf]
      %v662 = vld [vmem:[%s3 + $0x414] sm:$0xf]
      %v663 = vld [vmem:[%s3 + $0x418] sm:$0xf]
      %v664 = vld [vmem:[%s3 + $0x41c] sm:$0xf]
      %v665 = vld [vmem:[%s3 + $0x420] sm:$0xf]
      %v666 = vld [vmem:[%s3 + $0x424] sm:$0xf]
      %v667 = vld [vmem:[%s3 + $0x428] sm:$0xf]
      %v668 = vld [vmem:[%s3 + $0x42c] sm:$0xf]
      %v669 = vld [vmem:[%s3 + $0x430] sm:$0xf]
      %v670 = vld [vmem:[%s3 + $0x434] sm:$0xf]
      %v671 = vld [vmem:[%s3 + $0x438] sm:$0xf]
      %v672 = vld [vmem:[%s3 + $0x43c] sm:$0xf]
      %v673 = vld [vmem:[%s3 + $0x440] sm:$0xf]
      %v674 = vld [vmem:[%s3 + $0x444] sm:$0xf]
      %v675 = vld [vmem:[%s3 + $0x448] sm:$0xf]
      %v676 = vld [vmem:[%s3 + $0x44c] sm:$0xf]
      %v677 = vld [vmem:[%s3 + $0x450] sm:$0xf]
      %v678 = vld [vmem:[%s3 + $0x454] sm:$0xf]
      %v679 = vld [vmem:[%s3 + $0x458] sm:$0xf]
      %v680 = vld [vmem:[%s3 + $0x45c] sm:$0xf]
      %v681 = vld [vmem:[%s3 + $0x460] sm:$0xf]
      %v682 = vld [vmem:[%s3 + $0x464] sm:$0xf]
      %v683 = vld [vmem:[%s3 + $0x468] sm:$0xf]
      %v684 = vld [vmem:[%s3 + $0x46c] sm:$0xf]
      %v685 = vld [vmem:[%s3 + $0x470] sm:$0xf]
      %v686 = vld [vmem:[%s3 + $0x474] sm:$0xf]
      %v687 = vld [vmem:[%s3 + $0x478] sm:$0xf]
      %v688 = vld [vmem:[%s3 + $0x47c] sm:$0xf]
      %v689 = vld [vmem:[%s3 + $0x480] sm:$0xf]
      %v690 = vld [vmem:[%s3 + $0x484] sm:$0xf]
      %v691 = vld [vmem:[%s3 + $0x488] sm:$0xf]
      %v692 = vld [vmem:[%s3 + $0x48c] sm:$0xf]
      %v693 = vld [vmem:[%s3 + $0x490] sm:$0xf]
      %v694 = vld [vmem:[%s3 + $0x494] sm:$0xf]
      %v695 = vld [vmem:[%s3 + $0x498] sm:$0xf]
      %v696 = vld [vmem:[%s3 + $0x49c] sm:$0xf]
      %v697 = vld [vmem:[%s3 + $0x4a0] sm:$0xf]
      %v698 = vld [vmem:[%s3 + $0x4a4] sm:$0xf]
      %v699 = vld [vmem:[%s3 + $0x4a8] sm:$0xf]
      %v700 = vld [vmem:[%s3 + $0x4ac] sm:$0xf]
      %v701 = vld [vmem:[%s3 + $0x4b0] sm:$0xf]
      %v702 = vld [vmem:[%s3 + $0x4b4] sm:$0xf]
      %v703 = vld [vmem:[%s3 + $0x4b8] sm:$0xf]
      %v704 = vld [vmem:[%s3 + $0x4bc] sm:$0xf]
      %v705 = vld [vmem:[%s3 + $0x4c0] sm:$0xf]
      %v706 = vld [vmem:[%s3 + $0x4c4] sm:$0xf]
      %v707 = vld [vmem:[%s3 + $0x4c8] sm:$0xf]
      %v708 = vld [vmem:[%s3 + $0x4cc] sm:$0xf]
      %v709 = vld [vmem:[%s3 + $0x4d0] sm:$0xf]
      %v710 = vld [vmem:[%s3 + $0x4d4] sm:$0xf]
      %v711 = vld [vmem:[%s3 + $0x4d8] sm:$0xf]
      %v712 = vld [vmem:[%s3 + $0x4dc] sm:$0xf]
      %v713 = vld [vmem:[%s3 + $0x4e0] sm:$0xf]
      %v714 = vld [vmem:[%s3 + $0x4e4] sm:$0xf]
      %v715 = vld [vmem:[%s3 + $0x4e8] sm:$0xf]
      %v716 = vld [vmem:[%s3 + $0x4ec] sm:$0xf]
      %v717 = vld [vmem:[%s3 + $0x4f0] sm:$0xf]
      %v718 = vld [vmem:[%s3 + $0x4f4] sm:$0xf]
      %v719 = vld [vmem:[%s3 + $0x4f8] sm:$0xf]
      %v720 = vld [vmem:[%s3 + $0x4fc] sm:$0xf]
      %v721 = vld [vmem:[%s3 + $0x500] sm:$0xf]
      %v722 = vld [vmem:[%s3 + $0x504] sm:$0xf]
      %v723 = vld [vmem:[%s3 + $0x508] sm:$0xf]
      %v724 = vld [vmem:[%s3 + $0x50c] sm:$0xf]
      %v725 = vld [vmem:[%s3 + $0x510] sm:$0xf]
      %v726 = vld [vmem:[%s3 + $0x514] sm:$0xf]
      %v727 = vld [vmem:[%s3 + $0x518] sm:$0xf]
      %v728 = vld [vmem:[%s3 + $0x51c] sm:$0xf]
      %v729 = vld [vmem:[%s3 + $0x520] sm:$0xf]
      %v730 = vld [vmem:[%s3 + $0x524] sm:$0xf]
      %v731 = vld [vmem:[%s3 + $0x528] sm:$0xf]
      %v732 = vld [vmem:[%s3 + $0x52c] sm:$0xf]
      %v733 = vld [vmem:[%s3 + $0x530] sm:$0xf]
      %v734 = vld [vmem:[%s3 + $0x534] sm:$0xf]
      %v735 = vld [vmem:[%s3 + $0x538] sm:$0xf]
      %v736 = vld [vmem:[%s3 + $0x53c] sm:$0xf]
      %v737 = vld [vmem:[%s3 + $0x540] sm:$0xf]
      %v738 = vld [vmem:[%s3 + $0x544] sm:$0xf]
      %v739 = vld [vmem:[%s3 + $0x548] sm:$0xf]
      %v740 = vld [vmem:[%s3 + $0x54c] sm:$0xf]
      %v741 = vld [vmem:[%s3 + $0x550] sm:$0xf]
      %v742 = vld [vmem:[%s3 + $0x554] sm:$0xf]
      %v743 = vld [vmem:[%s3 + $0x558] sm:$0xf]
      %v744 = vld [vmem:[%s3 + $0x55c] sm:$0xf]
      %v745 = vld [vmem:[%s3 + $0x560] sm:$0xf]
      %v746 = vld [vmem:[%s3 + $0x564] sm:$0xf]
      %v747 = vld [vmem:[%s3 + $0x568] sm:$0xf]
      %v748 = vld [vmem:[%s3 + $0x56c] sm:$0xf]
      %v749 = vld [vmem:[%s3 + $0x570] sm:$0xf]
      %v750 = vld [vmem:[%s3 + $0x574] sm:$0xf]
      %v751 = vld [vmem:[%s3 + $0x578] sm:$0xf]
      %v752 = vld [vmem:[%s3 + $0x57c] sm:$0xf]
      %v753 = vld [vmem:[%s3 + $0x580] sm:$0xf]
      %v754 = vld [vmem:[%s3 + $0x584] sm:$0xf]
      %v755 = vld [vmem:[%s3 + $0x588] sm:$0xf]
      %v756 = vld [vmem:[%s3 + $0x58c] sm:$0xf]
      %v757 = vld [vmem:[%s3 + $0x590] sm:$0xf]
      %v758 = vld [vmem:[%s3 + $0x594] sm:$0xf]
      %v759 = vld [vmem:[%s3 + $0x598] sm:$0xf]
      %v760 = vld [vmem:[%s3 + $0x59c] sm:$0xf]
      %v761 = vld [vmem:[%s3 + $0x5a0] sm:$0xf]
      %v762 = vld [vmem:[%s3 + $0x5a4] sm:$0xf]
      %v763 = vld [vmem:[%s3 + $0x5a8] sm:$0xf]
      %v764 = vld [vmem:[%s3 + $0x5ac] sm:$0xf]
      %v765 = vld [vmem:[%s3 + $0x5b0] sm:$0xf]
      %v766 = vld [vmem:[%s3 + $0x5b4] sm:$0xf]
      %v767 = vld [vmem:[%s3 + $0x5b8] sm:$0xf]
      %v768 = vld [vmem:[%s3 + $0x5bc] sm:$0xf]
      %v769 = vld [vmem:[%s3 + $0x5c0] sm:$0xf]
      %v770 = vld [vmem:[%s3 + $0x5c4] sm:$0xf]
      %v771 = vld [vmem:[%s3 + $0x5c8] sm:$0xf]
      %v772 = vld [vmem:[%s3 + $0x5cc] sm:$0xf]
      %v773 = vld [vmem:[%s3 + $0x5d0] sm:$0xf]
      %v774 = vld [vmem:[%s3 + $0x5d4] sm:$0xf]
      %v775 = vld [vmem:[%s3 + $0x5d8] sm:$0xf]
      %v776 = vld [vmem:[%s3 + $0x5dc] sm:$0xf]
      %v777 = vld [vmem:[%s3 + $0x5e0] sm:$0xf]
      %v778 = vld [vmem:[%s3 + $0x5e4] sm:$0xf]
      %v779 = vld [vmem:[%s3 + $0x5e8] sm:$0xf]
      %v780 = vld [vmem:[%s3 + $0x5ec] sm:$0xf]
      %v781 = vld [vmem:[%s3 + $0x5f0] sm:$0xf]
      %v782 = vld [vmem:[%s3 + $0x5f4] sm:$0xf]
      %v783 = vld [vmem:[%s3 + $0x5f8] sm:$0xf]
      %v784 = vld [vmem:[%s3 + $0x5fc] sm:$0xf]
      %v785 = vld [vmem:[%s3 + $0x600] sm:$0xf]
      %v786 = vld [vmem:[%s3 + $0x604] sm:$0xf]
      %v787 = vld [vmem:[%s3 + $0x608] sm:$0xf]
      %v788 = vld [vmem:[%s3 + $0x60c] sm:$0xf]
      %v789 = vld [vmem:[%s3 + $0x610] sm:$0xf]
      %v790 = vld [vmem:[%s3 + $0x614] sm:$0xf]
      %v791 = vld [vmem:[%s3 + $0x618] sm:$0xf]
      %v792 = vld [vmem:[%s3 + $0x61c] sm:$0xf]
      %v793 = vld [vmem:[%s3 + $0x620] sm:$0xf]
      %v794 = vld [vmem:[%s3 + $0x624] sm:$0xf]
      %v795 = vld [vmem:[%s3 + $0x628] sm:$0xf]
      %v796 = vld [vmem:[%s3 + $0x62c] sm:$0xf]
      %v797 = vld [vmem:[%s3 + $0x630] sm:$0xf]
      %v798 = vld [vmem:[%s3 + $0x634] sm:$0xf]
      %v799 = vld [vmem:[%s3 + $0x638] sm:$0xf]
      %v800 = vld [vmem:[%s3 + $0x63c] sm:$0xf]
      %v801 = vld [vmem:[%s5] ss:$8 sm:$0xf]
      %v802 = vld [vmem:[%s5] ss:$8 sm:$0xf0]
      %v803 = vor.u32 %v801, %v802
      %s804 = scalar_lea.vmem %s5, 1
      %v805 = vld [vmem:[%s804] ss:$8 sm:$0xf]
      %v806 = vld [vmem:[%s5 + $0x2] ss:$0 sm:$0xff]
      %v807 = vld [vmem:[%s5 + $0x3] ss:$0 sm:$0xff]
      %v808 = vld [vmem:[%s5 + $0x4] ss:$0 sm:$0xff]
      %v809 = vld [vmem:[%s5 + $0x5] ss:$0 sm:$0xff]
      %v810 = vld [vmem:[%s249] sm:$0xff]
      %v811 = vld [vmem:[%s249 + $0x8] sm:$0xff]
      %v812 = vld [vmem:[%s249 + $0x10] sm:$0xff]
      %v813 = vld [vmem:[%s249 + $0x18] sm:$0xff]
      %v814 = vunpack.c.l.u8.bf16 %v810
      %v815 = vunpack.c.l.u8.bf16 %v811
      %v816 = vunpack.c.h.u8.bf16 %v810
      %v817 = vunpack.c.h.u8.bf16 %v811
      %v818 = vunpack.c.l.u8.bf16 %v812
      %v819 = vunpack.c.l.u8.bf16 %v813
      %v820 = vunpack.c.h.u8.bf16 %v812
      %v821 = vunpack.c.h.u8.bf16 %v813
      %v854 = vunpack.c.l.b16 %v256
      %v855 = vunpack.c.l.b16 %v257
      %v856 = vunpack.c.l.b16 %v258
      %v857 = vunpack.c.l.b16 %v259
      %v858 = vunpack.c.l.b16 %v260
      %v859 = vunpack.c.l.b16 %v261
      %v860 = vunpack.c.l.b16 %v262
      %v861 = vunpack.c.l.b16 %v263
      %v862 = vunpack.c.l.b16 %v264
      %v863 = vunpack.c.l.b16 %v265
      %v864 = vunpack.c.l.b16 %v266
      %v865 = vunpack.c.l.b16 %v267
      %v866 = vunpack.c.l.b16 %v268
      %v867 = vunpack.c.l.b16 %v269
      %v868 = vunpack.c.l.b16 %v270
      %v869 = vunpack.c.l.b16 %v271
      %v870 = vunpack.c.l.b16 %v272
      %v871 = vunpack.c.l.b16 %v273
      %v872 = vunpack.c.l.b16 %v274
      %v873 = vunpack.c.l.b16 %v275
      %v874 = vunpack.c.l.b16 %v276
      %v875 = vunpack.c.l.b16 %v277
      %v876 = vunpack.c.l.b16 %v278
      %v877 = vunpack.c.l.b16 %v279
      %v878 = vunpack.c.l.b16 %v280
      %v879 = vunpack.c.l.b16 %v281
      %v880 = vunpack.c.l.b16 %v282
      %v881 = vunpack.c.l.b16 %v283
      %v882 = vunpack.c.l.b16 %v284
      %v883 = vunpack.c.l.b16 %v285
      %v884 = vunpack.c.l.b16 %v286
      %v885 = vunpack.c.l.b16 %v287
      %v886 = vpack.c.b16 %v855, %v854
      %v887 = vpack.c.b16 %v857, %v856
      %v888 = vpack.c.b16 %v859, %v858
      %v889 = vpack.c.b16 %v861, %v860
      %v890 = vpack.c.b16 %v863, %v862
      %v891 = vpack.c.b16 %v865, %v864
      %v892 = vpack.c.b16 %v867, %v866
      %v893 = vpack.c.b16 %v869, %v868
      %v894 = vpack.c.b16 %v871, %v870
      %v895 = vpack.c.b16 %v873, %v872
      %v896 = vpack.c.b16 %v875, %v874
      %v897 = vpack.c.b16 %v877, %v876
      %v898 = vpack.c.b16 %v879, %v878
      %v899 = vpack.c.b16 %v881, %v880
      %v900 = vpack.c.b16 %v883, %v882
      %v901 = vpack.c.b16 %v885, %v884
      %918 = vmatprep.subr.bf16.mxu0 0
      %919 = vmatpush1.bf16.msra.mxu0 %v893
      %920 = vmatprep.subr.bf16.mxu0 0
      %921 = vmatpush1.bf16.msra.mxu0 %v892
      %922 = vmatprep.subr.bf16.mxu0 0
      %923 = vmatpush1.bf16.msra.mxu0 %v891
      %924 = vmatprep.subr.bf16.mxu0 0
      %925 = vmatpush1.bf16.msra.mxu0 %v890
      %926 = vmatprep.subr.bf16.mxu0 0
      %927 = vmatpush1.bf16.msra.mxu0 %v889
      %928 = vmatprep.subr.bf16.mxu0 0
      %929 = vmatpush1.bf16.msra.mxu0 %v888
      %930 = vmatprep.subr.bf16.mxu0 0
      %931 = vmatpush1.bf16.msra.mxu0 %v887
      %932 = vmatprep.subr.bf16.mxu0 0
      %933 = vmatpush1.bf16.msra.mxu0 %v886
      %934 = vmatprep.subr.bf16.mxu0 0
      %935 = vmatpush2.bf16.msra.mxu0 %v901
      %936 = vmatprep.subr.bf16.mxu0 0
      %937 = vmatpush2.bf16.msra.mxu0 %v900
      %938 = vmatprep.subr.bf16.mxu0 0
      %939 = vmatpush2.bf16.msra.mxu0 %v899
      %940 = vmatprep.subr.bf16.mxu0 0
      %941 = vmatpush2.bf16.msra.mxu0 %v898
      %942 = vmatprep.subr.bf16.mxu0 0
      %943 = vmatpush2.bf16.msra.mxu0 %v897
      %944 = vmatprep.subr.bf16.mxu0 0
      %945 = vmatpush2.bf16.msra.mxu0 %v896
      %946 = vmatprep.subr.bf16.mxu0 0
      %947 = vmatpush2.bf16.msra.mxu0 %v895
      %948 = vmatprep.subr.bf16.mxu0 0
      %949 = vmatpush2.bf16.msra.mxu0 %v894
      %950 = vmatprep.mubr.bf16.mxu0 %v815
      %951 = vmatmul.mubr.bf16.gmra.mxu0 %v814
      %v952 = vpop.f32.mrf.mxu0
      %v953 = vadd.f32 %v807, %v952
      %v954 = vpop.f32.mrf.mxu0
      %v955 = vpop.f32.mrf.mxu0
      %v956 = vadd.f32 %v807, %v955
      %v957 = vpop.f32.mrf.mxu0
      %958 = vmatprep.mubr.bf16.mxu0 %v817
      %959 = vmatmul.mubr.bf16.gmra.mxu0 %v816
      %v960 = vpop.f32.mrf.mxu0
      %v961 = vadd.f32 %v807, %v960
      %v962 = vpop.f32.mrf.mxu0
      %v963 = vpop.f32.mrf.mxu0
      %v964 = vadd.f32 %v807, %v963
      %v965 = vpop.f32.mrf.mxu0
      %966 = vmatprep.mubr.bf16.mxu0 %v819
      %967 = vmatmul.mubr.bf16.gmra.mxu0 %v818
      %v968 = vpop.f32.mrf.mxu0
      %v969 = vadd.f32 %v807, %v968
      %v970 = vpop.f32.mrf.mxu0
      %v971 = vpop.f32.mrf.mxu0
      %v972 = vadd.f32 %v807, %v971
      %v973 = vpop.f32.mrf.mxu0
      %974 = vmatprep.mubr.bf16.mxu0 %v821
      %975 = vmatmul.mubr.bf16.gmra.mxu0 %v820
      %v976 = vpop.f32.mrf.mxu0
      %v977 = vadd.f32 %v807, %v976
      %v978 = vpop.f32.mrf.mxu0
      %v979 = vpop.f32.mrf.mxu0
      %v980 = vadd.f32 %v807, %v979
      %v981 = vpop.f32.mrf.mxu0
      %982 = vdwg.mxu0
      %v983 = vmax.f32 %v953, 0.0
      %v984 = vmax.f32 %v956, 0.0
      %v985 = vmax.f32 %v961, 0.0
      %v986 = vmax.f32 %v964, 0.0
      %v987 = vmax.f32 %v969, 0.0
      %v988 = vmax.f32 %v972, 0.0
      %v989 = vmax.f32 %v977, 0.0
      %v990 = vmax.f32 %v980, 0.0
      %v991 = vpack.c.bf16 %v984, %v983
      %v992 = vpack.c.bf16 %v986, %v985
      %v993 = vpack.c.bf16 %v988, %v987
      %v994 = vpack.c.bf16 %v990, %v989
      %v1027 = vunpack.c.l.b16 %v360
      %v1028 = vunpack.c.l.b16 %v361
      %v1029 = vunpack.c.l.b16 %v362
      %v1030 = vunpack.c.l.b16 %v363
      %v1031 = vunpack.c.l.b16 %v364
      %v1032 = vunpack.c.l.b16 %v365
      %v1033 = vunpack.c.l.b16 %v366
      %v1034 = vunpack.c.l.b16 %v367
      %v1035 = vunpack.c.l.b16 %v368
      %v1036 = vunpack.c.l.b16 %v369
      %v1037 = vunpack.c.l.b16 %v370
      %v1038 = vunpack.c.l.b16 %v371
      %v1039 = vunpack.c.l.b16 %v372
      %v1040 = vunpack.c.l.b16 %v373
      %v1041 = vunpack.c.l.b16 %v374
      %v1042 = vunpack.c.l.b16 %v375
      %v1043 = vunpack.c.l.b16 %v376
      %v1044 = vunpack.c.l.b16 %v377
      %v1045 = vunpack.c.l.b16 %v378
      %v1046 = vunpack.c.l.b16 %v379
      %v1047 = vunpack.c.l.b16 %v380
      %v1048 = vunpack.c.l.b16 %v381
      %v1049 = vunpack.c.l.b16 %v382
      %v1050 = vunpack.c.l.b16 %v383
      %v1051 = vunpack.c.l.b16 %v384
      %v1052 = vunpack.c.l.b16 %v385
      %v1053 = vunpack.c.l.b16 %v386
      %v1054 = vunpack.c.l.b16 %v387
      %v1055 = vunpack.c.l.b16 %v388
      %v1056 = vunpack.c.l.b16 %v389
      %v1057 = vunpack.c.l.b16 %v390
      %v1058 = vunpack.c.l.b16 %v391
      %v1059 = vpack.c.b16 %v1028, %v1027
      %v1060 = vpack.c.b16 %v1030, %v1029
      %v1061 = vpack.c.b16 %v1032, %v1031
      %v1062 = vpack.c.b16 %v1034, %v1033
      %v1063 = vpack.c.b16 %v1036, %v1035
      %v1064 = vpack.c.b16 %v1038, %v1037
      %v1065 = vpack.c.b16 %v1040, %v1039
      %v1066 = vpack.c.b16 %v1042, %v1041
      %v1067 = vpack.c.b16 %v1044, %v1043
      %v1068 = vpack.c.b16 %v1046, %v1045
      %v1069 = vpack.c.b16 %v1048, %v1047
      %v1070 = vpack.c.b16 %v1050, %v1049
      %v1071 = vpack.c.b16 %v1052, %v1051
      %v1072 = vpack.c.b16 %v1054, %v1053
      %v1073 = vpack.c.b16 %v1056, %v1055
      %v1074 = vpack.c.b16 %v1058, %v1057
      %vm1075 = vcmask 523264
      %v1077 = vsel %vm1075, %v1059, 0
      %v1080 = vsel %vm1075, %v1060, 0
      %v1083 = vsel %vm1075, %v1061, 0
      %v1086 = vsel %vm1075, %v1062, 0
      %v1089 = vsel %vm1075, %v1063, 0
      %v1092 = vsel %vm1075, %v1064, 0
      %v1095 = vsel %vm1075, %v1065, 0
      %v1098 = vsel %vm1075, %v1066, 0
      %v1101 = vsel %vm1075, %v1067, 0
      %v1104 = vsel %vm1075, %v1068, 0
      %v1107 = vsel %vm1075, %v1069, 0
      %v1110 = vsel %vm1075, %v1070, 0
      %v1113 = vsel %vm1075, %v1071, 0
      %v1116 = vsel %vm1075, %v1072, 0
      %v1119 = vsel %vm1075, %v1073, 0
      %v1122 = vsel %vm1075, %v1074, 0
      %1124 = vmatprep.subr.bf16.mxu0 0
      %1125 = vmatpush1.bf16.msra.mxu0 0
      %1126 = vmatprep.subr.bf16.mxu0 0
      %1127 = vmatpush1.bf16.msra.mxu0 0
      %1128 = vmatprep.subr.bf16.mxu0 0
      %1129 = vmatpush1.bf16.msra.mxu0 0
      %1130 = vmatprep.subr.bf16.mxu0 0
      %1131 = vmatpush1.bf16.msra.mxu0 0
      %1132 = vmatprep.subr.bf16.mxu0 0
      %1133 = vmatpush1.bf16.msra.mxu0 %v994
      %1134 = vmatprep.subr.bf16.mxu0 0
      %1135 = vmatpush1.bf16.msra.mxu0 %v993
      %1136 = vmatprep.subr.bf16.mxu0 0
      %1137 = vmatpush1.bf16.msra.mxu0 %v992
      %1138 = vmatprep.subr.bf16.mxu0 0
      %1139 = vmatpush1.bf16.msra.mxu0 %v991
      %1140 = vmatprep.subr.bf16.mxu0 0
      %1141 = vmatpush2.bf16.msra.mxu0 0
      %1142 = vmatprep.subr.bf16.mxu0 0
      %1143 = vmatpush2.bf16.msra.mxu0 0
      %1144 = vmatprep.subr.bf16.mxu0 0
      %1145 = vmatpush2.bf16.msra.mxu0 0
      %1146 = vmatprep.subr.bf16.mxu0 0
      %1147 = vmatpush2.bf16.msra.mxu0 0
      %1148 = vmatprep.subr.bf16.mxu0 0
      %1149 = vmatpush2.bf16.msra.mxu0 0
      %1150 = vmatprep.subr.bf16.mxu0 0
      %1151 = vmatpush2.bf16.msra.mxu0 0
      %1152 = vmatprep.subr.bf16.mxu0 0
      %1153 = vmatpush2.bf16.msra.mxu0 0
      %1154 = vmatprep.subr.bf16.mxu0 0
      %1155 = vmatpush2.bf16.msra.mxu0 0
      %1156 = vmatprep.mubr.bf16.mxu0 0
      %1157 = vmatmul.mubr.bf16.gmra.mxu0 %v1077
      %v1158 = vpop.f32.mrf.mxu0
      %v1159 = vadd.f32 0.0, %v1158
      %v1160 = vpop.f32.mrf.mxu0
      %v1161 = vpop.f32.mrf.mxu0
      %v1162 = vadd.f32 0.0, %v1161
      %v1163 = vpop.f32.mrf.mxu0
      %1164 = vmatprep.mubr.bf16.mxu0 0
      %1165 = vmatmul.mubr.bf16.gmra.mxu0 %v1080
      %v1166 = vpop.f32.mrf.mxu0
      %v1167 = vadd.f32 0.0, %v1166
      %v1168 = vpop.f32.mrf.mxu0
      %v1169 = vpop.f32.mrf.mxu0
      %v1170 = vadd.f32 0.0, %v1169
      %v1171 = vpop.f32.mrf.mxu0
      %1172 = vmatprep.mubr.bf16.mxu0 0
      %1173 = vmatmul.mubr.bf16.gmra.mxu0 %v1083
      %v1174 = vpop.f32.mrf.mxu0
      %v1175 = vadd.f32 0.0, %v1174
      %v1176 = vpop.f32.mrf.mxu0
      %v1177 = vpop.f32.mrf.mxu0
      %v1178 = vadd.f32 0.0, %v1177
      %v1179 = vpop.f32.mrf.mxu0
      %1180 = vmatprep.mubr.bf16.mxu0 0
      %1181 = vmatmul.mubr.bf16.gmra.mxu0 %v1086
      %v1182 = vpop.f32.mrf.mxu0
      %v1183 = vadd.f32 0.0, %v1182
      %v1184 = vpop.f32.mrf.mxu0
      %v1185 = vpop.f32.mrf.mxu0
      %v1186 = vadd.f32 0.0, %v1185
      %v1187 = vpop.f32.mrf.mxu0
      %1188 = vmatprep.mubr.bf16.mxu0 0
      %1189 = vmatmul.mubr.bf16.gmra.mxu0 %v1089
      %v1190 = vpop.f32.mrf.mxu0
      %v1191 = vadd.f32 0.0, %v1190
      %v1192 = vpop.f32.mrf.mxu0
      %v1193 = vpop.f32.mrf.mxu0
      %v1194 = vadd.f32 0.0, %v1193
      %v1195 = vpop.f32.mrf.mxu0
      %1196 = vmatprep.mubr.bf16.mxu0 0
      %1197 = vmatmul.mubr.bf16.gmra.mxu0 %v1092
      %v1198 = vpop.f32.mrf.mxu0
      %v1199 = vadd.f32 0.0, %v1198
      %v1200 = vpop.f32.mrf.mxu0
      %v1201 = vpop.f32.mrf.mxu0
      %v1202 = vadd.f32 0.0, %v1201
      %v1203 = vpop.f32.mrf.mxu0
      %1204 = vmatprep.mubr.bf16.mxu0 0
      %1205 = vmatmul.mubr.bf16.gmra.mxu0 %v1095
      %v1206 = vpop.f32.mrf.mxu0
      %v1207 = vadd.f32 0.0, %v1206
      %v1208 = vpop.f32.mrf.mxu0
      %v1209 = vpop.f32.mrf.mxu0
      %v1210 = vadd.f32 0.0, %v1209
      %v1211 = vpop.f32.mrf.mxu0
      %1212 = vmatprep.mubr.bf16.mxu0 0
      %1213 = vmatmul.mubr.bf16.gmra.mxu0 %v1098
      %v1214 = vpop.f32.mrf.mxu0
      %v1215 = vadd.f32 0.0, %v1214
      %v1216 = vpop.f32.mrf.mxu0
      %v1217 = vpop.f32.mrf.mxu0
      %v1218 = vadd.f32 0.0, %v1217
      %v1219 = vpop.f32.mrf.mxu0
      %1220 = vmatprep.mubr.bf16.mxu0 0
      %1221 = vmatmul.mubr.bf16.gmra.mxu0 %v1101
      %v1222 = vpop.f32.mrf.mxu0
      %v1223 = vadd.f32 0.0, %v1222
      %v1224 = vpop.f32.mrf.mxu0
      %v1225 = vpop.f32.mrf.mxu0
      %v1226 = vadd.f32 0.0, %v1225
      %v1227 = vpop.f32.mrf.mxu0
      %1228 = vmatprep.mubr.bf16.mxu0 0
      %1229 = vmatmul.mubr.bf16.gmra.mxu0 %v1104
      %v1230 = vpop.f32.mrf.mxu0
      %v1231 = vadd.f32 0.0, %v1230
      %v1232 = vpop.f32.mrf.mxu0
      %v1233 = vpop.f32.mrf.mxu0
      %v1234 = vadd.f32 0.0, %v1233
      %v1235 = vpop.f32.mrf.mxu0
      %1236 = vmatprep.mubr.bf16.mxu0 0
      %1237 = vmatmul.mubr.bf16.gmra.mxu0 %v1107
      %v1238 = vpop.f32.mrf.mxu0
      %v1239 = vadd.f32 0.0, %v1238
      %v1240 = vpop.f32.mrf.mxu0
      %v1241 = vpop.f32.mrf.mxu0
      %v1242 = vadd.f32 0.0, %v1241
      %v1243 = vpop.f32.mrf.mxu0
      %1244 = vmatprep.mubr.bf16.mxu0 0
      %1245 = vmatmul.mubr.bf16.gmra.mxu0 %v1110
      %v1246 = vpop.f32.mrf.mxu0
      %v1247 = vadd.f32 0.0, %v1246
      %v1248 = vpop.f32.mrf.mxu0
      %v1249 = vpop.f32.mrf.mxu0
      %v1250 = vadd.f32 0.0, %v1249
      %v1251 = vpop.f32.mrf.mxu0
      %1252 = vmatprep.mubr.bf16.mxu0 0
      %1253 = vmatmul.mubr.bf16.gmra.mxu0 %v1113
      %v1254 = vpop.f32.mrf.mxu0
      %v1255 = vadd.f32 0.0, %v1254
      %v1256 = vpop.f32.mrf.mxu0
      %v1257 = vpop.f32.mrf.mxu0
      %v1258 = vadd.f32 0.0, %v1257
      %v1259 = vpop.f32.mrf.mxu0
      %1260 = vmatprep.mubr.bf16.mxu0 0
      %1261 = vmatmul.mubr.bf16.gmra.mxu0 %v1116
      %v1262 = vpop.f32.mrf.mxu0
      %v1263 = vadd.f32 0.0, %v1262
      %v1264 = vpop.f32.mrf.mxu0
      %v1265 = vpop.f32.mrf.mxu0
      %v1266 = vadd.f32 0.0, %v1265
      %v1267 = vpop.f32.mrf.mxu0
      %1268 = vmatprep.mubr.bf16.mxu0 0
      %1269 = vmatmul.mubr.bf16.gmra.mxu0 %v1119
      %v1270 = vpop.f32.mrf.mxu0
      %v1271 = vadd.f32 0.0, %v1270
      %v1272 = vpop.f32.mrf.mxu0
      %v1273 = vpop.f32.mrf.mxu0
      %v1274 = vadd.f32 0.0, %v1273
      %v1275 = vpop.f32.mrf.mxu0
      %1276 = vmatprep.mubr.bf16.mxu0 0
      %1277 = vmatmul.mubr.bf16.gmra.mxu0 %v1122
      %v1278 = vpop.f32.mrf.mxu0
      %v1279 = vadd.f32 0.0, %v1278
      %v1280 = vpop.f32.mrf.mxu0
      %v1281 = vpop.f32.mrf.mxu0
      %v1282 = vadd.f32 0.0, %v1281
      %v1283 = vpop.f32.mrf.mxu0
      %1284 = vdwg.mxu0
      %v1285 = vpack.c.bf16 %v1162, %v1159
      %v1286 = vpack.c.bf16 %v1170, %v1167
      %v1287 = vpack.c.bf16 %v1178, %v1175
      %v1288 = vpack.c.bf16 %v1186, %v1183
      %v1289 = vpack.c.bf16 %v1194, %v1191
      %v1290 = vpack.c.bf16 %v1202, %v1199
      %v1291 = vpack.c.bf16 %v1210, %v1207
      %v1292 = vpack.c.bf16 %v1218, %v1215
      %v1293 = vpack.c.bf16 %v1226, %v1223
      %v1294 = vpack.c.bf16 %v1234, %v1231
      %v1295 = vpack.c.bf16 %v1242, %v1239
      %v1296 = vpack.c.bf16 %v1250, %v1247
      %v1297 = vpack.c.bf16 %v1258, %v1255
      %v1298 = vpack.c.bf16 %v1266, %v1263
      %v1299 = vpack.c.bf16 %v1274, %v1271
      %v1300 = vpack.c.bf16 %v1282, %v1279
      %v1557 = vunpack.c.l.b16 %v401
      %v1558 = vunpack.c.l.b16 %v402
      %v1559 = vunpack.c.l.b16 %v403
      %v1560 = vunpack.c.l.b16 %v404
      %v1561 = vunpack.c.l.b16 %v405
      %v1562 = vunpack.c.l.b16 %v406
      %v1563 = vunpack.c.l.b16 %v407
      %v1564 = vunpack.c.l.b16 %v408
      %v1565 = vunpack.c.l.b16 %v409
      %v1566 = vunpack.c.l.b16 %v410
      %v1567 = vunpack.c.l.b16 %v411
      %v1568 = vunpack.c.l.b16 %v412
      %v1569 = vunpack.c.l.b16 %v413
      %v1570 = vunpack.c.l.b16 %v414
      %v1571 = vunpack.c.l.b16 %v415
      %v1572 = vunpack.c.l.b16 %v416
      %v1573 = vunpack.c.l.b16 %v417
      %v1574 = vunpack.c.l.b16 %v418
      %v1575 = vunpack.c.l.b16 %v419
      %v1576 = vunpack.c.l.b16 %v420
      %v1577 = vunpack.c.l.b16 %v421
      %v1578 = vunpack.c.l.b16 %v422
      %v1579 = vunpack.c.l.b16 %v423
      %v1580 = vunpack.c.l.b16 %v424
      %v1581 = vunpack.c.l.b16 %v425
      %v1582 = vunpack.c.l.b16 %v426
      %v1583 = vunpack.c.l.b16 %v427
      %v1584 = vunpack.c.l.b16 %v428
      %v1585 = vunpack.c.l.b16 %v429
      %v1586 = vunpack.c.l.b16 %v430
      %v1587 = vunpack.c.l.b16 %v431
      %v1588 = vunpack.c.l.b16 %v432
      %v1589 = vunpack.c.l.b16 %v433
      %v1590 = vunpack.c.l.b16 %v434
      %v1591 = vunpack.c.l.b16 %v435
      %v1592 = vunpack.c.l.b16 %v436
      %v1593 = vunpack.c.l.b16 %v437
      %v1594 = vunpack.c.l.b16 %v438
      %v1595 = vunpack.c.l.b16 %v439
      %v1596 = vunpack.c.l.b16 %v440
      %v1597 = vunpack.c.l.b16 %v441
      %v1598 = vunpack.c.l.b16 %v442
      %v1599 = vunpack.c.l.b16 %v443
      %v1600 = vunpack.c.l.b16 %v444
      %v1601 = vunpack.c.l.b16 %v445
      %v1602 = vunpack.c.l.b16 %v446
      %v1603 = vunpack.c.l.b16 %v447
      %v1604 = vunpack.c.l.b16 %v448
      %v1605 = vunpack.c.l.b16 %v449
      %v1606 = vunpack.c.l.b16 %v450
      %v1607 = vunpack.c.l.b16 %v451
      %v1608 = vunpack.c.l.b16 %v452
      %v1609 = vunpack.c.l.b16 %v453
      %v1610 = vunpack.c.l.b16 %v454
      %v1611 = vunpack.c.l.b16 %v455
      %v1612 = vunpack.c.l.b16 %v456
      %v1613 = vunpack.c.l.b16 %v457
      %v1614 = vunpack.c.l.b16 %v458
      %v1615 = vunpack.c.l.b16 %v459
      %v1616 = vunpack.c.l.b16 %v460
      %v1617 = vunpack.c.l.b16 %v461
      %v1618 = vunpack.c.l.b16 %v462
      %v1619 = vunpack.c.l.b16 %v463
      %v1620 = vunpack.c.l.b16 %v464
      %v1621 = vunpack.c.l.b16 %v465
      %v1622 = vunpack.c.l.b16 %v466
      %v1623 = vunpack.c.l.b16 %v467
      %v1624 = vunpack.c.l.b16 %v468
      %v1625 = vunpack.c.l.b16 %v469
      %v1626 = vunpack.c.l.b16 %v470
      %v1627 = vunpack.c.l.b16 %v471
      %v1628 = vunpack.c.l.b16 %v472
      %v1629 = vunpack.c.l.b16 %v473
      %v1630 = vunpack.c.l.b16 %v474
      %v1631 = vunpack.c.l.b16 %v475
      %v1632 = vunpack.c.l.b16 %v476
      %v1633 = vunpack.c.l.b16 %v477
      %v1634 = vunpack.c.l.b16 %v478
      %v1635 = vunpack.c.l.b16 %v479
      %v1636 = vunpack.c.l.b16 %v480
      %v1637 = vunpack.c.l.b16 %v481
      %v1638 = vunpack.c.l.b16 %v482
      %v1639 = vunpack.c.l.b16 %v483
      %v1640 = vunpack.c.l.b16 %v484
      %v1641 = vunpack.c.l.b16 %v485
      %v1642 = vunpack.c.l.b16 %v486
      %v1643 = vunpack.c.l.b16 %v487
      %v1644 = vunpack.c.l.b16 %v488
      %v1645 = vunpack.c.l.b16 %v489
      %v1646 = vunpack.c.l.b16 %v490
      %v1647 = vunpack.c.l.b16 %v491
      %v1648 = vunpack.c.l.b16 %v492
      %v1649 = vunpack.c.l.b16 %v493
      %v1650 = vunpack.c.l.b16 %v494
      %v1651 = vunpack.c.l.b16 %v495
      %v1652 = vunpack.c.l.b16 %v496
      %v1653 = vunpack.c.l.b16 %v497
      %v1654 = vunpack.c.l.b16 %v498
      %v1655 = vunpack.c.l.b16 %v499
      %v1656 = vunpack.c.l.b16 %v500
      %v1657 = vunpack.c.l.b16 %v501
      %v1658 = vunpack.c.l.b16 %v502
      %v1659 = vunpack.c.l.b16 %v503
      %v1660 = vunpack.c.l.b16 %v504
      %v1661 = vunpack.c.l.b16 %v505
      %v1662 = vunpack.c.l.b16 %v506
      %v1663 = vunpack.c.l.b16 %v507
      %v1664 = vunpack.c.l.b16 %v508
      %v1665 = vunpack.c.l.b16 %v509
      %v1666 = vunpack.c.l.b16 %v510
      %v1667 = vunpack.c.l.b16 %v511
      %v1668 = vunpack.c.l.b16 %v512
      %v1669 = vunpack.c.l.b16 %v513
      %v1670 = vunpack.c.l.b16 %v514
      %v1671 = vunpack.c.l.b16 %v515
      %v1672 = vunpack.c.l.b16 %v516
      %v1673 = vunpack.c.l.b16 %v517
      %v1674 = vunpack.c.l.b16 %v518
      %v1675 = vunpack.c.l.b16 %v519
      %v1676 = vunpack.c.l.b16 %v520
      %v1677 = vunpack.c.l.b16 %v521
      %v1678 = vunpack.c.l.b16 %v522
      %v1679 = vunpack.c.l.b16 %v523
      %v1680 = vunpack.c.l.b16 %v524
      %v1681 = vunpack.c.l.b16 %v525
      %v1682 = vunpack.c.l.b16 %v526
      %v1683 = vunpack.c.l.b16 %v527
      %v1684 = vunpack.c.l.b16 %v528
      %v1685 = vunpack.c.l.b16 %v529
      %v1686 = vunpack.c.l.b16 %v530
      %v1687 = vunpack.c.l.b16 %v531
      %v1688 = vunpack.c.l.b16 %v532
      %v1689 = vunpack.c.l.b16 %v533
      %v1690 = vunpack.c.l.b16 %v534
      %v1691 = vunpack.c.l.b16 %v535
      %v1692 = vunpack.c.l.b16 %v536
      %v1693 = vunpack.c.l.b16 %v537
      %v1694 = vunpack.c.l.b16 %v538
      %v1695 = vunpack.c.l.b16 %v539
      %v1696 = vunpack.c.l.b16 %v540
      %v1697 = vunpack.c.l.b16 %v541
      %v1698 = vunpack.c.l.b16 %v542
      %v1699 = vunpack.c.l.b16 %v543
      %v1700 = vunpack.c.l.b16 %v544
      %v1701 = vunpack.c.l.b16 %v545
      %v1702 = vunpack.c.l.b16 %v546
      %v1703 = vunpack.c.l.b16 %v547
      %v1704 = vunpack.c.l.b16 %v548
      %v1705 = vunpack.c.l.b16 %v549
      %v1706 = vunpack.c.l.b16 %v550
      %v1707 = vunpack.c.l.b16 %v551
      %v1708 = vunpack.c.l.b16 %v552
      %v1709 = vunpack.c.l.b16 %v553
      %v1710 = vunpack.c.l.b16 %v554
      %v1711 = vunpack.c.l.b16 %v555
      %v1712 = vunpack.c.l.b16 %v556
      %v1713 = vunpack.c.l.b16 %v557
      %v1714 = vunpack.c.l.b16 %v558
      %v1715 = vunpack.c.l.b16 %v559
      %v1716 = vunpack.c.l.b16 %v560
      %v1717 = vunpack.c.l.b16 %v561
      %v1718 = vunpack.c.l.b16 %v562
      %v1719 = vunpack.c.l.b16 %v563
      %v1720 = vunpack.c.l.b16 %v564
      %v1721 = vunpack.c.l.b16 %v565
      %v1722 = vunpack.c.l.b16 %v566
      %v1723 = vunpack.c.l.b16 %v567
      %v1724 = vunpack.c.l.b16 %v568
      %v1725 = vunpack.c.l.b16 %v569
      %v1726 = vunpack.c.l.b16 %v570
      %v1727 = vunpack.c.l.b16 %v571
      %v1728 = vunpack.c.l.b16 %v572
      %v1729 = vunpack.c.l.b16 %v573
      %v1730 = vunpack.c.l.b16 %v574
      %v1731 = vunpack.c.l.b16 %v575
      %v1732 = vunpack.c.l.b16 %v576
      %v1733 = vunpack.c.l.b16 %v577
      %v1734 = vunpack.c.l.b16 %v578
      %v1735 = vunpack.c.l.b16 %v579
      %v1736 = vunpack.c.l.b16 %v580
      %v1737 = vunpack.c.l.b16 %v581
      %v1738 = vunpack.c.l.b16 %v582
      %v1739 = vunpack.c.l.b16 %v583
      %v1740 = vunpack.c.l.b16 %v584
      %v1741 = vunpack.c.l.b16 %v585
      %v1742 = vunpack.c.l.b16 %v586
      %v1743 = vunpack.c.l.b16 %v587
      %v1744 = vunpack.c.l.b16 %v588
      %v1745 = vunpack.c.l.b16 %v589
      %v1746 = vunpack.c.l.b16 %v590
      %v1747 = vunpack.c.l.b16 %v591
      %v1748 = vunpack.c.l.b16 %v592
      %v1749 = vunpack.c.l.b16 %v593
      %v1750 = vunpack.c.l.b16 %v594
      %v1751 = vunpack.c.l.b16 %v595
      %v1752 = vunpack.c.l.b16 %v596
      %v1753 = vunpack.c.l.b16 %v597
      %v1754 = vunpack.c.l.b16 %v598
      %v1755 = vunpack.c.l.b16 %v599
      %v1756 = vunpack.c.l.b16 %v600
      %v1757 = vunpack.c.l.b16 %v601
      %v1758 = vunpack.c.l.b16 %v602
      %v1759 = vunpack.c.l.b16 %v603
      %v1760 = vunpack.c.l.b16 %v604
      %v1761 = vunpack.c.l.b16 %v605
      %v1762 = vunpack.c.l.b16 %v606
      %v1763 = vunpack.c.l.b16 %v607
      %v1764 = vunpack.c.l.b16 %v608
      %v1765 = vunpack.c.l.b16 %v609
      %v1766 = vunpack.c.l.b16 %v610
      %v1767 = vunpack.c.l.b16 %v611
      %v1768 = vunpack.c.l.b16 %v612
      %v1769 = vunpack.c.l.b16 %v613
      %v1770 = vunpack.c.l.b16 %v614
      %v1771 = vunpack.c.l.b16 %v615
      %v1772 = vunpack.c.l.b16 %v616
      %v1773 = vunpack.c.l.b16 %v617
      %v1774 = vunpack.c.l.b16 %v618
      %v1775 = vunpack.c.l.b16 %v619
      %v1776 = vunpack.c.l.b16 %v620
      %v1777 = vunpack.c.l.b16 %v621
      %v1778 = vunpack.c.l.b16 %v622
      %v1779 = vunpack.c.l.b16 %v623
      %v1780 = vunpack.c.l.b16 %v624
      %v1781 = vunpack.c.l.b16 %v625
      %v1782 = vunpack.c.l.b16 %v626
      %v1783 = vunpack.c.l.b16 %v627
      %v1784 = vunpack.c.l.b16 %v628
      %v1785 = vunpack.c.l.b16 %v629
      %v1786 = vunpack.c.l.b16 %v630
      %v1787 = vunpack.c.l.b16 %v631
      %v1788 = vunpack.c.l.b16 %v632
      %v1789 = vunpack.c.l.b16 %v633
      %v1790 = vunpack.c.l.b16 %v634
      %v1791 = vunpack.c.l.b16 %v635
      %v1792 = vunpack.c.l.b16 %v636
      %v1793 = vunpack.c.l.b16 %v637
      %v1794 = vunpack.c.l.b16 %v638
      %v1795 = vunpack.c.l.b16 %v639
      %v1796 = vunpack.c.l.b16 %v640
      %v1797 = vunpack.c.l.b16 %v641
      %v1798 = vunpack.c.l.b16 %v642
      %v1799 = vunpack.c.l.b16 %v643
      %v1800 = vunpack.c.l.b16 %v644
      %v1801 = vunpack.c.l.b16 %v645
      %v1802 = vunpack.c.l.b16 %v646
      %v1803 = vunpack.c.l.b16 %v647
      %v1804 = vunpack.c.l.b16 %v648
      %v1805 = vunpack.c.l.b16 %v649
      %v1806 = vunpack.c.l.b16 %v650
      %v1807 = vunpack.c.l.b16 %v651
      %v1808 = vunpack.c.l.b16 %v652
      %v1809 = vunpack.c.l.b16 %v653
      %v1810 = vunpack.c.l.b16 %v654
      %v1811 = vunpack.c.l.b16 %v655
      %v1812 = vunpack.c.l.b16 %v656
      %v1813 = vpack.c.b16 %v1558, %v1557
      %v1814 = vpack.c.b16 %v1560, %v1559
      %v1815 = vpack.c.b16 %v1562, %v1561
      %v1816 = vpack.c.b16 %v1564, %v1563
      %v1817 = vpack.c.b16 %v1566, %v1565
      %v1818 = vpack.c.b16 %v1568, %v1567
      %v1819 = vpack.c.b16 %v1570, %v1569
      %v1820 = vpack.c.b16 %v1572, %v1571
      %v1821 = vpack.c.b16 %v1574, %v1573
      %v1822 = vpack.c.b16 %v1576, %v1575
      %v1823 = vpack.c.b16 %v1578, %v1577
      %v1824 = vpack.c.b16 %v1580, %v1579
      %v1825 = vpack.c.b16 %v1582, %v1581
      %v1826 = vpack.c.b16 %v1584, %v1583
      %v1827 = vpack.c.b16 %v1586, %v1585
      %v1828 = vpack.c.b16 %v1588, %v1587
      %v1829 = vpack.c.b16 %v1590, %v1589
      %v1830 = vpack.c.b16 %v1592, %v1591
      %v1831 = vpack.c.b16 %v1594, %v1593
      %v1832 = vpack.c.b16 %v1596, %v1595
      %v1833 = vpack.c.b16 %v1598, %v1597
      %v1834 = vpack.c.b16 %v1600, %v1599
      %v1835 = vpack.c.b16 %v1602, %v1601
      %v1836 = vpack.c.b16 %v1604, %v1603
      %v1837 = vpack.c.b16 %v1606, %v1605
      %v1838 = vpack.c.b16 %v1608, %v1607
      %v1839 = vpack.c.b16 %v1610, %v1609
      %v1840 = vpack.c.b16 %v1612, %v1611
      %v1841 = vpack.c.b16 %v1614, %v1613
      %v1842 = vpack.c.b16 %v1616, %v1615
      %v1843 = vpack.c.b16 %v1618, %v1617
      %v1844 = vpack.c.b16 %v1620, %v1619
      %v1845 = vpack.c.b16 %v1622, %v1621
      %v1846 = vpack.c.b16 %v1624, %v1623
      %v1847 = vpack.c.b16 %v1626, %v1625
      %v1848 = vpack.c.b16 %v1628, %v1627
      %v1849 = vpack.c.b16 %v1630, %v1629
      %v1850 = vpack.c.b16 %v1632, %v1631
      %v1851 = vpack.c.b16 %v1634, %v1633
      %v1852 = vpack.c.b16 %v1636, %v1635
      %v1853 = vpack.c.b16 %v1638, %v1637
      %v1854 = vpack.c.b16 %v1640, %v1639
      %v1855 = vpack.c.b16 %v1642, %v1641
      %v1856 = vpack.c.b16 %v1644, %v1643
      %v1857 = vpack.c.b16 %v1646, %v1645
      %v1858 = vpack.c.b16 %v1648, %v1647
      %v1859 = vpack.c.b16 %v1650, %v1649
      %v1860 = vpack.c.b16 %v1652, %v1651
      %v1861 = vpack.c.b16 %v1654, %v1653
      %v1862 = vpack.c.b16 %v1656, %v1655
      %v1863 = vpack.c.b16 %v1658, %v1657
      %v1864 = vpack.c.b16 %v1660, %v1659
      %v1865 = vpack.c.b16 %v1662, %v1661
      %v1866 = vpack.c.b16 %v1664, %v1663
      %v1867 = vpack.c.b16 %v1666, %v1665
      %v1868 = vpack.c.b16 %v1668, %v1667
      %v1869 = vpack.c.b16 %v1670, %v1669
      %v1870 = vpack.c.b16 %v1672, %v1671
      %v1871 = vpack.c.b16 %v1674, %v1673
      %v1872 = vpack.c.b16 %v1676, %v1675
      %v1873 = vpack.c.b16 %v1678, %v1677
      %v1874 = vpack.c.b16 %v1680, %v1679
      %v1875 = vpack.c.b16 %v1682, %v1681
      %v1876 = vpack.c.b16 %v1684, %v1683
      %v1877 = vpack.c.b16 %v1686, %v1685
      %v1878 = vpack.c.b16 %v1688, %v1687
      %v1879 = vpack.c.b16 %v1690, %v1689
      %v1880 = vpack.c.b16 %v1692, %v1691
      %v1881 = vpack.c.b16 %v1694, %v1693
      %v1882 = vpack.c.b16 %v1696, %v1695
      %v1883 = vpack.c.b16 %v1698, %v1697
      %v1884 = vpack.c.b16 %v1700, %v1699
      %v1885 = vpack.c.b16 %v1702, %v1701
      %v1886 = vpack.c.b16 %v1704, %v1703
      %v1887 = vpack.c.b16 %v1706, %v1705
      %v1888 = vpack.c.b16 %v1708, %v1707
      %v1889 = vpack.c.b16 %v1710, %v1709
      %v1890 = vpack.c.b16 %v1712, %v1711
      %v1891 = vpack.c.b16 %v1714, %v1713
      %v1892 = vpack.c.b16 %v1716, %v1715
      %v1893 = vpack.c.b16 %v1718, %v1717
      %v1894 = vpack.c.b16 %v1720, %v1719
      %v1895 = vpack.c.b16 %v1722, %v1721
      %v1896 = vpack.c.b16 %v1724, %v1723
      %v1897 = vpack.c.b16 %v1726, %v1725
      %v1898 = vpack.c.b16 %v1728, %v1727
      %v1899 = vpack.c.b16 %v1730, %v1729
      %v1900 = vpack.c.b16 %v1732, %v1731
      %v1901 = vpack.c.b16 %v1734, %v1733
      %v1902 = vpack.c.b16 %v1736, %v1735
      %v1903 = vpack.c.b16 %v1738, %v1737
      %v1904 = vpack.c.b16 %v1740, %v1739
      %v1905 = vpack.c.b16 %v1742, %v1741
      %v1906 = vpack.c.b16 %v1744, %v1743
      %v1907 = vpack.c.b16 %v1746, %v1745
      %v1908 = vpack.c.b16 %v1748, %v1747
      %v1909 = vpack.c.b16 %v1750, %v1749
      %v1910 = vpack.c.b16 %v1752, %v1751
      %v1911 = vpack.c.b16 %v1754, %v1753
      %v1912 = vpack.c.b16 %v1756, %v1755
      %v1913 = vpack.c.b16 %v1758, %v1757
      %v1914 = vpack.c.b16 %v1760, %v1759
      %v1915 = vpack.c.b16 %v1762, %v1761
      %v1916 = vpack.c.b16 %v1764, %v1763
      %v1917 = vpack.c.b16 %v1766, %v1765
      %v1918 = vpack.c.b16 %v1768, %v1767
      %v1919 = vpack.c.b16 %v1770, %v1769
      %v1920 = vpack.c.b16 %v1772, %v1771
      %v1921 = vpack.c.b16 %v1774, %v1773
      %v1922 = vpack.c.b16 %v1776, %v1775
      %v1923 = vpack.c.b16 %v1778, %v1777
      %v1924 = vpack.c.b16 %v1780, %v1779
      %v1925 = vpack.c.b16 %v1782, %v1781
      %v1926 = vpack.c.b16 %v1784, %v1783
      %v1927 = vpack.c.b16 %v1786, %v1785
      %v1928 = vpack.c.b16 %v1788, %v1787
      %v1929 = vpack.c.b16 %v1790, %v1789
      %v1930 = vpack.c.b16 %v1792, %v1791
      %v1931 = vpack.c.b16 %v1794, %v1793
      %v1932 = vpack.c.b16 %v1796, %v1795
      %v1933 = vpack.c.b16 %v1798, %v1797
      %v1934 = vpack.c.b16 %v1800, %v1799
      %v1935 = vpack.c.b16 %v1802, %v1801
      %v1936 = vpack.c.b16 %v1804, %v1803
      %v1937 = vpack.c.b16 %v1806, %v1805
      %v1938 = vpack.c.b16 %v1808, %v1807
      %v1939 = vpack.c.b16 %v1810, %v1809
      %v1940 = vpack.c.b16 %v1812, %v1811
      %2069 = vmatprep.subr.bf16.mxu0 0
      %2070 = vmatpush1.bf16.msra.mxu0 %v1820
      %2071 = vmatprep.subr.bf16.mxu0 0
      %2072 = vmatpush1.bf16.msra.mxu0 %v1819
      %2073 = vmatprep.subr.bf16.mxu0 0
      %2074 = vmatpush1.bf16.msra.mxu0 %v1818
      %2075 = vmatprep.subr.bf16.mxu0 0
      %2076 = vmatpush1.bf16.msra.mxu0 %v1817
      %2077 = vmatprep.subr.bf16.mxu0 0
      %2078 = vmatpush1.bf16.msra.mxu0 %v1816
      %2079 = vmatprep.subr.bf16.mxu0 0
      %2080 = vmatpush1.bf16.msra.mxu0 %v1815
      %2081 = vmatprep.subr.bf16.mxu0 0
      %2082 = vmatpush1.bf16.msra.mxu0 %v1814
      %2083 = vmatprep.subr.bf16.mxu0 0
      %2084 = vmatpush1.bf16.msra.mxu0 %v1813
      %2085 = vmatprep.subr.bf16.mxu0 0
      %2086 = vmatpush2.bf16.msra.mxu0 %v1828
      %2087 = vmatprep.subr.bf16.mxu0 0
      %2088 = vmatpush2.bf16.msra.mxu0 %v1827
      %2089 = vmatprep.subr.bf16.mxu0 0
      %2090 = vmatpush2.bf16.msra.mxu0 %v1826
      %2091 = vmatprep.subr.bf16.mxu0 0
      %2092 = vmatpush2.bf16.msra.mxu0 %v1825
      %2093 = vmatprep.subr.bf16.mxu0 0
      %2094 = vmatpush2.bf16.msra.mxu0 %v1824
      %2095 = vmatprep.subr.bf16.mxu0 0
      %2096 = vmatpush2.bf16.msra.mxu0 %v1823
      %2097 = vmatprep.subr.bf16.mxu0 0
      %2098 = vmatpush2.bf16.msra.mxu0 %v1822
      %2099 = vmatprep.subr.bf16.mxu0 0
      %2100 = vmatpush2.bf16.msra.mxu0 %v1821
      %2101 = vmatprep.mubr.bf16.mxu0 %v1286
      %2102 = vmatmul.mubr.bf16.gmra.mxu0 %v1285
      %v2103 = vpop.f32.mrf.mxu0
      %v2104 = vadd.f32 %v808, %v2103
      %v2105 = vpop.f32.mrf.mxu0
      %v2106 = vpop.f32.mrf.mxu0
      %v2107 = vadd.f32 %v808, %v2106
      %v2108 = vpop.f32.mrf.mxu0
      %2109 = vdwg.mxu0
      %2110 = vmatprep.subr.bf16.mxu0 0
      %2111 = vmatpush1.bf16.msra.mxu0 %v1836
      %2112 = vmatprep.subr.bf16.mxu0 0
      %2113 = vmatpush1.bf16.msra.mxu0 %v1835
      %2114 = vmatprep.subr.bf16.mxu0 0
      %2115 = vmatpush1.bf16.msra.mxu0 %v1834
      %2116 = vmatprep.subr.bf16.mxu0 0
      %2117 = vmatpush1.bf16.msra.mxu0 %v1833
      %2118 = vmatprep.subr.bf16.mxu0 0
      %2119 = vmatpush1.bf16.msra.mxu0 %v1832
      %2120 = vmatprep.subr.bf16.mxu0 0
      %2121 = vmatpush1.bf16.msra.mxu0 %v1831
      %2122 = vmatprep.subr.bf16.mxu0 0
      %2123 = vmatpush1.bf16.msra.mxu0 %v1830
      %2124 = vmatprep.subr.bf16.mxu0 0
      %2125 = vmatpush1.bf16.msra.mxu0 %v1829
      %2126 = vmatprep.subr.bf16.mxu0 0
      %2127 = vmatpush2.bf16.msra.mxu0 %v1844
      %2128 = vmatprep.subr.bf16.mxu0 0
      %2129 = vmatpush2.bf16.msra.mxu0 %v1843
      %2130 = vmatprep.subr.bf16.mxu0 0
      %2131 = vmatpush2.bf16.msra.mxu0 %v1842
      %2132 = vmatprep.subr.bf16.mxu0 0
      %2133 = vmatpush2.bf16.msra.mxu0 %v1841
      %2134 = vmatprep.subr.bf16.mxu0 0
      %2135 = vmatpush2.bf16.msra.mxu0 %v1840
      %2136 = vmatprep.subr.bf16.mxu0 0
      %2137 = vmatpush2.bf16.msra.mxu0 %v1839
      %2138 = vmatprep.subr.bf16.mxu0 0
      %2139 = vmatpush2.bf16.msra.mxu0 %v1838
      %2140 = vmatprep.subr.bf16.mxu0 0
      %2141 = vmatpush2.bf16.msra.mxu0 %v1837
      %2142 = vmatprep.mubr.bf16.mxu0 %v1288
      %2143 = vmatmul.mubr.bf16.gmra.mxu0 %v1287
      %v2144 = vpop.f32.mrf.mxu0
      %v2145 = vadd.f32 %v2104, %v2144
      %v2146 = vpop.f32.mrf.mxu0
      %v2147 = vpop.f32.mrf.mxu0
      %v2148 = vadd.f32 %v2107, %v2147
      %v2149 = vpop.f32.mrf.mxu0
      %2150 = vdwg.mxu0
      %2151 = vmatprep.subr.bf16.mxu0 0
      %2152 = vmatpush1.bf16.msra.mxu0 %v1852
      %2153 = vmatprep.subr.bf16.mxu0 0
      %2154 = vmatpush1.bf16.msra.mxu0 %v1851
      %2155 = vmatprep.subr.bf16.mxu0 0
      %2156 = vmatpush1.bf16.msra.mxu0 %v1850
      %2157 = vmatprep.subr.bf16.mxu0 0
      %2158 = vmatpush1.bf16.msra.mxu0 %v1849
      %2159 = vmatprep.subr.bf16.mxu0 0
      %2160 = vmatpush1.bf16.msra.mxu0 %v1848
      %2161 = vmatprep.subr.bf16.mxu0 0
      %2162 = vmatpush1.bf16.msra.mxu0 %v1847
      %2163 = vmatprep.subr.bf16.mxu0 0
      %2164 = vmatpush1.bf16.msra.mxu0 %v1846
      %2165 = vmatprep.subr.bf16.mxu0 0
      %2166 = vmatpush1.bf16.msra.mxu0 %v1845
      %2167 = vmatprep.subr.bf16.mxu0 0
      %2168 = vmatpush2.bf16.msra.mxu0 %v1860
      %2169 = vmatprep.subr.bf16.mxu0 0
      %2170 = vmatpush2.bf16.msra.mxu0 %v1859
      %2171 = vmatprep.subr.bf16.mxu0 0
      %2172 = vmatpush2.bf16.msra.mxu0 %v1858
      %2173 = vmatprep.subr.bf16.mxu0 0
      %2174 = vmatpush2.bf16.msra.mxu0 %v1857
      %2175 = vmatprep.subr.bf16.mxu0 0
      %2176 = vmatpush2.bf16.msra.mxu0 %v1856
      %2177 = vmatprep.subr.bf16.mxu0 0
      %2178 = vmatpush2.bf16.msra.mxu0 %v1855
      %2179 = vmatprep.subr.bf16.mxu0 0
      %2180 = vmatpush2.bf16.msra.mxu0 %v1854
      %2181 = vmatprep.subr.bf16.mxu0 0
      %2182 = vmatpush2.bf16.msra.mxu0 %v1853
      %2183 = vmatprep.mubr.bf16.mxu0 %v1290
      %2184 = vmatmul.mubr.bf16.gmra.mxu0 %v1289
      %v2185 = vpop.f32.mrf.mxu0
      %v2186 = vadd.f32 %v2145, %v2185
      %v2187 = vpop.f32.mrf.mxu0
      %v2188 = vpop.f32.mrf.mxu0
      %v2189 = vadd.f32 %v2148, %v2188
      %v2190 = vpop.f32.mrf.mxu0
      %2191 = vdwg.mxu0
      %2192 = vmatprep.subr.bf16.mxu0 0
      %2193 = vmatpush1.bf16.msra.mxu0 %v1868
      %2194 = vmatprep.subr.bf16.mxu0 0
      %2195 = vmatpush1.bf16.msra.mxu0 %v1867
      %2196 = vmatprep.subr.bf16.mxu0 0
      %2197 = vmatpush1.bf16.msra.mxu0 %v1866
      %2198 = vmatprep.subr.bf16.mxu0 0
      %2199 = vmatpush1.bf16.msra.mxu0 %v1865
      %2200 = vmatprep.subr.bf16.mxu0 0
      %2201 = vmatpush1.bf16.msra.mxu0 %v1864
      %2202 = vmatprep.subr.bf16.mxu0 0
      %2203 = vmatpush1.bf16.msra.mxu0 %v1863
      %2204 = vmatprep.subr.bf16.mxu0 0
      %2205 = vmatpush1.bf16.msra.mxu0 %v1862
      %2206 = vmatprep.subr.bf16.mxu0 0
      %2207 = vmatpush1.bf16.msra.mxu0 %v1861
      %2208 = vmatprep.subr.bf16.mxu0 0
      %2209 = vmatpush2.bf16.msra.mxu0 %v1876
      %2210 = vmatprep.subr.bf16.mxu0 0
      %2211 = vmatpush2.bf16.msra.mxu0 %v1875
      %2212 = vmatprep.subr.bf16.mxu0 0
      %2213 = vmatpush2.bf16.msra.mxu0 %v1874
      %2214 = vmatprep.subr.bf16.mxu0 0
      %2215 = vmatpush2.bf16.msra.mxu0 %v1873
      %2216 = vmatprep.subr.bf16.mxu0 0
      %2217 = vmatpush2.bf16.msra.mxu0 %v1872
      %2218 = vmatprep.subr.bf16.mxu0 0
      %2219 = vmatpush2.bf16.msra.mxu0 %v1871
      %2220 = vmatprep.subr.bf16.mxu0 0
      %2221 = vmatpush2.bf16.msra.mxu0 %v1870
      %2222 = vmatprep.subr.bf16.mxu0 0
      %2223 = vmatpush2.bf16.msra.mxu0 %v1869
      %2224 = vmatprep.mubr.bf16.mxu0 %v1292
      %2225 = vmatmul.mubr.bf16.gmra.mxu0 %v1291
      %v2226 = vpop.f32.mrf.mxu0
      %v2227 = vadd.f32 %v2186, %v2226
      %v2228 = vpop.f32.mrf.mxu0
      %v2229 = vpop.f32.mrf.mxu0
      %v2230 = vadd.f32 %v2189, %v2229
      %v2231 = vpop.f32.mrf.mxu0
      %2232 = vdwg.mxu0
      %2233 = vmatprep.subr.bf16.mxu0 0
      %2234 = vmatpush1.bf16.msra.mxu0 %v1884
      %2235 = vmatprep.subr.bf16.mxu0 0
      %2236 = vmatpush1.bf16.msra.mxu0 %v1883
      %2237 = vmatprep.subr.bf16.mxu0 0
      %2238 = vmatpush1.bf16.msra.mxu0 %v1882
      %2239 = vmatprep.subr.bf16.mxu0 0
      %2240 = vmatpush1.bf16.msra.mxu0 %v1881
      %2241 = vmatprep.subr.bf16.mxu0 0
      %2242 = vmatpush1.bf16.msra.mxu0 %v1880
      %2243 = vmatprep.subr.bf16.mxu0 0
      %2244 = vmatpush1.bf16.msra.mxu0 %v1879
      %2245 = vmatprep.subr.bf16.mxu0 0
      %2246 = vmatpush1.bf16.msra.mxu0 %v1878
      %2247 = vmatprep.subr.bf16.mxu0 0
      %2248 = vmatpush1.bf16.msra.mxu0 %v1877
      %2249 = vmatprep.subr.bf16.mxu0 0
      %2250 = vmatpush2.bf16.msra.mxu0 %v1892
      %2251 = vmatprep.subr.bf16.mxu0 0
      %2252 = vmatpush2.bf16.msra.mxu0 %v1891
      %2253 = vmatprep.subr.bf16.mxu0 0
      %2254 = vmatpush2.bf16.msra.mxu0 %v1890
      %2255 = vmatprep.subr.bf16.mxu0 0
      %2256 = vmatpush2.bf16.msra.mxu0 %v1889
      %2257 = vmatprep.subr.bf16.mxu0 0
      %2258 = vmatpush2.bf16.msra.mxu0 %v1888
      %2259 = vmatprep.subr.bf16.mxu0 0
      %2260 = vmatpush2.bf16.msra.mxu0 %v1887
      %2261 = vmatprep.subr.bf16.mxu0 0
      %2262 = vmatpush2.bf16.msra.mxu0 %v1886
      %2263 = vmatprep.subr.bf16.mxu0 0
      %2264 = vmatpush2.bf16.msra.mxu0 %v1885
      %2265 = vmatprep.mubr.bf16.mxu0 %v1294
      %2266 = vmatmul.mubr.bf16.gmra.mxu0 %v1293
      %v2267 = vpop.f32.mrf.mxu0
      %v2268 = vadd.f32 %v2227, %v2267
      %v2269 = vpop.f32.mrf.mxu0
      %v2270 = vpop.f32.mrf.mxu0
      %v2271 = vadd.f32 %v2230, %v2270
      %v2272 = vpop.f32.mrf.mxu0
      %2273 = vdwg.mxu0
      %2274 = vmatprep.subr.bf16.mxu0 0
      %2275 = vmatpush1.bf16.msra.mxu0 %v1900
      %2276 = vmatprep.subr.bf16.mxu0 0
      %2277 = vmatpush1.bf16.msra.mxu0 %v1899
      %2278 = vmatprep.subr.bf16.mxu0 0
      %2279 = vmatpush1.bf16.msra.mxu0 %v1898
      %2280 = vmatprep.subr.bf16.mxu0 0
      %2281 = vmatpush1.bf16.msra.mxu0 %v1897
      %2282 = vmatprep.subr.bf16.mxu0 0
      %2283 = vmatpush1.bf16.msra.mxu0 %v1896
      %2284 = vmatprep.subr.bf16.mxu0 0
      %2285 = vmatpush1.bf16.msra.mxu0 %v1895
      %2286 = vmatprep.subr.bf16.mxu0 0
      %2287 = vmatpush1.bf16.msra.mxu0 %v1894
      %2288 = vmatprep.subr.bf16.mxu0 0
      %2289 = vmatpush1.bf16.msra.mxu0 %v1893
      %2290 = vmatprep.subr.bf16.mxu0 0
      %2291 = vmatpush2.bf16.msra.mxu0 %v1908
      %2292 = vmatprep.subr.bf16.mxu0 0
      %2293 = vmatpush2.bf16.msra.mxu0 %v1907
      %2294 = vmatprep.subr.bf16.mxu0 0
      %2295 = vmatpush2.bf16.msra.mxu0 %v1906
      %2296 = vmatprep.subr.bf16.mxu0 0
      %2297 = vmatpush2.bf16.msra.mxu0 %v1905
      %2298 = vmatprep.subr.bf16.mxu0 0
      %2299 = vmatpush2.bf16.msra.mxu0 %v1904
      %2300 = vmatprep.subr.bf16.mxu0 0
      %2301 = vmatpush2.bf16.msra.mxu0 %v1903
      %2302 = vmatprep.subr.bf16.mxu0 0
      %2303 = vmatpush2.bf16.msra.mxu0 %v1902
      %2304 = vmatprep.subr.bf16.mxu0 0
      %2305 = vmatpush2.bf16.msra.mxu0 %v1901
      %2306 = vmatprep.mubr.bf16.mxu0 %v1296
      %2307 = vmatmul.mubr.bf16.gmra.mxu0 %v1295
      %v2308 = vpop.f32.mrf.mxu0
      %v2309 = vadd.f32 %v2268, %v2308
      %v2310 = vpop.f32.mrf.mxu0
      %v2311 = vpop.f32.mrf.mxu0
      %v2312 = vadd.f32 %v2271, %v2311
      %v2313 = vpop.f32.mrf.mxu0
      %2314 = vdwg.mxu0
      %2315 = vmatprep.subr.bf16.mxu0 0
      %2316 = vmatpush1.bf16.msra.mxu0 %v1916
      %2317 = vmatprep.subr.bf16.mxu0 0
      %2318 = vmatpush1.bf16.msra.mxu0 %v1915
      %2319 = vmatprep.subr.bf16.mxu0 0
      %2320 = vmatpush1.bf16.msra.mxu0 %v1914
      %2321 = vmatprep.subr.bf16.mxu0 0
      %2322 = vmatpush1.bf16.msra.mxu0 %v1913
      %2323 = vmatprep.subr.bf16.mxu0 0
      %2324 = vmatpush1.bf16.msra.mxu0 %v1912
      %2325 = vmatprep.subr.bf16.mxu0 0
      %2326 = vmatpush1.bf16.msra.mxu0 %v1911
      %2327 = vmatprep.subr.bf16.mxu0 0
      %2328 = vmatpush1.bf16.msra.mxu0 %v1910
      %2329 = vmatprep.subr.bf16.mxu0 0
      %2330 = vmatpush1.bf16.msra.mxu0 %v1909
      %2331 = vmatprep.subr.bf16.mxu0 0
      %2332 = vmatpush2.bf16.msra.mxu0 %v1924
      %2333 = vmatprep.subr.bf16.mxu0 0
      %2334 = vmatpush2.bf16.msra.mxu0 %v1923
      %2335 = vmatprep.subr.bf16.mxu0 0
      %2336 = vmatpush2.bf16.msra.mxu0 %v1922
      %2337 = vmatprep.subr.bf16.mxu0 0
      %2338 = vmatpush2.bf16.msra.mxu0 %v1921
      %2339 = vmatprep.subr.bf16.mxu0 0
      %2340 = vmatpush2.bf16.msra.mxu0 %v1920
      %2341 = vmatprep.subr.bf16.mxu0 0
      %2342 = vmatpush2.bf16.msra.mxu0 %v1919
      %2343 = vmatprep.subr.bf16.mxu0 0
      %2344 = vmatpush2.bf16.msra.mxu0 %v1918
      %2345 = vmatprep.subr.bf16.mxu0 0
      %2346 = vmatpush2.bf16.msra.mxu0 %v1917
      %2347 = vmatprep.mubr.bf16.mxu0 %v1298
      %2348 = vmatmul.mubr.bf16.gmra.mxu0 %v1297
      %v2349 = vpop.f32.mrf.mxu0
      %v2350 = vadd.f32 %v2309, %v2349
      %v2351 = vpop.f32.mrf.mxu0
      %v2352 = vpop.f32.mrf.mxu0
      %v2353 = vadd.f32 %v2312, %v2352
      %v2354 = vpop.f32.mrf.mxu0
      %2355 = vdwg.mxu0
      %2356 = vmatprep.subr.bf16.mxu0 0
      %2357 = vmatpush1.bf16.msra.mxu0 %v1932
      %2358 = vmatprep.subr.bf16.mxu0 0
      %2359 = vmatpush1.bf16.msra.mxu0 %v1931
      %2360 = vmatprep.subr.bf16.mxu0 0
      %2361 = vmatpush1.bf16.msra.mxu0 %v1930
      %2362 = vmatprep.subr.bf16.mxu0 0
      %2363 = vmatpush1.bf16.msra.mxu0 %v1929
      %2364 = vmatprep.subr.bf16.mxu0 0
      %2365 = vmatpush1.bf16.msra.mxu0 %v1928
      %2366 = vmatprep.subr.bf16.mxu0 0
      %2367 = vmatpush1.bf16.msra.mxu0 %v1927
      %2368 = vmatprep.subr.bf16.mxu0 0
      %2369 = vmatpush1.bf16.msra.mxu0 %v1926
      %2370 = vmatprep.subr.bf16.mxu0 0
      %2371 = vmatpush1.bf16.msra.mxu0 %v1925
      %2372 = vmatprep.subr.bf16.mxu0 0
      %2373 = vmatpush2.bf16.msra.mxu0 %v1940
      %2374 = vmatprep.subr.bf16.mxu0 0
      %2375 = vmatpush2.bf16.msra.mxu0 %v1939
      %2376 = vmatprep.subr.bf16.mxu0 0
      %2377 = vmatpush2.bf16.msra.mxu0 %v1938
      %2378 = vmatprep.subr.bf16.mxu0 0
      %2379 = vmatpush2.bf16.msra.mxu0 %v1937
      %2380 = vmatprep.subr.bf16.mxu0 0
      %2381 = vmatpush2.bf16.msra.mxu0 %v1936
      %2382 = vmatprep.subr.bf16.mxu0 0
      %2383 = vmatpush2.bf16.msra.mxu0 %v1935
      %2384 = vmatprep.subr.bf16.mxu0 0
      %2385 = vmatpush2.bf16.msra.mxu0 %v1934
      %2386 = vmatprep.subr.bf16.mxu0 0
      %2387 = vmatpush2.bf16.msra.mxu0 %v1933
      %2388 = vmatprep.mubr.bf16.mxu0 %v1300
      %2389 = vmatmul.mubr.bf16.gmra.mxu0 %v1299
      %v2390 = vpop.f32.mrf.mxu0
      %v2391 = vadd.f32 %v2350, %v2390
      %v2392 = vpop.f32.mrf.mxu0
      %v2393 = vpop.f32.mrf.mxu0
      %v2394 = vadd.f32 %v2353, %v2393
      %v2395 = vpop.f32.mrf.mxu0
      %2396 = vdwg.mxu0
      %v2397 = vmax.f32 %v2391, 0.0
      %v2398 = vmax.f32 %v2394, 0.0
      %v2399 = vpack.c.bf16 %v2398, %v2397
      %v2408 = vunpack.c.l.b16 %v288
      %v2409 = vunpack.c.l.b16 %v289
      %v2410 = vunpack.c.l.b16 %v290
      %v2411 = vunpack.c.l.b16 %v291
      %v2412 = vunpack.c.l.b16 %v292
      %v2413 = vunpack.c.l.b16 %v293
      %v2414 = vunpack.c.l.b16 %v294
      %v2415 = vunpack.c.l.b16 %v295
      %v2416 = vpack.c.b16 %v2409, %v2408
      %v2417 = vpack.c.b16 %v2411, %v2410
      %v2418 = vpack.c.b16 %v2413, %v2412
      %v2419 = vpack.c.b16 %v2415, %v2414
      %v2425 = vsel %vm1075, %v2399, 0
      %2427 = vmatprep.subr.bf16.mxu0 0
      %2428 = vmatpush1.bf16.msra.mxu0 0
      %2429 = vmatprep.subr.bf16.mxu0 0
      %2430 = vmatpush1.bf16.msra.mxu0 0
      %2431 = vmatprep.subr.bf16.mxu0 0
      %2432 = vmatpush1.bf16.msra.mxu0 0
      %2433 = vmatprep.subr.bf16.mxu0 0
      %2434 = vmatpush1.bf16.msra.mxu0 0
      %2435 = vmatprep.subr.bf16.mxu0 0
      %2436 = vmatpush1.bf16.msra.mxu0 %v2419
      %2437 = vmatprep.subr.bf16.mxu0 0
      %2438 = vmatpush1.bf16.msra.mxu0 %v2418
      %2439 = vmatprep.subr.bf16.mxu0 0
      %2440 = vmatpush1.bf16.msra.mxu0 %v2417
      %2441 = vmatprep.subr.bf16.mxu0 0
      %2442 = vmatpush1.bf16.msra.mxu0 %v2416
      %2443 = vmatprep.subr.bf16.mxu0 0
      %2444 = vmatpush2.bf16.msra.mxu0 0
      %2445 = vmatprep.subr.bf16.mxu0 0
      %2446 = vmatpush2.bf16.msra.mxu0 0
      %2447 = vmatprep.subr.bf16.mxu0 0
      %2448 = vmatpush2.bf16.msra.mxu0 0
      %2449 = vmatprep.subr.bf16.mxu0 0
      %2450 = vmatpush2.bf16.msra.mxu0 0
      %2451 = vmatprep.subr.bf16.mxu0 0
      %2452 = vmatpush2.bf16.msra.mxu0 0
      %2453 = vmatprep.subr.bf16.mxu0 0
      %2454 = vmatpush2.bf16.msra.mxu0 0
      %2455 = vmatprep.subr.bf16.mxu0 0
      %2456 = vmatpush2.bf16.msra.mxu0 0
      %2457 = vmatprep.subr.bf16.mxu0 0
      %2458 = vmatpush2.bf16.msra.mxu0 0
      %2459 = vmatprep.mubr.bf16.mxu0 0
      %2460 = vmatmul.mubr.bf16.gmra.mxu0 %v2425
      %v2461 = vpop.f32.mrf.mxu0
      %v2462 = vadd.f32 0.0, %v2461
      %v2463 = vpop.f32.mrf.mxu0
      %v2464 = vpop.f32.mrf.mxu0
      %v2465 = vadd.f32 0.0, %v2464
      %v2466 = vpop.f32.mrf.mxu0
      %2467 = vdwg.mxu0
      %v2468 = vpack.c.bf16 %v2465, %v2462
      %v2478 = vunpack.c.l.b16 %v392
      %v2479 = vunpack.c.l.b16 %v393
      %v2480 = vunpack.c.l.b16 %v394
      %v2481 = vunpack.c.l.b16 %v395
      %v2482 = vunpack.c.l.b16 %v396
      %v2483 = vunpack.c.l.b16 %v397
      %v2484 = vunpack.c.l.b16 %v398
      %v2485 = vunpack.c.l.b16 %v399
      %v2486 = vunpack.c.l.b16 %v400
      %v2487 = vpack.c.b16 %v2479, %v2478
      %v2488 = vpack.c.b16 %v2481, %v2480
      %v2489 = vpack.c.b16 %v2483, %v2482
      %v2490 = vpack.c.b16 %v2485, %v2484
      %v2491 = vpack.c.b16 %v2486, %v2486
      %vm2492 = vcmask 130048
      %v2494 = vsel %vm2492, %v2487, 0
      %v2497 = vsel %vm2492, %v2488, 0
      %v2500 = vsel %vm2492, %v2489, 0
      %v2503 = vsel %vm2492, %v2490, 0
      %v2506 = vsel %vm2492, %v2491, 0
      %2508 = vmatprep.subr.bf16.mxu0 0
      %2509 = vmatpush1.bf16.msra.mxu0 0
      %2510 = vmatprep.subr.bf16.mxu0 0
      %2511 = vmatpush1.bf16.msra.mxu0 0
      %2512 = vmatprep.subr.bf16.mxu0 0
      %2513 = vmatpush1.bf16.msra.mxu0 0
      %2514 = vmatprep.subr.bf16.mxu0 0
      %2515 = vmatpush1.bf16.msra.mxu0 0
      %2516 = vmatprep.subr.bf16.mxu0 0
      %2517 = vmatpush1.bf16.msra.mxu0 0
      %2518 = vmatprep.subr.bf16.mxu0 0
      %2519 = vmatpush1.bf16.msra.mxu0 0
      %2520 = vmatprep.subr.bf16.mxu0 0
      %2521 = vmatpush1.bf16.msra.mxu0 0
      %2522 = vmatprep.subr.bf16.mxu0 0
      %2523 = vmatpush1.bf16.msra.mxu0 %v2468
      %2524 = vmatprep.subr.bf16.mxu0 0
      %2525 = vmatpush2.bf16.msra.mxu0 0
      %2526 = vmatprep.subr.bf16.mxu0 0
      %2527 = vmatpush2.bf16.msra.mxu0 0
      %2528 = vmatprep.subr.bf16.mxu0 0
      %2529 = vmatpush2.bf16.msra.mxu0 0
      %2530 = vmatprep.subr.bf16.mxu0 0
      %2531 = vmatpush2.bf16.msra.mxu0 0
      %2532 = vmatprep.subr.bf16.mxu0 0
      %2533 = vmatpush2.bf16.msra.mxu0 0
      %2534 = vmatprep.subr.bf16.mxu0 0
      %2535 = vmatpush2.bf16.msra.mxu0 0
      %2536 = vmatprep.subr.bf16.mxu0 0
      %2537 = vmatpush2.bf16.msra.mxu0 0
      %2538 = vmatprep.subr.bf16.mxu0 0
      %2539 = vmatpush2.bf16.msra.mxu0 0
      %2540 = vmatprep.mubr.bf16.mxu0 0
      %2541 = vmatmul.mubr.bf16.gmra.mxu0 %v2494
      %v2542 = vpop.f32.mrf.mxu0
      %v2543 = vadd.f32 0.0, %v2542
      %v2544 = vpop.f32.mrf.mxu0
      %v2545 = vpop.f32.mrf.mxu0
      %v2546 = vadd.f32 0.0, %v2545
      %v2547 = vpop.f32.mrf.mxu0
      %2548 = vmatprep.mubr.bf16.mxu0 0
      %2549 = vmatmul.mubr.bf16.gmra.mxu0 %v2497
      %v2550 = vpop.f32.mrf.mxu0
      %v2551 = vadd.f32 0.0, %v2550
      %v2552 = vpop.f32.mrf.mxu0
      %v2553 = vpop.f32.mrf.mxu0
      %v2554 = vadd.f32 0.0, %v2553
      %v2555 = vpop.f32.mrf.mxu0
      %2556 = vmatprep.mubr.bf16.mxu0 0
      %2557 = vmatmul.mubr.bf16.gmra.mxu0 %v2500
      %v2558 = vpop.f32.mrf.mxu0
      %v2559 = vadd.f32 0.0, %v2558
      %v2560 = vpop.f32.mrf.mxu0
      %v2561 = vpop.f32.mrf.mxu0
      %v2562 = vadd.f32 0.0, %v2561
      %v2563 = vpop.f32.mrf.mxu0
      %2564 = vmatprep.mubr.bf16.mxu0 0
      %2565 = vmatmul.mubr.bf16.gmra.mxu0 %v2503
      %v2566 = vpop.f32.mrf.mxu0
      %v2567 = vadd.f32 0.0, %v2566
      %v2568 = vpop.f32.mrf.mxu0
      %v2569 = vpop.f32.mrf.mxu0
      %v2570 = vadd.f32 0.0, %v2569
      %v2571 = vpop.f32.mrf.mxu0
      %2572 = vmatprep.mubr.bf16.mxu0 0
      %2573 = vmatmul.mubr.bf16.gmra.mxu0 %v2506
      %v2574 = vpop.f32.mrf.mxu0
      %v2575 = vadd.f32 0.0, %v2574
      %v2576 = vpop.f32.mrf.mxu0
      %v2577 = vpop.f32.mrf.mxu0
      %v2578 = vpop.f32.mrf.mxu0
      %2579 = vdwg.mxu0
      %v2580 = vpack.c.bf16 %v2546, %v2543
      %v2581 = vpack.c.bf16 %v2554, %v2551
      %v2582 = vpack.c.bf16 %v2562, %v2559
      %v2583 = vpack.c.bf16 %v2570, %v2567
      %v2584 = vpack.c.bf16 %v2575, %v2575
      %v2586 = vrot.slane %v2580, 4
      %v2589 = vrot.slane %v2581, 4
      %v2592 = vrot.slane %v2582, 4
      %v2595 = vrot.slane %v2583, 4
      %v2741 = vunpack.c.l.b16 %v657
      %v2742 = vunpack.c.l.b16 %v658
      %v2743 = vunpack.c.l.b16 %v659
      %v2744 = vunpack.c.l.b16 %v660
      %v2745 = vunpack.c.l.b16 %v661
      %v2746 = vunpack.c.l.b16 %v662
      %v2747 = vunpack.c.l.b16 %v663
      %v2748 = vunpack.c.l.b16 %v664
      %v2749 = vunpack.c.l.b16 %v665
      %v2750 = vunpack.c.l.b16 %v666
      %v2751 = vunpack.c.l.b16 %v667
      %v2752 = vunpack.c.l.b16 %v668
      %v2753 = vunpack.c.l.b16 %v669
      %v2754 = vunpack.c.l.b16 %v670
      %v2755 = vunpack.c.l.b16 %v671
      %v2756 = vunpack.c.l.b16 %v672
      %v2757 = vunpack.c.l.b16 %v673
      %v2758 = vunpack.c.l.b16 %v674
      %v2759 = vunpack.c.l.b16 %v675
      %v2760 = vunpack.c.l.b16 %v676
      %v2761 = vunpack.c.l.b16 %v677
      %v2762 = vunpack.c.l.b16 %v678
      %v2763 = vunpack.c.l.b16 %v679
      %v2764 = vunpack.c.l.b16 %v680
      %v2765 = vunpack.c.l.b16 %v681
      %v2766 = vunpack.c.l.b16 %v682
      %v2767 = vunpack.c.l.b16 %v683
      %v2768 = vunpack.c.l.b16 %v684
      %v2769 = vunpack.c.l.b16 %v685
      %v2770 = vunpack.c.l.b16 %v686
      %v2771 = vunpack.c.l.b16 %v687
      %v2772 = vunpack.c.l.b16 %v688
      %v2773 = vunpack.c.l.b16 %v689
      %v2774 = vunpack.c.l.b16 %v690
      %v2775 = vunpack.c.l.b16 %v691
      %v2776 = vunpack.c.l.b16 %v692
      %v2777 = vunpack.c.l.b16 %v693
      %v2778 = vunpack.c.l.b16 %v694
      %v2779 = vunpack.c.l.b16 %v695
      %v2780 = vunpack.c.l.b16 %v696
      %v2781 = vunpack.c.l.b16 %v697
      %v2782 = vunpack.c.l.b16 %v698
      %v2783 = vunpack.c.l.b16 %v699
      %v2784 = vunpack.c.l.b16 %v700
      %v2785 = vunpack.c.l.b16 %v701
      %v2786 = vunpack.c.l.b16 %v702
      %v2787 = vunpack.c.l.b16 %v703
      %v2788 = vunpack.c.l.b16 %v704
      %v2789 = vunpack.c.l.b16 %v705
      %v2790 = vunpack.c.l.b16 %v706
      %v2791 = vunpack.c.l.b16 %v707
      %v2792 = vunpack.c.l.b16 %v708
      %v2793 = vunpack.c.l.b16 %v709
      %v2794 = vunpack.c.l.b16 %v710
      %v2795 = vunpack.c.l.b16 %v711
      %v2796 = vunpack.c.l.b16 %v712
      %v2797 = vunpack.c.l.b16 %v713
      %v2798 = vunpack.c.l.b16 %v714
      %v2799 = vunpack.c.l.b16 %v715
      %v2800 = vunpack.c.l.b16 %v716
      %v2801 = vunpack.c.l.b16 %v717
      %v2802 = vunpack.c.l.b16 %v718
      %v2803 = vunpack.c.l.b16 %v719
      %v2804 = vunpack.c.l.b16 %v720
      %v2805 = vunpack.c.l.b16 %v721
      %v2806 = vunpack.c.l.b16 %v722
      %v2807 = vunpack.c.l.b16 %v723
      %v2808 = vunpack.c.l.b16 %v724
      %v2809 = vunpack.c.l.b16 %v725
      %v2810 = vunpack.c.l.b16 %v726
      %v2811 = vunpack.c.l.b16 %v727
      %v2812 = vunpack.c.l.b16 %v728
      %v2813 = vunpack.c.l.b16 %v729
      %v2814 = vunpack.c.l.b16 %v730
      %v2815 = vunpack.c.l.b16 %v731
      %v2816 = vunpack.c.l.b16 %v732
      %v2817 = vunpack.c.l.b16 %v733
      %v2818 = vunpack.c.l.b16 %v734
      %v2819 = vunpack.c.l.b16 %v735
      %v2820 = vunpack.c.l.b16 %v736
      %v2821 = vunpack.c.l.b16 %v737
      %v2822 = vunpack.c.l.b16 %v738
      %v2823 = vunpack.c.l.b16 %v739
      %v2824 = vunpack.c.l.b16 %v740
      %v2825 = vunpack.c.l.b16 %v741
      %v2826 = vunpack.c.l.b16 %v742
      %v2827 = vunpack.c.l.b16 %v743
      %v2828 = vunpack.c.l.b16 %v744
      %v2829 = vunpack.c.l.b16 %v745
      %v2830 = vunpack.c.l.b16 %v746
      %v2831 = vunpack.c.l.b16 %v747
      %v2832 = vunpack.c.l.b16 %v748
      %v2833 = vunpack.c.l.b16 %v749
      %v2834 = vunpack.c.l.b16 %v750
      %v2835 = vunpack.c.l.b16 %v751
      %v2836 = vunpack.c.l.b16 %v752
      %v2837 = vunpack.c.l.b16 %v753
      %v2838 = vunpack.c.l.b16 %v754
      %v2839 = vunpack.c.l.b16 %v755
      %v2840 = vunpack.c.l.b16 %v756
      %v2841 = vunpack.c.l.b16 %v757
      %v2842 = vunpack.c.l.b16 %v758
      %v2843 = vunpack.c.l.b16 %v759
      %v2844 = vunpack.c.l.b16 %v760
      %v2845 = vunpack.c.l.b16 %v761
      %v2846 = vunpack.c.l.b16 %v762
      %v2847 = vunpack.c.l.b16 %v763
      %v2848 = vunpack.c.l.b16 %v764
      %v2849 = vunpack.c.l.b16 %v765
      %v2850 = vunpack.c.l.b16 %v766
      %v2851 = vunpack.c.l.b16 %v767
      %v2852 = vunpack.c.l.b16 %v768
      %v2853 = vunpack.c.l.b16 %v769
      %v2854 = vunpack.c.l.b16 %v770
      %v2855 = vunpack.c.l.b16 %v771
      %v2856 = vunpack.c.l.b16 %v772
      %v2857 = vunpack.c.l.b16 %v773
      %v2858 = vunpack.c.l.b16 %v774
      %v2859 = vunpack.c.l.b16 %v775
      %v2860 = vunpack.c.l.b16 %v776
      %v2861 = vunpack.c.l.b16 %v777
      %v2862 = vunpack.c.l.b16 %v778
      %v2863 = vunpack.c.l.b16 %v779
      %v2864 = vunpack.c.l.b16 %v780
      %v2865 = vunpack.c.l.b16 %v781
      %v2866 = vunpack.c.l.b16 %v782
      %v2867 = vunpack.c.l.b16 %v783
      %v2868 = vunpack.c.l.b16 %v784
      %v2869 = vunpack.c.l.b16 %v785
      %v2870 = vunpack.c.l.b16 %v786
      %v2871 = vunpack.c.l.b16 %v787
      %v2872 = vunpack.c.l.b16 %v788
      %v2873 = vunpack.c.l.b16 %v789
      %v2874 = vunpack.c.l.b16 %v790
      %v2875 = vunpack.c.l.b16 %v791
      %v2876 = vunpack.c.l.b16 %v792
      %v2877 = vunpack.c.l.b16 %v793
      %v2878 = vunpack.c.l.b16 %v794
      %v2879 = vunpack.c.l.b16 %v795
      %v2880 = vunpack.c.l.b16 %v796
      %v2881 = vunpack.c.l.b16 %v797
      %v2882 = vunpack.c.l.b16 %v798
      %v2883 = vunpack.c.l.b16 %v799
      %v2884 = vunpack.c.l.b16 %v800
      %v2885 = vpack.c.b16 %v2742, %v2741
      %v2886 = vpack.c.b16 %v2744, %v2743
      %v2887 = vpack.c.b16 %v2746, %v2745
      %v2888 = vpack.c.b16 %v2748, %v2747
      %v2889 = vpack.c.b16 %v2750, %v2749
      %v2890 = vpack.c.b16 %v2752, %v2751
      %v2891 = vpack.c.b16 %v2754, %v2753
      %v2892 = vpack.c.b16 %v2756, %v2755
      %v2893 = vpack.c.b16 %v2758, %v2757
      %v2894 = vpack.c.b16 %v2760, %v2759
      %v2895 = vpack.c.b16 %v2762, %v2761
      %v2896 = vpack.c.b16 %v2764, %v2763
      %v2897 = vpack.c.b16 %v2766, %v2765
      %v2898 = vpack.c.b16 %v2768, %v2767
      %v2899 = vpack.c.b16 %v2770, %v2769
      %v2900 = vpack.c.b16 %v2772, %v2771
      %v2901 = vpack.c.b16 %v2774, %v2773
      %v2902 = vpack.c.b16 %v2776, %v2775
      %v2903 = vpack.c.b16 %v2778, %v2777
      %v2904 = vpack.c.b16 %v2780, %v2779
      %v2905 = vpack.c.b16 %v2782, %v2781
      %v2906 = vpack.c.b16 %v2784, %v2783
      %v2907 = vpack.c.b16 %v2786, %v2785
      %v2908 = vpack.c.b16 %v2788, %v2787
      %v2909 = vpack.c.b16 %v2790, %v2789
      %v2910 = vpack.c.b16 %v2792, %v2791
      %v2911 = vpack.c.b16 %v2794, %v2793
      %v2912 = vpack.c.b16 %v2796, %v2795
      %v2913 = vpack.c.b16 %v2798, %v2797
      %v2914 = vpack.c.b16 %v2800, %v2799
      %v2915 = vpack.c.b16 %v2802, %v2801
      %v2916 = vpack.c.b16 %v2804, %v2803
      %v2917 = vpack.c.b16 %v2806, %v2805
      %v2918 = vpack.c.b16 %v2808, %v2807
      %v2919 = vpack.c.b16 %v2810, %v2809
      %v2920 = vpack.c.b16 %v2812, %v2811
      %v2921 = vpack.c.b16 %v2814, %v2813
      %v2922 = vpack.c.b16 %v2816, %v2815
      %v2923 = vpack.c.b16 %v2818, %v2817
      %v2924 = vpack.c.b16 %v2820, %v2819
      %v2925 = vpack.c.b16 %v2822, %v2821
      %v2926 = vpack.c.b16 %v2824, %v2823
      %v2927 = vpack.c.b16 %v2826, %v2825
      %v2928 = vpack.c.b16 %v2828, %v2827
      %v2929 = vpack.c.b16 %v2830, %v2829
      %v2930 = vpack.c.b16 %v2832, %v2831
      %v2931 = vpack.c.b16 %v2834, %v2833
      %v2932 = vpack.c.b16 %v2836, %v2835
      %v2933 = vpack.c.b16 %v2838, %v2837
      %v2934 = vpack.c.b16 %v2840, %v2839
      %v2935 = vpack.c.b16 %v2842, %v2841
      %v2936 = vpack.c.b16 %v2844, %v2843
      %v2937 = vpack.c.b16 %v2846, %v2845
      %v2938 = vpack.c.b16 %v2848, %v2847
      %v2939 = vpack.c.b16 %v2850, %v2849
      %v2940 = vpack.c.b16 %v2852, %v2851
      %v2941 = vpack.c.b16 %v2854, %v2853
      %v2942 = vpack.c.b16 %v2856, %v2855
      %v2943 = vpack.c.b16 %v2858, %v2857
      %v2944 = vpack.c.b16 %v2860, %v2859
      %v2945 = vpack.c.b16 %v2862, %v2861
      %v2946 = vpack.c.b16 %v2864, %v2863
      %v2947 = vpack.c.b16 %v2866, %v2865
      %v2948 = vpack.c.b16 %v2868, %v2867
      %v2949 = vpack.c.b16 %v2870, %v2869
      %v2950 = vpack.c.b16 %v2872, %v2871
      %v2951 = vpack.c.b16 %v2874, %v2873
      %v2952 = vpack.c.b16 %v2876, %v2875
      %v2953 = vpack.c.b16 %v2878, %v2877
      %v2954 = vpack.c.b16 %v2880, %v2879
      %v2955 = vpack.c.b16 %v2882, %v2881
      %v2956 = vpack.c.b16 %v2884, %v2883
      %3029 = vmatprep.subr.bf16.mxu0 0
      %3030 = vmatpush1.bf16.msra.mxu0 %v2892
      %3031 = vmatprep.subr.bf16.mxu0 0
      %3032 = vmatpush1.bf16.msra.mxu0 %v2891
      %3033 = vmatprep.subr.bf16.mxu0 0
      %3034 = vmatpush1.bf16.msra.mxu0 %v2890
      %3035 = vmatprep.subr.bf16.mxu0 0
      %3036 = vmatpush1.bf16.msra.mxu0 %v2889
      %3037 = vmatprep.subr.bf16.mxu0 0
      %3038 = vmatpush1.bf16.msra.mxu0 %v2888
      %3039 = vmatprep.subr.bf16.mxu0 0
      %3040 = vmatpush1.bf16.msra.mxu0 %v2887
      %3041 = vmatprep.subr.bf16.mxu0 0
      %3042 = vmatpush1.bf16.msra.mxu0 %v2886
      %3043 = vmatprep.subr.bf16.mxu0 0
      %3044 = vmatpush1.bf16.msra.mxu0 %v2885
      %3045 = vmatprep.subr.bf16.mxu0 0
      %3046 = vmatpush2.bf16.msra.mxu0 %v2900
      %3047 = vmatprep.subr.bf16.mxu0 0
      %3048 = vmatpush2.bf16.msra.mxu0 %v2899
      %3049 = vmatprep.subr.bf16.mxu0 0
      %3050 = vmatpush2.bf16.msra.mxu0 %v2898
      %3051 = vmatprep.subr.bf16.mxu0 0
      %3052 = vmatpush2.bf16.msra.mxu0 %v2897
      %3053 = vmatprep.subr.bf16.mxu0 0
      %3054 = vmatpush2.bf16.msra.mxu0 %v2896
      %3055 = vmatprep.subr.bf16.mxu0 0
      %3056 = vmatpush2.bf16.msra.mxu0 %v2895
      %3057 = vmatprep.subr.bf16.mxu0 0
      %3058 = vmatpush2.bf16.msra.mxu0 %v2894
      %3059 = vmatprep.subr.bf16.mxu0 0
      %3060 = vmatpush2.bf16.msra.mxu0 %v2893
      %3061 = vmatprep.mubr.bf16.mxu0 %v2586
      %3062 = vmatmul.mubr.bf16.gmra.mxu0 %v2580
      %v3063 = vpop.f32.mrf.mxu0
      %v3064 = vadd.f32 %v809, %v3063
      %v3065 = vpop.f32.mrf.mxu0
      %v3066 = vpop.f32.mrf.mxu0
      %v3067 = vpop.f32.mrf.mxu0
      %3068 = vdwg.mxu0
      %3069 = vmatprep.subr.bf16.mxu0 0
      %3070 = vmatpush1.bf16.msra.mxu0 %v2908
      %3071 = vmatprep.subr.bf16.mxu0 0
      %3072 = vmatpush1.bf16.msra.mxu0 %v2907
      %3073 = vmatprep.subr.bf16.mxu0 0
      %3074 = vmatpush1.bf16.msra.mxu0 %v2906
      %3075 = vmatprep.subr.bf16.mxu0 0
      %3076 = vmatpush1.bf16.msra.mxu0 %v2905
      %3077 = vmatprep.subr.bf16.mxu0 0
      %3078 = vmatpush1.bf16.msra.mxu0 %v2904
      %3079 = vmatprep.subr.bf16.mxu0 0
      %3080 = vmatpush1.bf16.msra.mxu0 %v2903
      %3081 = vmatprep.subr.bf16.mxu0 0
      %3082 = vmatpush1.bf16.msra.mxu0 %v2902
      %3083 = vmatprep.subr.bf16.mxu0 0
      %3084 = vmatpush1.bf16.msra.mxu0 %v2901
      %3085 = vmatprep.subr.bf16.mxu0 0
      %3086 = vmatpush2.bf16.msra.mxu0 %v2916
      %3087 = vmatprep.subr.bf16.mxu0 0
      %3088 = vmatpush2.bf16.msra.mxu0 %v2915
      %3089 = vmatprep.subr.bf16.mxu0 0
      %3090 = vmatpush2.bf16.msra.mxu0 %v2914
      %3091 = vmatprep.subr.bf16.mxu0 0
      %3092 = vmatpush2.bf16.msra.mxu0 %v2913
      %3093 = vmatprep.subr.bf16.mxu0 0
      %3094 = vmatpush2.bf16.msra.mxu0 %v2912
      %3095 = vmatprep.subr.bf16.mxu0 0
      %3096 = vmatpush2.bf16.msra.mxu0 %v2911
      %3097 = vmatprep.subr.bf16.mxu0 0
      %3098 = vmatpush2.bf16.msra.mxu0 %v2910
      %3099 = vmatprep.subr.bf16.mxu0 0
      %3100 = vmatpush2.bf16.msra.mxu0 %v2909
      %3101 = vmatprep.mubr.bf16.mxu0 %v2589
      %3102 = vmatmul.mubr.bf16.gmra.mxu0 %v2581
      %v3103 = vpop.f32.mrf.mxu0
      %v3104 = vadd.f32 %v3064, %v3103
      %v3105 = vpop.f32.mrf.mxu0
      %v3106 = vpop.f32.mrf.mxu0
      %v3107 = vpop.f32.mrf.mxu0
      %3108 = vdwg.mxu0
      %3109 = vmatprep.subr.bf16.mxu0 0
      %3110 = vmatpush1.bf16.msra.mxu0 %v2924
      %3111 = vmatprep.subr.bf16.mxu0 0
      %3112 = vmatpush1.bf16.msra.mxu0 %v2923
      %3113 = vmatprep.subr.bf16.mxu0 0
      %3114 = vmatpush1.bf16.msra.mxu0 %v2922
      %3115 = vmatprep.subr.bf16.mxu0 0
      %3116 = vmatpush1.bf16.msra.mxu0 %v2921
      %3117 = vmatprep.subr.bf16.mxu0 0
      %3118 = vmatpush1.bf16.msra.mxu0 %v2920
      %3119 = vmatprep.subr.bf16.mxu0 0
      %3120 = vmatpush1.bf16.msra.mxu0 %v2919
      %3121 = vmatprep.subr.bf16.mxu0 0
      %3122 = vmatpush1.bf16.msra.mxu0 %v2918
      %3123 = vmatprep.subr.bf16.mxu0 0
      %3124 = vmatpush1.bf16.msra.mxu0 %v2917
      %3125 = vmatprep.subr.bf16.mxu0 0
      %3126 = vmatpush2.bf16.msra.mxu0 %v2932
      %3127 = vmatprep.subr.bf16.mxu0 0
      %3128 = vmatpush2.bf16.msra.mxu0 %v2931
      %3129 = vmatprep.subr.bf16.mxu0 0
      %3130 = vmatpush2.bf16.msra.mxu0 %v2930
      %3131 = vmatprep.subr.bf16.mxu0 0
      %3132 = vmatpush2.bf16.msra.mxu0 %v2929
      %3133 = vmatprep.subr.bf16.mxu0 0
      %3134 = vmatpush2.bf16.msra.mxu0 %v2928
      %3135 = vmatprep.subr.bf16.mxu0 0
      %3136 = vmatpush2.bf16.msra.mxu0 %v2927
      %3137 = vmatprep.subr.bf16.mxu0 0
      %3138 = vmatpush2.bf16.msra.mxu0 %v2926
      %3139 = vmatprep.subr.bf16.mxu0 0
      %3140 = vmatpush2.bf16.msra.mxu0 %v2925
      %3141 = vmatprep.mubr.bf16.mxu0 %v2592
      %3142 = vmatmul.mubr.bf16.gmra.mxu0 %v2582
      %v3143 = vpop.f32.mrf.mxu0
      %v3144 = vadd.f32 %v3104, %v3143
      %v3145 = vpop.f32.mrf.mxu0
      %v3146 = vpop.f32.mrf.mxu0
      %v3147 = vpop.f32.mrf.mxu0
      %3148 = vdwg.mxu0
      %3149 = vmatprep.subr.bf16.mxu0 0
      %3150 = vmatpush1.bf16.msra.mxu0 %v2940
      %3151 = vmatprep.subr.bf16.mxu0 0
      %3152 = vmatpush1.bf16.msra.mxu0 %v2939
      %3153 = vmatprep.subr.bf16.mxu0 0
      %3154 = vmatpush1.bf16.msra.mxu0 %v2938
      %3155 = vmatprep.subr.bf16.mxu0 0
      %3156 = vmatpush1.bf16.msra.mxu0 %v2937
      %3157 = vmatprep.subr.bf16.mxu0 0
      %3158 = vmatpush1.bf16.msra.mxu0 %v2936
      %3159 = vmatprep.subr.bf16.mxu0 0
      %3160 = vmatpush1.bf16.msra.mxu0 %v2935
      %3161 = vmatprep.subr.bf16.mxu0 0
      %3162 = vmatpush1.bf16.msra.mxu0 %v2934
      %3163 = vmatprep.subr.bf16.mxu0 0
      %3164 = vmatpush1.bf16.msra.mxu0 %v2933
      %3165 = vmatprep.subr.bf16.mxu0 0
      %3166 = vmatpush2.bf16.msra.mxu0 %v2948
      %3167 = vmatprep.subr.bf16.mxu0 0
      %3168 = vmatpush2.bf16.msra.mxu0 %v2947
      %3169 = vmatprep.subr.bf16.mxu0 0
      %3170 = vmatpush2.bf16.msra.mxu0 %v2946
      %3171 = vmatprep.subr.bf16.mxu0 0
      %3172 = vmatpush2.bf16.msra.mxu0 %v2945
      %3173 = vmatprep.subr.bf16.mxu0 0
      %3174 = vmatpush2.bf16.msra.mxu0 %v2944
      %3175 = vmatprep.subr.bf16.mxu0 0
      %3176 = vmatpush2.bf16.msra.mxu0 %v2943
      %3177 = vmatprep.subr.bf16.mxu0 0
      %3178 = vmatpush2.bf16.msra.mxu0 %v2942
      %3179 = vmatprep.subr.bf16.mxu0 0
      %3180 = vmatpush2.bf16.msra.mxu0 %v2941
      %3181 = vmatprep.mubr.bf16.mxu0 %v2595
      %3182 = vmatmul.mubr.bf16.gmra.mxu0 %v2583
      %v3183 = vpop.f32.mrf.mxu0
      %v3184 = vadd.f32 %v3144, %v3183
      %v3185 = vpop.f32.mrf.mxu0
      %v3186 = vpop.f32.mrf.mxu0
      %v3187 = vpop.f32.mrf.mxu0
      %3188 = vdwg.mxu0
      %3189 = vmatprep.subr.bf16.mxu0 0
      %3190 = vmatpush1.bf16.msra.mxu0 %v2956
      %3191 = vmatprep.subr.bf16.mxu0 0
      %3192 = vmatpush1.bf16.msra.mxu0 %v2955
      %3193 = vmatprep.subr.bf16.mxu0 0
      %3194 = vmatpush1.bf16.msra.mxu0 %v2954
      %3195 = vmatprep.subr.bf16.mxu0 0
      %3196 = vmatpush1.bf16.msra.mxu0 %v2953
      %3197 = vmatprep.subr.bf16.mxu0 0
      %3198 = vmatpush1.bf16.msra.mxu0 %v2952
      %3199 = vmatprep.subr.bf16.mxu0 0
      %3200 = vmatpush1.bf16.msra.mxu0 %v2951
      %3201 = vmatprep.subr.bf16.mxu0 0
      %3202 = vmatpush1.bf16.msra.mxu0 %v2950
      %3203 = vmatprep.subr.bf16.mxu0 0
      %3204 = vmatpush1.bf16.msra.mxu0 %v2949
      %3205 = vmatprep.subr.bf16.mxu0 0
      %3206 = vmatpush2.bf16.msra.mxu0 0
      %3207 = vmatprep.subr.bf16.mxu0 0
      %3208 = vmatpush2.bf16.msra.mxu0 0
      %3209 = vmatprep.subr.bf16.mxu0 0
      %3210 = vmatpush2.bf16.msra.mxu0 0
      %3211 = vmatprep.subr.bf16.mxu0 0
      %3212 = vmatpush2.bf16.msra.mxu0 0
      %3213 = vmatprep.subr.bf16.mxu0 0
      %3214 = vmatpush2.bf16.msra.mxu0 0
      %3215 = vmatprep.subr.bf16.mxu0 0
      %3216 = vmatpush2.bf16.msra.mxu0 0
      %3217 = vmatprep.subr.bf16.mxu0 0
      %3218 = vmatpush2.bf16.msra.mxu0 0
      %3219 = vmatprep.subr.bf16.mxu0 0
      %3220 = vmatpush2.bf16.msra.mxu0 0
      %3221 = vmatprep.mubr.bf16.mxu0 0
      %3222 = vmatmul.mubr.bf16.gmra.mxu0 %v2584
      %v3223 = vpop.f32.mrf.mxu0
      %v3224 = vadd.f32 %v3184, %v3223
      %v3225 = vpop.f32.mrf.mxu0
      %v3226 = vpop.f32.mrf.mxu0
      %v3227 = vpop.f32.mrf.mxu0
      %3228 = vdwg.mxu0
      %v3229 = vmax.f32 %v3224, 0.0
      %v3230 = vpack.c.bf16 %v3229, %v3229
      %v3231 = vld [vmem:[%s4] sm:$0xff]
      %v3232 = vld [vmem:[%s4 + $0x8] sm:$0xff]
      %v3233 = vld [vmem:[%s4 + $0x10] sm:$0xff]
      %v3234 = vld [vmem:[%s4 + $0x18] sm:$0xff]
      %v3235 = vld [vmem:[%s4 + $0x20] sm:$0xff]
      %v3236 = vld [vmem:[%s4 + $0x28] sm:$0xff]
      %v3237 = vld [vmem:[%s4 + $0x30] sm:$0xff]
      %v3238 = vld [vmem:[%s4 + $0x38] sm:$0xff]
      %v3239 = vld [vmem:[%s4 + $0x40] sm:$0xff]
      %v3240 = vld [vmem:[%s4 + $0x48] sm:$0xff]
      %v3241 = vld [vmem:[%s4 + $0x50] sm:$0xff]
      %v3242 = vld [vmem:[%s4 + $0x58] sm:$0xff]
      %v3243 = vld [vmem:[%s4 + $0x60] sm:$0xff]
      %v3244 = vld [vmem:[%s4 + $0x68] sm:$0xff]
      %v3245 = vld [vmem:[%s4 + $0x70] sm:$0xff]
      %v3246 = vld [vmem:[%s4 + $0x78] sm:$0xff]
      %v3247 = vld [vmem:[%s4 + $0x80] sm:$0xff]
      %v3248 = vld [vmem:[%s4 + $0x88] sm:$0xff]
      %v3249 = vld [vmem:[%s4 + $0x90] sm:$0xff]
      %v3250 = vld [vmem:[%s4 + $0x98] sm:$0xff]
      %v3251 = vld [vmem:[%s4 + $0xa0] sm:$0xff]
      %v3252 = vld [vmem:[%s4 + $0xa8] sm:$0xff]
      %v3253 = vld [vmem:[%s4 + $0xb0] sm:$0xff]
      %v3254 = vld [vmem:[%s4 + $0xb8] sm:$0xff]
      %v3255 = vld [vmem:[%s4 + $0xc0] sm:$0xff]
      %v3256 = vld [vmem:[%s4 + $0xc8] sm:$0xff]
      %v3257 = vld [vmem:[%s4 + $0xd0] sm:$0xff]
      %v3258 = vld [vmem:[%s4 + $0xd8] sm:$0xff]
      %v3259 = vld [vmem:[%s4 + $0xe0] sm:$0xff]
      %v3260 = vld [vmem:[%s4 + $0xe8] sm:$0xff]
      %v3261 = vld [vmem:[%s4 + $0xf0] sm:$0xff]
      %v3262 = vld [vmem:[%s4 + $0xf8] sm:$0xff]
      %v3295 = vunpack.c.l.b16 %v3231
      %v3296 = vunpack.c.h.b16 %v3231
      %v3297 = vunpack.c.l.b16 %v3232
      %v3298 = vunpack.c.h.b16 %v3232
      %v3299 = vunpack.c.l.b16 %v3233
      %v3300 = vunpack.c.h.b16 %v3233
      %v3301 = vunpack.c.l.b16 %v3234
      %v3302 = vunpack.c.h.b16 %v3234
      %v3303 = vunpack.c.l.b16 %v3235
      %v3304 = vunpack.c.h.b16 %v3235
      %v3305 = vunpack.c.l.b16 %v3236
      %v3306 = vunpack.c.h.b16 %v3236
      %v3307 = vunpack.c.l.b16 %v3237
      %v3308 = vunpack.c.h.b16 %v3237
      %v3309 = vunpack.c.l.b16 %v3238
      %v3310 = vunpack.c.h.b16 %v3238
      %v3311 = vunpack.c.l.b16 %v3239
      %v3312 = vunpack.c.h.b16 %v3239
      %v3313 = vunpack.c.l.b16 %v3240
      %v3314 = vunpack.c.h.b16 %v3240
      %v3315 = vunpack.c.l.b16 %v3241
      %v3316 = vunpack.c.h.b16 %v3241
      %v3317 = vunpack.c.l.b16 %v3242
      %v3318 = vunpack.c.h.b16 %v3242
      %v3319 = vunpack.c.l.b16 %v3243
      %v3320 = vunpack.c.h.b16 %v3243
      %v3321 = vunpack.c.l.b16 %v3244
      %v3322 = vunpack.c.h.b16 %v3244
      %v3323 = vunpack.c.l.b16 %v3245
      %v3324 = vunpack.c.h.b16 %v3245
      %v3325 = vunpack.c.l.b16 %v3246
      %v3326 = vunpack.c.h.b16 %v3246
      %v3327 = vunpack.c.l.b16 %v3247
      %v3328 = vunpack.c.h.b16 %v3247
      %v3329 = vunpack.c.l.b16 %v3248
      %v3330 = vunpack.c.h.b16 %v3248
      %v3331 = vunpack.c.l.b16 %v3249
      %v3332 = vunpack.c.h.b16 %v3249
      %v3333 = vunpack.c.l.b16 %v3250
      %v3334 = vunpack.c.h.b16 %v3250
      %v3335 = vunpack.c.l.b16 %v3251
      %v3336 = vunpack.c.h.b16 %v3251
      %v3337 = vunpack.c.l.b16 %v3252
      %v3338 = vunpack.c.h.b16 %v3252
      %v3339 = vunpack.c.l.b16 %v3253
      %v3340 = vunpack.c.h.b16 %v3253
      %v3341 = vunpack.c.l.b16 %v3254
      %v3342 = vunpack.c.h.b16 %v3254
      %v3343 = vunpack.c.l.b16 %v3255
      %v3344 = vunpack.c.h.b16 %v3255
      %v3345 = vunpack.c.l.b16 %v3256
      %v3346 = vunpack.c.h.b16 %v3256
      %v3347 = vunpack.c.l.b16 %v3257
      %v3348 = vunpack.c.h.b16 %v3257
      %v3349 = vunpack.c.l.b16 %v3258
      %v3350 = vunpack.c.h.b16 %v3258
      %v3351 = vunpack.c.l.b16 %v3259
      %v3352 = vunpack.c.h.b16 %v3259
      %v3353 = vunpack.c.l.b16 %v3260
      %v3354 = vunpack.c.h.b16 %v3260
      %v3355 = vunpack.c.l.b16 %v3261
      %v3356 = vunpack.c.h.b16 %v3261
      %v3357 = vunpack.c.l.b16 %v3262
      %v3358 = vunpack.c.h.b16 %v3262
      %v3359 = vpack.c.b16 %v3303, %v3295
      %v3360 = vpack.c.b16 %v3304, %v3296
      %v3361 = vpack.c.b16 %v3305, %v3297
      %v3362 = vpack.c.b16 %v3306, %v3298
      %v3363 = vpack.c.b16 %v3307, %v3299
      %v3364 = vpack.c.b16 %v3308, %v3300
      %v3365 = vpack.c.b16 %v3309, %v3301
      %v3366 = vpack.c.b16 %v3310, %v3302
      %v3367 = vpack.c.b16 %v3319, %v3311
      %v3368 = vpack.c.b16 %v3320, %v3312
      %v3369 = vpack.c.b16 %v3321, %v3313
      %v3370 = vpack.c.b16 %v3322, %v3314
      %v3371 = vpack.c.b16 %v3323, %v3315
      %v3372 = vpack.c.b16 %v3324, %v3316
      %v3373 = vpack.c.b16 %v3325, %v3317
      %v3374 = vpack.c.b16 %v3326, %v3318
      %v3375 = vpack.c.b16 %v3335, %v3327
      %v3376 = vpack.c.b16 %v3336, %v3328
      %v3377 = vpack.c.b16 %v3337, %v3329
      %v3378 = vpack.c.b16 %v3338, %v3330
      %v3379 = vpack.c.b16 %v3339, %v3331
      %v3380 = vpack.c.b16 %v3340, %v3332
      %v3381 = vpack.c.b16 %v3341, %v3333
      %v3382 = vpack.c.b16 %v3342, %v3334
      %v3383 = vpack.c.b16 %v3351, %v3343
      %v3384 = vpack.c.b16 %v3352, %v3344
      %v3385 = vpack.c.b16 %v3353, %v3345
      %v3386 = vpack.c.b16 %v3354, %v3346
      %v3387 = vpack.c.b16 %v3355, %v3347
      %v3388 = vpack.c.b16 %v3356, %v3348
      %v3389 = vpack.c.b16 %v3357, %v3349
      %v3390 = vpack.c.b16 %v3358, %v3350
      %v3424 = vlaneseq
      %v3425 = vshrl.u32 %v3424, 7
      %v3426 = vsub.s32 0, %v3425
      %v3427 = vrot.slane %v803, %v3426
      %v3428 = vlaneseq
      %v3429 = vshrl.u32 %v3428, 7
      %v3430 = vsub.s32 1, %v3429
      %v3431 = vrot.slane %v803, %v3430
      %v3432 = vlaneseq
      %v3433 = vshrl.u32 %v3432, 7
      %v3434 = vsub.s32 2, %v3433
      %v3435 = vrot.slane %v803, %v3434
      %v3436 = vlaneseq
      %v3437 = vshrl.u32 %v3436, 7
      %v3438 = vsub.s32 3, %v3437
      %v3439 = vrot.slane %v803, %v3438
      %v3440 = vlaneseq
      %v3441 = vshrl.u32 %v3440, 7
      %v3442 = vsub.s32 4, %v3441
      %v3443 = vrot.slane %v803, %v3442
      %v3444 = vlaneseq
      %v3445 = vshrl.u32 %v3444, 7
      %v3446 = vsub.s32 5, %v3445
      %v3447 = vrot.slane %v803, %v3446
      %v3448 = vlaneseq
      %v3449 = vshrl.u32 %v3448, 7
      %v3450 = vsub.s32 6, %v3449
      %v3451 = vrot.slane %v803, %v3450
      %v3452 = vlaneseq
      %v3453 = vshrl.u32 %v3452, 7
      %v3454 = vsub.s32 7, %v3453
      %v3455 = vrot.slane %v803, %v3454
      %v3465 = vsel %vm1075, %v3230, 0
      %3467 = vmatprep.subr.bf16.mxu0 0
      %3468 = vmatpush1.bf16.msra.mxu0 0
      %3469 = vmatprep.subr.bf16.mxu0 0
      %3470 = vmatpush1.bf16.msra.mxu0 0
      %3471 = vmatprep.subr.bf16.mxu0 0
      %3472 = vmatpush1.bf16.msra.mxu0 0
      %3473 = vmatprep.subr.bf16.mxu0 0
      %3474 = vmatpush1.bf16.msra.mxu0 0
      %3475 = vmatprep.subr.bf16.mxu0 %v3384
      %3476 = vmatpush1.bf16.msra.mxu0 %v3383
      %3477 = vmatprep.subr.bf16.mxu0 %v3376
      %3478 = vmatpush1.bf16.msra.mxu0 %v3375
      %3479 = vmatprep.subr.bf16.mxu0 %v3368
      %3480 = vmatpush1.bf16.msra.mxu0 %v3367
      %3481 = vmatprep.subr.bf16.mxu0 %v3360
      %3482 = vmatpush1.bf16.msra.mxu0 %v3359
      %3483 = vmatprep.subr.bf16.mxu0 0
      %3484 = vmatpush2.bf16.msra.mxu0 0
      %3485 = vmatprep.subr.bf16.mxu0 0
      %3486 = vmatpush2.bf16.msra.mxu0 0
      %3487 = vmatprep.subr.bf16.mxu0 0
      %3488 = vmatpush2.bf16.msra.mxu0 0
      %3489 = vmatprep.subr.bf16.mxu0 0
      %3490 = vmatpush2.bf16.msra.mxu0 0
      %3491 = vmatprep.subr.bf16.mxu0 0
      %3492 = vmatpush2.bf16.msra.mxu0 0
      %3493 = vmatprep.subr.bf16.mxu0 0
      %3494 = vmatpush2.bf16.msra.mxu0 0
      %3495 = vmatprep.subr.bf16.mxu0 0
      %3496 = vmatpush2.bf16.msra.mxu0 0
      %3497 = vmatprep.subr.bf16.mxu0 0
      %3498 = vmatpush2.bf16.msra.mxu0 0
      %3499 = vmatprep.mubr.bf16.mxu0 0
      %3500 = vmatmul.mubr.bf16.gmra.mxu0 %v3465
      %v3501 = vpop.f32.mrf.mxu0
      %v3502 = vadd.f32 %v3427, %v3501
      %v3503 = vpop.f32.mrf.mxu0
      %v3504 = vadd.f32 %v3431, %v3503
      %v3505 = vpop.f32.mrf.mxu0
      %v3506 = vpop.f32.mrf.mxu0
      %3507 = vdwg.mxu0
      %3508 = vmatprep.subr.bf16.mxu0 0
      %3509 = vmatpush1.bf16.msra.mxu0 0
      %3510 = vmatprep.subr.bf16.mxu0 0
      %3511 = vmatpush1.bf16.msra.mxu0 0
      %3512 = vmatprep.subr.bf16.mxu0 0
      %3513 = vmatpush1.bf16.msra.mxu0 0
      %3514 = vmatprep.subr.bf16.mxu0 0
      %3515 = vmatpush1.bf16.msra.mxu0 0
      %3516 = vmatprep.subr.bf16.mxu0 %v3386
      %3517 = vmatpush1.bf16.msra.mxu0 %v3385
      %3518 = vmatprep.subr.bf16.mxu0 %v3378
      %3519 = vmatpush1.bf16.msra.mxu0 %v3377
      %3520 = vmatprep.subr.bf16.mxu0 %v3370
      %3521 = vmatpush1.bf16.msra.mxu0 %v3369
      %3522 = vmatprep.subr.bf16.mxu0 %v3362
      %3523 = vmatpush1.bf16.msra.mxu0 %v3361
      %3524 = vmatprep.subr.bf16.mxu0 0
      %3525 = vmatpush2.bf16.msra.mxu0 0
      %3526 = vmatprep.subr.bf16.mxu0 0
      %3527 = vmatpush2.bf16.msra.mxu0 0
      %3528 = vmatprep.subr.bf16.mxu0 0
      %3529 = vmatpush2.bf16.msra.mxu0 0
      %3530 = vmatprep.subr.bf16.mxu0 0
      %3531 = vmatpush2.bf16.msra.mxu0 0
      %3532 = vmatprep.subr.bf16.mxu0 0
      %3533 = vmatpush2.bf16.msra.mxu0 0
      %3534 = vmatprep.subr.bf16.mxu0 0
      %3535 = vmatpush2.bf16.msra.mxu0 0
      %3536 = vmatprep.subr.bf16.mxu0 0
      %3537 = vmatpush2.bf16.msra.mxu0 0
      %3538 = vmatprep.subr.bf16.mxu0 0
      %3539 = vmatpush2.bf16.msra.mxu0 0
      %3540 = vmatprep.mubr.bf16.mxu0 0
      %3541 = vmatmul.mubr.bf16.gmra.mxu0 %v3465
      %v3542 = vpop.f32.mrf.mxu0
      %v3543 = vadd.f32 %v3435, %v3542
      %v3544 = vpop.f32.mrf.mxu0
      %v3545 = vadd.f32 %v3439, %v3544
      %v3546 = vpop.f32.mrf.mxu0
      %v3547 = vpop.f32.mrf.mxu0
      %3548 = vdwg.mxu0
      %3549 = vmatprep.subr.bf16.mxu0 0
      %3550 = vmatpush1.bf16.msra.mxu0 0
      %3551 = vmatprep.subr.bf16.mxu0 0
      %3552 = vmatpush1.bf16.msra.mxu0 0
      %3553 = vmatprep.subr.bf16.mxu0 0
      %3554 = vmatpush1.bf16.msra.mxu0 0
      %3555 = vmatprep.subr.bf16.mxu0 0
      %3556 = vmatpush1.bf16.msra.mxu0 0
      %3557 = vmatprep.subr.bf16.mxu0 %v3388
      %3558 = vmatpush1.bf16.msra.mxu0 %v3387
      %3559 = vmatprep.subr.bf16.mxu0 %v3380
      %3560 = vmatpush1.bf16.msra.mxu0 %v3379
      %3561 = vmatprep.subr.bf16.mxu0 %v3372
      %3562 = vmatpush1.bf16.msra.mxu0 %v3371
      %3563 = vmatprep.subr.bf16.mxu0 %v3364
      %3564 = vmatpush1.bf16.msra.mxu0 %v3363
      %3565 = vmatprep.subr.bf16.mxu0 0
      %3566 = vmatpush2.bf16.msra.mxu0 0
      %3567 = vmatprep.subr.bf16.mxu0 0
      %3568 = vmatpush2.bf16.msra.mxu0 0
      %3569 = vmatprep.subr.bf16.mxu0 0
      %3570 = vmatpush2.bf16.msra.mxu0 0
      %3571 = vmatprep.subr.bf16.mxu0 0
      %3572 = vmatpush2.bf16.msra.mxu0 0
      %3573 = vmatprep.subr.bf16.mxu0 0
      %3574 = vmatpush2.bf16.msra.mxu0 0
      %3575 = vmatprep.subr.bf16.mxu0 0
      %3576 = vmatpush2.bf16.msra.mxu0 0
      %3577 = vmatprep.subr.bf16.mxu0 0
      %3578 = vmatpush2.bf16.msra.mxu0 0
      %3579 = vmatprep.subr.bf16.mxu0 0
      %3580 = vmatpush2.bf16.msra.mxu0 0
      %3581 = vmatprep.mubr.bf16.mxu0 0
      %3582 = vmatmul.mubr.bf16.gmra.mxu0 %v3465
      %v3583 = vpop.f32.mrf.mxu0
      %v3584 = vadd.f32 %v3443, %v3583
      %v3585 = vpop.f32.mrf.mxu0
      %v3586 = vadd.f32 %v3447, %v3585
      %v3587 = vpop.f32.mrf.mxu0
      %v3588 = vpop.f32.mrf.mxu0
      %3589 = vdwg.mxu0
      %3590 = vmatprep.subr.bf16.mxu0 0
      %3591 = vmatpush1.bf16.msra.mxu0 0
      %3592 = vmatprep.subr.bf16.mxu0 0
      %3593 = vmatpush1.bf16.msra.mxu0 0
      %3594 = vmatprep.subr.bf16.mxu0 0
      %3595 = vmatpush1.bf16.msra.mxu0 0
      %3596 = vmatprep.subr.bf16.mxu0 0
      %3597 = vmatpush1.bf16.msra.mxu0 0
      %3598 = vmatprep.subr.bf16.mxu0 %v3390
      %3599 = vmatpush1.bf16.msra.mxu0 %v3389
      %3600 = vmatprep.subr.bf16.mxu0 %v3382
      %3601 = vmatpush1.bf16.msra.mxu0 %v3381
      %3602 = vmatprep.subr.bf16.mxu0 %v3374
      %3603 = vmatpush1.bf16.msra.mxu0 %v3373
      %3604 = vmatprep.subr.bf16.mxu0 %v3366
      %3605 = vmatpush1.bf16.msra.mxu0 %v3365
      %3606 = vmatprep.subr.bf16.mxu0 0
      %3607 = vmatpush2.bf16.msra.mxu0 0
      %3608 = vmatprep.subr.bf16.mxu0 0
      %3609 = vmatpush2.bf16.msra.mxu0 0
      %3610 = vmatprep.subr.bf16.mxu0 0
      %3611 = vmatpush2.bf16.msra.mxu0 0
      %3612 = vmatprep.subr.bf16.mxu0 0
      %3613 = vmatpush2.bf16.msra.mxu0 0
      %3614 = vmatprep.subr.bf16.mxu0 0
      %3615 = vmatpush2.bf16.msra.mxu0 0
      %3616 = vmatprep.subr.bf16.mxu0 0
      %3617 = vmatpush2.bf16.msra.mxu0 0
      %3618 = vmatprep.subr.bf16.mxu0 0
      %3619 = vmatpush2.bf16.msra.mxu0 0
      %3620 = vmatprep.subr.bf16.mxu0 0
      %3621 = vmatpush2.bf16.msra.mxu0 0
      %3622 = vmatprep.mubr.bf16.mxu0 0
      %3623 = vmatmul.mubr.bf16.gmra.mxu0 %v3465
      %v3624 = vpop.f32.mrf.mxu0
      %v3625 = vadd.f32 %v3451, %v3624
      %v3626 = vpop.f32.mrf.mxu0
      %v3627 = vadd.f32 %v3455, %v3626
      %v3628 = vpop.f32.mrf.mxu0
      %v3629 = vpop.f32.mrf.mxu0
      %3630 = vdwg.mxu0
      %v3631 = vmax.f32 %v3502, 0.0
      %v3632 = vmax.f32 %v3504, 0.0
      %v3633 = vmax.f32 %v3543, 0.0
      %v3634 = vmax.f32 %v3545, 0.0
      %v3635 = vmax.f32 %v3584, 0.0
      %v3636 = vmax.f32 %v3586, 0.0
      %v3637 = vmax.f32 %v3625, 0.0
      %v3638 = vmax.f32 %v3627, 0.0
      %v3639 = vpack.c.bf16 %v3631, %v3631
      %v3640 = vpack.c.bf16 %v3632, %v3632
      %v3641 = vpack.c.bf16 %v3633, %v3633
      %v3642 = vpack.c.bf16 %v3634, %v3634
      %v3644 = vlaneseq
      %v3645 = vshrl.u32 %v3644, 7
      %v3646 = vsub.s32 0, %v3645
      %v3647 = vrot.slane %v805, %v3646
      %v3648 = vlaneseq
      %v3649 = vshrl.u32 %v3648, 7
      %v3650 = vsub.s32 1, %v3649
      %v3651 = vrot.slane %v805, %v3650
      %v3652 = vlaneseq
      %v3653 = vshrl.u32 %v3652, 7
      %v3654 = vsub.s32 2, %v3653
      %v3655 = vrot.slane %v805, %v3654
      %v3656 = vlaneseq
      %v3657 = vshrl.u32 %v3656, 7
      %v3658 = vsub.s32 3, %v3657
      %v3659 = vrot.slane %v805, %v3658
      %v3664 = vmul.f32 %v3635, %v3647
      %v3665 = vmul.f32 %v3636, %v3651
      %v3666 = vmul.f32 %v3637, %v3655
      %v3667 = vmul.f32 %v3638, %v3659
      %vm3668 = vcmask 1040384
      %v3669 = vsel %vm3668, %v3664, 0.0
      %v3670 = vsel %vm3668, %v3665, 0.0
      %v3671 = vadd.f32 %v3669, %v3670
      %v3672 = vsel %vm3668, %v3666, 0.0
      %v3673 = vadd.f32 %v3671, %v3672
      %v3674 = vsel %vm3668, %v3667, 0.0
      %v3675 = vadd.f32 %v3673, %v3674
      %3676 = vadd.xlane.f32.xlu0 %v3675
      %v3677 = vpop.xlane.xlu0 %3676
      %v3678 = vlaneseq
      %v3679 = vand.u32 %v3678, 127
      %v3744 = vunpack.c.l.b16 %v296
      %v3745 = vunpack.c.l.b16 %v297
      %v3746 = vunpack.c.l.b16 %v298
      %v3747 = vunpack.c.l.b16 %v299
      %v3748 = vunpack.c.l.b16 %v300
      %v3749 = vunpack.c.l.b16 %v301
      %v3750 = vunpack.c.l.b16 %v302
      %v3751 = vunpack.c.l.b16 %v303
      %v3752 = vunpack.c.l.b16 %v304
      %v3753 = vunpack.c.l.b16 %v305
      %v3754 = vunpack.c.l.b16 %v306
      %v3755 = vunpack.c.l.b16 %v307
      %v3756 = vunpack.c.l.b16 %v308
      %v3757 = vunpack.c.l.b16 %v309
      %v3758 = vunpack.c.l.b16 %v310
      %v3759 = vunpack.c.l.b16 %v311
      %v3760 = vunpack.c.l.b16 %v312
      %v3761 = vunpack.c.l.b16 %v313
      %v3762 = vunpack.c.l.b16 %v314
      %v3763 = vunpack.c.l.b16 %v315
      %v3764 = vunpack.c.l.b16 %v316
      %v3765 = vunpack.c.l.b16 %v317
      %v3766 = vunpack.c.l.b16 %v318
      %v3767 = vunpack.c.l.b16 %v319
      %v3768 = vunpack.c.l.b16 %v320
      %v3769 = vunpack.c.l.b16 %v321
      %v3770 = vunpack.c.l.b16 %v322
      %v3771 = vunpack.c.l.b16 %v323
      %v3772 = vunpack.c.l.b16 %v324
      %v3773 = vunpack.c.l.b16 %v325
      %v3774 = vunpack.c.l.b16 %v326
      %v3775 = vunpack.c.l.b16 %v327
      %v3776 = vunpack.c.l.b16 %v328
      %v3777 = vunpack.c.l.b16 %v329
      %v3778 = vunpack.c.l.b16 %v330
      %v3779 = vunpack.c.l.b16 %v331
      %v3780 = vunpack.c.l.b16 %v332
      %v3781 = vunpack.c.l.b16 %v333
      %v3782 = vunpack.c.l.b16 %v334
      %v3783 = vunpack.c.l.b16 %v335
      %v3784 = vunpack.c.l.b16 %v336
      %v3785 = vunpack.c.l.b16 %v337
      %v3786 = vunpack.c.l.b16 %v338
      %v3787 = vunpack.c.l.b16 %v339
      %v3788 = vunpack.c.l.b16 %v340
      %v3789 = vunpack.c.l.b16 %v341
      %v3790 = vunpack.c.l.b16 %v342
      %v3791 = vunpack.c.l.b16 %v343
      %v3792 = vunpack.c.l.b16 %v344
      %v3793 = vunpack.c.l.b16 %v345
      %v3794 = vunpack.c.l.b16 %v346
      %v3795 = vunpack.c.l.b16 %v347
      %v3796 = vunpack.c.l.b16 %v348
      %v3797 = vunpack.c.l.b16 %v349
      %v3798 = vunpack.c.l.b16 %v350
      %v3799 = vunpack.c.l.b16 %v351
      %v3800 = vunpack.c.l.b16 %v352
      %v3801 = vunpack.c.l.b16 %v353
      %v3802 = vunpack.c.l.b16 %v354
      %v3803 = vunpack.c.l.b16 %v355
      %v3804 = vunpack.c.l.b16 %v356
      %v3805 = vunpack.c.l.b16 %v357
      %v3806 = vunpack.c.l.b16 %v358
      %v3807 = vunpack.c.l.b16 %v359
      %v3808 = vpack.c.b16 %v3745, %v3744
      %v3809 = vpack.c.b16 %v3747, %v3746
      %v3810 = vpack.c.b16 %v3749, %v3748
      %v3811 = vpack.c.b16 %v3751, %v3750
      %v3812 = vpack.c.b16 %v3753, %v3752
      %v3813 = vpack.c.b16 %v3755, %v3754
      %v3814 = vpack.c.b16 %v3757, %v3756
      %v3815 = vpack.c.b16 %v3759, %v3758
      %v3816 = vpack.c.b16 %v3761, %v3760
      %v3817 = vpack.c.b16 %v3763, %v3762
      %v3818 = vpack.c.b16 %v3765, %v3764
      %v3819 = vpack.c.b16 %v3767, %v3766
      %v3820 = vpack.c.b16 %v3769, %v3768
      %v3821 = vpack.c.b16 %v3771, %v3770
      %v3822 = vpack.c.b16 %v3773, %v3772
      %v3823 = vpack.c.b16 %v3775, %v3774
      %v3824 = vpack.c.b16 %v3777, %v3776
      %v3825 = vpack.c.b16 %v3779, %v3778
      %v3826 = vpack.c.b16 %v3781, %v3780
      %v3827 = vpack.c.b16 %v3783, %v3782
      %v3828 = vpack.c.b16 %v3785, %v3784
      %v3829 = vpack.c.b16 %v3787, %v3786
      %v3830 = vpack.c.b16 %v3789, %v3788
      %v3831 = vpack.c.b16 %v3791, %v3790
      %v3832 = vpack.c.b16 %v3793, %v3792
      %v3833 = vpack.c.b16 %v3795, %v3794
      %v3834 = vpack.c.b16 %v3797, %v3796
      %v3835 = vpack.c.b16 %v3799, %v3798
      %v3836 = vpack.c.b16 %v3801, %v3800
      %v3837 = vpack.c.b16 %v3803, %v3802
      %v3838 = vpack.c.b16 %v3805, %v3804
      %v3839 = vpack.c.b16 %v3807, %v3806
      %3872 = vmatprep.subr.bf16.mxu0 0
      %3873 = vmatpush1.bf16.msra.mxu0 %v3815
      %3874 = vmatprep.subr.bf16.mxu0 0
      %3875 = vmatpush1.bf16.msra.mxu0 %v3814
      %3876 = vmatprep.subr.bf16.mxu0 0
      %3877 = vmatpush1.bf16.msra.mxu0 %v3813
      %3878 = vmatprep.subr.bf16.mxu0 0
      %3879 = vmatpush1.bf16.msra.mxu0 %v3812
      %3880 = vmatprep.subr.bf16.mxu0 0
      %3881 = vmatpush1.bf16.msra.mxu0 %v3811
      %3882 = vmatprep.subr.bf16.mxu0 0
      %3883 = vmatpush1.bf16.msra.mxu0 %v3810
      %3884 = vmatprep.subr.bf16.mxu0 0
      %3885 = vmatpush1.bf16.msra.mxu0 %v3809
      %3886 = vmatprep.subr.bf16.mxu0 0
      %3887 = vmatpush1.bf16.msra.mxu0 %v3808
      %3888 = vmatprep.subr.bf16.mxu0 0
      %3889 = vmatpush2.bf16.msra.mxu0 %v3823
      %3890 = vmatprep.subr.bf16.mxu0 0
      %3891 = vmatpush2.bf16.msra.mxu0 %v3822
      %3892 = vmatprep.subr.bf16.mxu0 0
      %3893 = vmatpush2.bf16.msra.mxu0 %v3821
      %3894 = vmatprep.subr.bf16.mxu0 0
      %3895 = vmatpush2.bf16.msra.mxu0 %v3820
      %3896 = vmatprep.subr.bf16.mxu0 0
      %3897 = vmatpush2.bf16.msra.mxu0 %v3819
      %3898 = vmatprep.subr.bf16.mxu0 0
      %3899 = vmatpush2.bf16.msra.mxu0 %v3818
      %3900 = vmatprep.subr.bf16.mxu0 0
      %3901 = vmatpush2.bf16.msra.mxu0 %v3817
      %3902 = vmatprep.subr.bf16.mxu0 0
      %3903 = vmatpush2.bf16.msra.mxu0 %v3816
      %3904 = vmatprep.mubr.bf16.mxu0 %v3640
      %3905 = vmatmul.mubr.bf16.gmra.mxu0 %v3639
      %v3906 = vpop.f32.mrf.mxu0
      %v3907 = vadd.f32 %v806, %v3906
      %v3908 = vpop.f32.mrf.mxu0
      %v3909 = vpop.f32.mrf.mxu0
      %v3910 = vpop.f32.mrf.mxu0
      %3911 = vdwg.mxu0
      %3912 = vmatprep.subr.bf16.mxu0 0
      %3913 = vmatpush1.bf16.msra.mxu0 %v3831
      %3914 = vmatprep.subr.bf16.mxu0 0
      %3915 = vmatpush1.bf16.msra.mxu0 %v3830
      %3916 = vmatprep.subr.bf16.mxu0 0
      %3917 = vmatpush1.bf16.msra.mxu0 %v3829
      %3918 = vmatprep.subr.bf16.mxu0 0
      %3919 = vmatpush1.bf16.msra.mxu0 %v3828
      %3920 = vmatprep.subr.bf16.mxu0 0
      %3921 = vmatpush1.bf16.msra.mxu0 %v3827
      %3922 = vmatprep.subr.bf16.mxu0 0
      %3923 = vmatpush1.bf16.msra.mxu0 %v3826
      %3924 = vmatprep.subr.bf16.mxu0 0
      %3925 = vmatpush1.bf16.msra.mxu0 %v3825
      %3926 = vmatprep.subr.bf16.mxu0 0
      %3927 = vmatpush1.bf16.msra.mxu0 %v3824
      %3928 = vmatprep.subr.bf16.mxu0 0
      %3929 = vmatpush2.bf16.msra.mxu0 %v3839
      %3930 = vmatprep.subr.bf16.mxu0 0
      %3931 = vmatpush2.bf16.msra.mxu0 %v3838
      %3932 = vmatprep.subr.bf16.mxu0 0
      %3933 = vmatpush2.bf16.msra.mxu0 %v3837
      %3934 = vmatprep.subr.bf16.mxu0 0
      %3935 = vmatpush2.bf16.msra.mxu0 %v3836
      %3936 = vmatprep.subr.bf16.mxu0 0
      %3937 = vmatpush2.bf16.msra.mxu0 %v3835
      %3938 = vmatprep.subr.bf16.mxu0 0
      %3939 = vmatpush2.bf16.msra.mxu0 %v3834
      %3940 = vmatprep.subr.bf16.mxu0 0
      %3941 = vmatpush2.bf16.msra.mxu0 %v3833
      %3942 = vmatprep.subr.bf16.mxu0 0
      %3943 = vmatpush2.bf16.msra.mxu0 %v3832
      %3944 = vmatprep.mubr.bf16.mxu0 %v3642
      %3945 = vmatmul.mubr.bf16.gmra.mxu0 %v3641
      %v3946 = vpop.f32.mrf.mxu0
      %v3947 = vadd.f32 %v3907, %v3946
      %v3948 = vpop.f32.mrf.mxu0
      %v3949 = vpop.f32.mrf.mxu0
      %v3950 = vpop.f32.mrf.mxu0
      %3951 = vdwg.mxu0
      %vm3952 = vcmp.eq.s32.totalorder %v3679, 6
      %v3953 = vsel %vm3952, %v3677, 0.0
      %v3954 = vadd.f32 %v3947, %v3953
      %v3955 = vlaneseq
      %v3956 = vshrl.u32 %v3955, 7
      %v3957 = vsub.s32 0, %v3956
      %v3958 = vrot.slane %v3954, %v3957
      %3959 = vst [vmem:[%s254] sm:$0xff] %v3958
      %p3960 = scmp.lt.s32.totalorder %s17, 1
      %s3961 = scalar_select %p3960, %s17, 1
      %s3962 = smul.addr %s3961, 8
      %s3963 = scalar_lea.vmem %s6, %s3962
      // Predicated region
      $region45: #{forward.1} parent=43 // pred_check
        %p3964 = pneg %p166
      $region46: #{forward.1} parent=43 // pred_check_branch
        %3966 = sbr.rel (%p3964) target = $region48
      $region47: #{forward.1} parent=43 // pred_region
        _
      $region48: #{forward.1} parent=43 // pred_fallthru
        _
    $region44: #{forward.1} parent=5 // pred_fallthru
      _
    %p3967 = scmp.le.s32.totalorder 2, %s12
    // Predicated region
    $region49: #{forward.1} parent=5 // pred_check
      %p3968 = pneg %p3967
    $region50: #{forward.1} parent=5 // pred_check_branch
      %3970 = sbr.rel (%p3968) target = $region52
    $region51: #{forward.1} parent=5 // pred_region
      %s3971 = ssub.s32 %s12, 2
      // Predicated region
      $region53: #{forward.1} parent=51 // pred_check
        %p3972 = pneg %p172
      $region54: #{forward.1} parent=51 // pred_check_branch
        %3974 = sbr.rel (%p3972) target = $region56
      $region55: #{forward.1} parent=51 // pred_region
        %p3975 = scmp.lt.s32.totalorder %s18, 1
        %s3976 = scalar_select %p3975, %s18, 1
        %s3977 = smul.addr %s3976, 8
        %s3978 = scalar_lea.vmem %s6, %s3977
      $region56: #{forward.1} parent=51 // pred_fallthru
        _
    $region52: #{forward.1} parent=5 // pred_fallthru
      _
  $region6: #{forward.1} parent=0 // loop_footer
    %s16 = sadd.s32 1, %s12
  $region7: #{forward.1} parent=0 // loop_footer_branch
    %11 = sbr.rel target = $region3
  $region8: #{forward.1} parent=0 // loop_exit
    _

</llo_original>
